<compile_context>
chip_gen: v7x
topology: tpu7x:2x2x1
jax: 0.10.0
libtpu: 0.0.40
codegen_flags: <defaults>
</compile_context>

<pallas_src>
import functools

import jax
import jax.numpy as jnp
from jax.experimental import pallas as pl
from jax.experimental.pallas import tpu as pltpu


# ----------------------------------------------------------------------------
# In-kernel helpers (trace-time; T/B/H are static Python ints)
# ----------------------------------------------------------------------------
def _lstm_cell(gates, c_prev, H):
    """Standard PyTorch-ordered LSTM cell: gates = [i, f, g, o] (B, 4H)."""
    i = jax.nn.sigmoid(gates[:, 0 * H:1 * H])
    f = jax.nn.sigmoid(gates[:, 1 * H:2 * H])
    g = jnp.tanh(gates[:, 2 * H:3 * H])
    o = jax.nn.sigmoid(gates[:, 3 * H:4 * H])
    c = f * c_prev + i * g
    h = o * jnp.tanh(c)
    return h, c


def _bilstm_layer(xproj, whh_bd, hseq_scr, T, B, H):
    """One fused bidirectional LSTM layer with the input projection hoisted.

    xproj:    (T*B, 8H) value = [x@Wih_fwd | x@Wih_bwd] + (b_ih + b_hh) for
              both directions (biases folded in, so no per-step bias add).
    whh_bd:   (2H, 8H) block-diagonal recurrent weight
              [[Whh_fwd^T, 0], [0, Whh_bwd^T]] -> both directions in one push.
    hseq_scr: (T*B, 2H) VMEM scratch; row block t receives
              [h_fwd(t) | h_bwd(t)] in PyTorch bidirectional output order.
    """
    h_f = jnp.zeros((B, H), jnp.float32)
    c_f = jnp.zeros((B, H), jnp.float32)
    h_b = jnp.zeros((B, H), jnp.float32)
    c_b = jnp.zeros((B, H), jnp.float32)
    for t in range(T):  # T small & static: unrolled at trace time, static slices
        tb = T - 1 - t  # backward direction walks the sequence in reverse
        xg_f = xproj[t * B:(t + 1) * B, 0:4 * H]
        xg_b = xproj[tb * B:(tb + 1) * B, 4 * H:8 * H]
        hcat = jnp.concatenate([h_f, h_b], axis=-1)              # (B, 2H)
        rec = jnp.dot(hcat, whh_bd, preferred_element_type=jnp.float32)  # (B, 8H)
        h_f, c_f = _lstm_cell(xg_f + rec[:, 0:4 * H], c_f, H)
        h_b, c_b = _lstm_cell(xg_b + rec[:, 4 * H:8 * H], c_b, H)
        hseq_scr[t * B:(t + 1) * B, 0:H] = h_f
        hseq_scr[tb * B:(tb + 1) * B, H:2 * H] = h_b


# ----------------------------------------------------------------------------
# Fused whole-model kernel: 2 bidirectional layers + regression head.
# ----------------------------------------------------------------------------
def _fused_kernel(T, B, H,
                  x_ref, w1ih_ref, b1_ref, w1hh_ref,
                  w2ih_ref, b2_ref, w2hh_ref,
                  w3_ref, b3_ref, w4_ref, b4_ref,
                  out_ref, hseq1_scr, hseq2_scr):
    # --- Layer 1: hoisted input projection for BOTH directions in one matmul.
    xp1 = (jnp.dot(x_ref[...], w1ih_ref[...],
                   preferred_element_type=jnp.float32) + b1_ref[...])  # (T*B, 8H)
    _bilstm_layer(xp1, w1hh_ref[...], hseq1_scr, T, B, H)

    # --- Layer 2: input is layer-1's bidirectional output sequence (VMEM only).
    # (PyTorch inter-layer dropout is a no-op in eval mode.)
    xp2 = (jnp.dot(hseq1_scr[...], w2ih_ref[...],
                   preferred_element_type=jnp.float32) + b2_ref[...])  # (T*B, 8H)
    _bilstm_layer(xp2, w2hh_ref[...], hseq2_scr, T, B, H)

    # --- lstm_out[:, -1, :]: fwd state after its last step || bwd state after
    # processing timestep T-1 (its first step) -> row block T-1 of hseq2.
    final = hseq2_scr[(T - 1) * B:T * B, :]                        # (B, 2H)

    # --- Regression head: Linear -> ReLU -> (Dropout = identity in eval) -> Linear
    z = jnp.dot(final, w3_ref[...], preferred_element_type=jnp.float32) + b3_ref[...]
    z = jnp.maximum(z, 0.0)
    # TODO(synk): nn.Dropout is a no-op in eval mode; training-mode dropout not implemented.
    y = jnp.dot(z, w4_ref[...], preferred_element_type=jnp.float32) + b4_ref[...]
    out_ref[...] = y.astype(out_ref.dtype)


# ----------------------------------------------------------------------------
# Wrapper
# ----------------------------------------------------------------------------
@jax.jit
def lstm_predictor_forward(x_btd, params):
    """x_btd: (B, T, D) batch-first input, as in the PyTorch module."""
    (w1ih, b1, w1hh), (w2ih, b2, w2hh) = params["lstm"]  # exactly 2 layers
    w3, b3, w4, b4 = params["head"]
    B, T, D = x_btd.shape
    H = w1hh.shape[0] // 2
    out_size = w4.shape[1]

    # One-time layout prep: time-major, flattened to (T*B, D) so the kernel's
    # hoisted projection is a single dense matmul.
    x_flat = jnp.transpose(x_btd, (1, 0, 2)).reshape(T * B, D).astype(jnp.float32)

    vmem = pltpu.MemorySpace.VMEM
    return pl.pallas_call(
        functools.partial(_fused_kernel, T, B, H),
        out_shape=jax.ShapeDtypeStruct((B, out_size), jnp.float32),
        in_specs=[pl.BlockSpec(memory_space=vmem)] * 11,
        out_specs=pl.BlockSpec(memory_space=vmem),
        scratch_shapes=[
            pltpu.VMEM((T * B, 2 * H), jnp.float32),  # layer-1 output sequence
            pltpu.VMEM((T * B, 2 * H), jnp.float32),  # layer-2 output sequence
        ],
    )(x_flat, w1ih, b1, w1hh, w2ih, b2, w2hh, w3, b3, w4, b4)


# ----------------------------------------------------------------------------
# Parameter construction (PyTorch-style uniform init, pre-packed for the kernel)
# ----------------------------------------------------------------------------
def init_params(key, input_dim, hidden_dim, output_size, num_layers=2):
    assert num_layers == 2, "fused kernel implements the module's default num_layers=2"
    H = hidden_dim
    k = 1.0 / jnp.sqrt(jnp.float32(H))

    def unif(key, shape, scale):
        return jax.random.uniform(key, shape, jnp.float32, -scale, scale)

    lstm_params = []
    for layer in range(num_layers):
        in_dim = input_dim if layer == 0 else 2 * H
        w_ih_t, w_hh_t, b_sum = [], [], []
        for _direction in range(2):  # forward, reverse (PyTorch order)
            key, k1, k2, k3, k4 = jax.random.split(key, 5)
            w_ih = unif(k1, (4 * H, in_dim), k)   # PyTorch weight_ih_l{k}[_reverse]
            w_hh = unif(k2, (4 * H, H), k)        # PyTorch weight_hh_l{k}[_reverse]
            b_ih = unif(k3, (4 * H,), k)
            b_hh = unif(k4, (4 * H,), k)
            w_ih_t.append(w_ih.T)                 # (in_dim, 4H)
            w_hh_t.append(w_hh.T)                 # (H, 4H)
            b_sum.append(b_ih + b_hh)             # (4H,)
        # Column-concat input weights: one (in_dim, 8H) matmul covers both dirs.
        w_ih_cat = jnp.concatenate(w_ih_t, axis=1)              # (in_dim, 8H)
        b_cat = jnp.concatenate(b_sum).reshape(1, 8 * H)        # (1, 8H)
        # Block-diagonal recurrent weight: one (2H, 8H) matmul covers both dirs.
        w_hh_bd = jnp.zeros((2 * H, 8 * H), jnp.float32)
        w_hh_bd = w_hh_bd.at[:H, :4 * H].set(w_hh_t[0])
        w_hh_bd = w_hh_bd.at[H:, 4 * H:].set(w_hh_t[1])
        lstm_params.append((w_ih_cat, b_cat, w_hh_bd))

    kh = 1.0 / jnp.sqrt(jnp.float32(2 * H))
    key, k1, k2 = jax.random.split(key, 3)
    w1 = unif(k1, (H, 2 * H), kh)
    b1 = unif(k2, (H,), kh)
    kh2 = 1.0 / jnp.sqrt(jnp.float32(H))
    key, k3, k4 = jax.random.split(key, 3)
    w2 = unif(k3, (output_size, H), kh2)
    b2 = unif(k4, (output_size,), kh2)
    head = (w1.T, b1.reshape(1, -1), w2.T, b2.reshape(1, -1))
    return {"lstm": tuple(lstm_params), "head": head}


if __name__ == "__main__":
    B, T, D = 2, 8, 16
    HIDDEN = 32
    OUTPUT = 50

    key = jax.random.PRNGKey(0)
    key_x, key_p = jax.random.split(key)
    x = jax.random.normal(key_x, (B, T, D), jnp.float32)
    params = init_params(key_p, D, HIDDEN, OUTPUT, num_layers=2)

    out = lstm_predictor_forward(x, params)
    jax.block_until_ready(out)
    assert out.shape == (B, OUTPUT), out.shape
    print("KERNEL_OK")
</pallas_src>

<mosaic_0001>
module attributes {stable_mosaic.version = 11 : i64} {
  func.func @_fused_kernel(%arg0: memref<16x16xf32, #tpu.memory_space<vmem>>, %arg1: memref<16x256xf32, #tpu.memory_space<vmem>>, %arg2: memref<1x256xf32, #tpu.memory_space<vmem>>, %arg3: memref<64x256xf32, #tpu.memory_space<vmem>>, %arg4: memref<64x256xf32, #tpu.memory_space<vmem>>, %arg5: memref<1x256xf32, #tpu.memory_space<vmem>>, %arg6: memref<64x256xf32, #tpu.memory_space<vmem>>, %arg7: memref<64x32xf32, #tpu.memory_space<vmem>>, %arg8: memref<1x32xf32, #tpu.memory_space<vmem>>, %arg9: memref<32x50xf32, #tpu.memory_space<vmem>>, %arg10: memref<1x50xf32, #tpu.memory_space<vmem>>, %arg11: memref<2x50xf32, #tpu.memory_space<vmem>>, %arg12: memref<16x64xf32, #tpu.memory_space<vmem>>, %arg13: memref<16x64xf32, #tpu.memory_space<vmem>>) attributes {dimension_semantics = [], scalar_prefetch = 0 : i64, scratch_operands = 2 : i64, tpu.core_type = #tpu.core_type<tc>} {
    %c0 = arith.constant 0 : index
    %c0_0 = arith.constant 0 : index
    %0 = vector.load %arg0[%c0, %c0_0] : memref<16x16xf32, #tpu.memory_space<vmem>>, vector<16x16xf32>
    %c0_1 = arith.constant 0 : index
    %c0_2 = arith.constant 0 : index
    %1 = vector.load %arg1[%c0_1, %c0_2] : memref<16x256xf32, #tpu.memory_space<vmem>>, vector<16x256xf32>
    %cst = arith.constant dense<0.000000e+00> : vector<16x256xf32>
    %2 = tpu.matmul %0, %1, %cst {dimension_numbers = #tpu.dot_dimension_numbers<[1], [0], [0], [1], [0, 0, 1, 1], [], []>} : vector<16x16xf32>, vector<16x256xf32>, vector<16x256xf32> -> vector<16x256xf32>
    %c0_3 = arith.constant 0 : index
    %c0_4 = arith.constant 0 : index
    %3 = vector.load %arg2[%c0_3, %c0_4] : memref<1x256xf32, #tpu.memory_space<vmem>>, vector<1x256xf32>
    %4 = vector.broadcast %3 : vector<1x256xf32> to vector<16x256xf32>
    %5 = arith.addf %2, %4 : vector<16x256xf32>
    %c0_5 = arith.constant 0 : index
    %c0_6 = arith.constant 0 : index
    %6 = vector.load %arg3[%c0_5, %c0_6] : memref<64x256xf32, #tpu.memory_space<vmem>>, vector<64x256xf32>
    %cst_7 = arith.constant 0.000000e+00 : f32
    %7 = vector.broadcast %cst_7 : f32 to vector<2x32xf32>
    %cst_8 = arith.constant 0.000000e+00 : f32
    %8 = vector.broadcast %cst_8 : f32 to vector<2x32xf32>
    %cst_9 = arith.constant 0.000000e+00 : f32
    %9 = vector.broadcast %cst_9 : f32 to vector<2x32xf32>
    %cst_10 = arith.constant 0.000000e+00 : f32
    %10 = vector.broadcast %cst_10 : f32 to vector<2x32xf32>
    %11 = vector.extract_strided_slice %5 {offsets = [0, 0], sizes = [2, 128], strides = [1, 1]} : vector<16x256xf32> to vector<2x128xf32>
    %12 = vector.extract_strided_slice %5 {offsets = [14, 128], sizes = [2, 128], strides = [1, 1]} : vector<16x256xf32> to vector<2x128xf32>
    %13 = tpu.concatenate %7, %9 in 1 : vector<2x32xf32>, vector<2x32xf32> -> vector<2x64xf32>
    %cst_11 = arith.constant dense<0.000000e+00> : vector<2x256xf32>
    %14 = tpu.matmul %13, %6, %cst_11 {dimension_numbers = #tpu.dot_dimension_numbers<[1], [0], [0], [1], [0, 0, 1, 1], [], []>} : vector<2x64xf32>, vector<64x256xf32>, vector<2x256xf32> -> vector<2x256xf32>
    %15 = vector.extract_strided_slice %14 {offsets = [0, 0], sizes = [2, 128], strides = [1, 1]} : vector<2x256xf32> to vector<2x128xf32>
    %16 = arith.addf %11, %15 : vector<2x128xf32>
    %17 = vector.extract_strided_slice %16 {offsets = [0, 0], sizes = [2, 32], strides = [1, 1]} : vector<2x128xf32> to vector<2x32xf32>
    %18 = arith.negf %17 : vector<2x32xf32>
    %19 = math.exp %18 : vector<2x32xf32>
    %cst_12 = arith.constant 1.000000e+00 : f32
    %20 = vector.broadcast %cst_12 : f32 to vector<2x32xf32>
    %21 = arith.addf %20, %19 : vector<2x32xf32>
    %22 = arith.divf %20, %21 : vector<2x32xf32>
    %23 = vector.extract_strided_slice %16 {offsets = [0, 32], sizes = [2, 32], strides = [1, 1]} : vector<2x128xf32> to vector<2x32xf32>
    %24 = arith.negf %23 : vector<2x32xf32>
    %25 = math.exp %24 : vector<2x32xf32>
    %cst_13 = arith.constant 1.000000e+00 : f32
    %26 = vector.broadcast %cst_13 : f32 to vector<2x32xf32>
    %27 = arith.addf %26, %25 : vector<2x32xf32>
    %28 = arith.divf %26, %27 : vector<2x32xf32>
    %29 = vector.extract_strided_slice %16 {offsets = [0, 64], sizes = [2, 32], strides = [1, 1]} : vector<2x128xf32> to vector<2x32xf32>
    %30 = math.tanh %29 : vector<2x32xf32>
    %31 = vector.extract_strided_slice %16 {offsets = [0, 96], sizes = [2, 32], strides = [1, 1]} : vector<2x128xf32> to vector<2x32xf32>
    %32 = arith.negf %31 : vector<2x32xf32>
    %33 = math.exp %32 : vector<2x32xf32>
    %cst_14 = arith.constant 1.000000e+00 : f32
    %34 = vector.broadcast %cst_14 : f32 to vector<2x32xf32>
    %35 = arith.addf %34, %33 : vector<2x32xf32>
    %36 = arith.divf %34, %35 : vector<2x32xf32>
    %37 = arith.mulf %28, %8 : vector<2x32xf32>
    %38 = arith.mulf %22, %30 : vector<2x32xf32>
    %39 = arith.addf %37, %38 : vector<2x32xf32>
    %40 = math.tanh %39 : vector<2x32xf32>
    %41 = arith.mulf %36, %40 : vector<2x32xf32>
    %42 = vector.extract_strided_slice %14 {offsets = [0, 128], sizes = [2, 128], strides = [1, 1]} : vector<2x256xf32> to vector<2x128xf32>
    %43 = arith.addf %12, %42 : vector<2x128xf32>
    %44 = vector.extract_strided_slice %43 {offsets = [0, 0], sizes = [2, 32], strides = [1, 1]} : vector<2x128xf32> to vector<2x32xf32>
    %45 = arith.negf %44 : vector<2x32xf32>
    %46 = math.exp %45 : vector<2x32xf32>
    %cst_15 = arith.constant 1.000000e+00 : f32
    %47 = vector.broadcast %cst_15 : f32 to vector<2x32xf32>
    %48 = arith.addf %47, %46 : vector<2x32xf32>
    %49 = arith.divf %47, %48 : vector<2x32xf32>
    %50 = vector.extract_strided_slice %43 {offsets = [0, 32], sizes = [2, 32], strides = [1, 1]} : vector<2x128xf32> to vector<2x32xf32>
    %51 = arith.negf %50 : vector<2x32xf32>
    %52 = math.exp %51 : vector<2x32xf32>
    %cst_16 = arith.constant 1.000000e+00 : f32
    %53 = vector.broadcast %cst_16 : f32 to vector<2x32xf32>
    %54 = arith.addf %53, %52 : vector<2x32xf32>
    %55 = arith.divf %53, %54 : vector<2x32xf32>
    %56 = vector.extract_strided_slice %43 {offsets = [0, 64], sizes = [2, 32], strides = [1, 1]} : vector<2x128xf32> to vector<2x32xf32>
    %57 = math.tanh %56 : vector<2x32xf32>
    %58 = vector.extract_strided_slice %43 {offsets = [0, 96], sizes = [2, 32], strides = [1, 1]} : vector<2x128xf32> to vector<2x32xf32>
    %59 = arith.negf %58 : vector<2x32xf32>
    %60 = math.exp %59 : vector<2x32xf32>
    %cst_17 = arith.constant 1.000000e+00 : f32
    %61 = vector.broadcast %cst_17 : f32 to vector<2x32xf32>
    %62 = arith.addf %61, %60 : vector<2x32xf32>
    %63 = arith.divf %61, %62 : vector<2x32xf32>
    %64 = arith.mulf %55, %10 : vector<2x32xf32>
    %65 = arith.mulf %49, %57 : vector<2x32xf32>
    %66 = arith.addf %64, %65 : vector<2x32xf32>
    %67 = math.tanh %66 : vector<2x32xf32>
    %68 = arith.mulf %63, %67 : vector<2x32xf32>
    %c0_18 = arith.constant 0 : index
    %c0_19 = arith.constant 0 : index
    %69 = vector.load %arg12[%c0_18, %c0_19] : memref<16x64xf32, #tpu.memory_space<vmem>>, vector<2x32xf32>
    tpu.vector_store %arg12[%c0_18, %c0_19], %41 {strides = array<i32>} : memref<16x64xf32, #tpu.memory_space<vmem>>, vector<2x32xf32>,
    %c14 = arith.constant 14 : index
    %c32 = arith.constant 32 : index
    %70 = vector.load %arg12[%c14, %c32] : memref<16x64xf32, #tpu.memory_space<vmem>>, vector<2x32xf32>
    tpu.vector_store %arg12[%c14, %c32], %68 {strides = array<i32>} : memref<16x64xf32, #tpu.memory_space<vmem>>, vector<2x32xf32>,
    %71 = vector.extract_strided_slice %5 {offsets = [2, 0], sizes = [2, 128], strides = [1, 1]} : vector<16x256xf32> to vector<2x128xf32>
    %72 = vector.extract_strided_slice %5 {offsets = [12, 128], sizes = [2, 128], strides = [1, 1]} : vector<16x256xf32> to vector<2x128xf32>
    %73 = tpu.concatenate %41, %68 in 1 : vector<2x32xf32>, vector<2x32xf32> -> vector<2x64xf32>
    %cst_20 = arith.constant dense<0.000000e+00> : vector<2x256xf32>
    %74 = tpu.matmul %73, %6, %cst_20 {dimension_numbers = #tpu.dot_dimension_numbers<[1], [0], [0], [1], [0, 0, 1, 1], [], []>} : vector<2x64xf32>, vector<64x256xf32>, vector<2x256xf32> -> vector<2x256xf32>
    %75 = vector.extract_strided_slice %74 {offsets = [0, 0], sizes = [2, 128], strides = [1, 1]} : vector<2x256xf32> to vector<2x128xf32>
    %76 = arith.addf %71, %75 : vector<2x128xf32>
    %77 = vector.extract_strided_slice %76 {offsets = [0, 0], sizes = [2, 32], strides = [1, 1]} : vector<2x128xf32> to vector<2x32xf32>
    %78 = arith.negf %77 : vector<2x32xf32>
    %79 = math.exp %78 : vector<2x32xf32>
    %cst_21 = arith.constant 1.000000e+00 : f32
    %80 = vector.broadcast %cst_21 : f32 to vector<2x32xf32>
    %81 = arith.addf %80, %79 : vector<2x32xf32>
    %82 = arith.divf %80, %81 : vector<2x32xf32>
    %83 = vector.extract_strided_slice %76 {offsets = [0, 32], sizes = [2, 32], strides = [1, 1]} : vector<2x128xf32> to vector<2x32xf32>
    %84 = arith.negf %83 : vector<2x32xf32>
    %85 = math.exp %84 : vector<2x32xf32>
    %cst_22 = arith.constant 1.000000e+00 : f32
    %86 = vector.broadcast %cst_22 : f32 to vector<2x32xf32>
    %87 = arith.addf %86, %85 : vector<2x32xf32>
    %88 = arith.divf %86, %87 : vector<2x32xf32>
    %89 = vector.extract_strided_slice %76 {offsets = [0, 64], sizes = [2, 32], strides = [1, 1]} : vector<2x128xf32> to vector<2x32xf32>
    %90 = math.tanh %89 : vector<2x32xf32>
    %91 = vector.extract_strided_slice %76 {offsets = [0, 96], sizes = [2, 32], strides = [1, 1]} : vector<2x128xf32> to vector<2x32xf32>
    %92 = arith.negf %91 : vector<2x32xf32>
    %93 = math.exp %92 : vector<2x32xf32>
    %cst_23 = arith.constant 1.000000e+00 : f32
    %94 = vector.broadcast %cst_23 : f32 to vector<2x32xf32>
    %95 = arith.addf %94, %93 : vector<2x32xf32>
    %96 = arith.divf %94, %95 : vector<2x32xf32>
    %97 = arith.mulf %88, %39 : vector<2x32xf32>
    %98 = arith.mulf %82, %90 : vector<2x32xf32>
    %99 = arith.addf %97, %98 : vector<2x32xf32>
    %100 = math.tanh %99 : vector<2x32xf32>
    %101 = arith.mulf %96, %100 : vector<2x32xf32>
    %102 = vector.extract_strided_slice %74 {offsets = [0, 128], sizes = [2, 128], strides = [1, 1]} : vector<2x256xf32> to vector<2x128xf32>
    %103 = arith.addf %72, %102 : vector<2x128xf32>
    %104 = vector.extract_strided_slice %103 {offsets = [0, 0], sizes = [2, 32], strides = [1, 1]} : vector<2x128xf32> to vector<2x32xf32>
    %105 = arith.negf %104 : vector<2x32xf32>
    %106 = math.exp %105 : vector<2x32xf32>
    %cst_24 = arith.constant 1.000000e+00 : f32
    %107 = vector.broadcast %cst_24 : f32 to vector<2x32xf32>
    %108 = arith.addf %107, %106 : vector<2x32xf32>
    %109 = arith.divf %107, %108 : vector<2x32xf32>
    %110 = vector.extract_strided_slice %103 {offsets = [0, 32], sizes = [2, 32], strides = [1, 1]} : vector<2x128xf32> to vector<2x32xf32>
    %111 = arith.negf %110 : vector<2x32xf32>
    %112 = math.exp %111 : vector<2x32xf32>
    %cst_25 = arith.constant 1.000000e+00 : f32
    %113 = vector.broadcast %cst_25 : f32 to vector<2x32xf32>
    %114 = arith.addf %113, %112 : vector<2x32xf32>
    %115 = arith.divf %113, %114 : vector<2x32xf32>
    %116 = vector.extract_strided_slice %103 {offsets = [0, 64], sizes = [2, 32], strides = [1, 1]} : vector<2x128xf32> to vector<2x32xf32>
    %117 = math.tanh %116 : vector<2x32xf32>
    %118 = vector.extract_strided_slice %103 {offsets = [0, 96], sizes = [2, 32], strides = [1, 1]} : vector<2x128xf32> to vector<2x32xf32>
    %119 = arith.negf %118 : vector<2x32xf32>
    %120 = math.exp %119 : vector<2x32xf32>
    %cst_26 = arith.constant 1.000000e+00 : f32
    %121 = vector.broadcast %cst_26 : f32 to vector<2x32xf32>
    %122 = arith.addf %121, %120 : vector<2x32xf32>
    %123 = arith.divf %121, %122 : vector<2x32xf32>
    %124 = arith.mulf %115, %66 : vector<2x32xf32>
    %125 = arith.mulf %109, %117 : vector<2x32xf32>
    %126 = arith.addf %124, %125 : vector<2x32xf32>
    %127 = math.tanh %126 : vector<2x32xf32>
    %128 = arith.mulf %123, %127 : vector<2x32xf32>
    %c2 = arith.constant 2 : index
    %c0_27 = arith.constant 0 : index
    %129 = vector.load %arg12[%c2, %c0_27] : memref<16x64xf32, #tpu.memory_space<vmem>>, vector<2x32xf32>
    tpu.vector_store %arg12[%c2, %c0_27], %101 {strides = array<i32>} : memref<16x64xf32, #tpu.memory_space<vmem>>, vector<2x32xf32>,
    %c12 = arith.constant 12 : index
    %c32_28 = arith.constant 32 : index
    %130 = vector.load %arg12[%c12, %c32_28] : memref<16x64xf32, #tpu.memory_space<vmem>>, vector<2x32xf32>
    tpu.vector_store %arg12[%c12, %c32_28], %128 {strides = array<i32>} : memref<16x64xf32, #tpu.memory_space<vmem>>, vector<2x32xf32>,
    %131 = vector.extract_strided_slice %5 {offsets = [4, 0], sizes = [2, 128], strides = [1, 1]} : vector<16x256xf32> to vector<2x128xf32>
    %132 = vector.extract_strided_slice %5 {offsets = [10, 128], sizes = [2, 128], strides = [1, 1]} : vector<16x256xf32> to vector<2x128xf32>
    %133 = tpu.concatenate %101, %128 in 1 : vector<2x32xf32>, vector<2x32xf32> -> vector<2x64xf32>
    %cst_29 = arith.constant dense<0.000000e+00> : vector<2x256xf32>
    %134 = tpu.matmul %133, %6, %cst_29 {dimension_numbers = #tpu.dot_dimension_numbers<[1], [0], [0], [1], [0, 0, 1, 1], [], []>} : vector<2x64xf32>, vector<64x256xf32>, vector<2x256xf32> -> vector<2x256xf32>
    %135 = vector.extract_strided_slice %134 {offsets = [0, 0], sizes = [2, 128], strides = [1, 1]} : vector<2x256xf32> to vector<2x128xf32>
    %136 = arith.addf %131, %135 : vector<2x128xf32>
    %137 = vector.extract_strided_slice %136 {offsets = [0, 0], sizes = [2, 32], strides = [1, 1]} : vector<2x128xf32> to vector<2x32xf32>
    %138 = arith.negf %137 : vector<2x32xf32>
    %139 = math.exp %138 : vector<2x32xf32>
    %cst_30 = arith.constant 1.000000e+00 : f32
    %140 = vector.broadcast %cst_30 : f32 to vector<2x32xf32>
    %141 = arith.addf %140, %139 : vector<2x32xf32>
    %142 = arith.divf %140, %141 : vector<2x32xf32>
    %143 = vector.extract_strided_slice %136 {offsets = [0, 32], sizes = [2, 32], strides = [1, 1]} : vector<2x128xf32> to vector<2x32xf32>
    %144 = arith.negf %143 : vector<2x32xf32>
    %145 = math.exp %144 : vector<2x32xf32>
    %cst_31 = arith.constant 1.000000e+00 : f32
    %146 = vector.broadcast %cst_31 : f32 to vector<2x32xf32>
    %147 = arith.addf %146, %145 : vector<2x32xf32>
    %148 = arith.divf %146, %147 : vector<2x32xf32>
    %149 = vector.extract_strided_slice %136 {offsets = [0, 64], sizes = [2, 32], strides = [1, 1]} : vector<2x128xf32> to vector<2x32xf32>
    %150 = math.tanh %149 : vector<2x32xf32>
    %151 = vector.extract_strided_slice %136 {offsets = [0, 96], sizes = [2, 32], strides = [1, 1]} : vector<2x128xf32> to vector<2x32xf32>
    %152 = arith.negf %151 : vector<2x32xf32>
    %153 = math.exp %152 : vector<2x32xf32>
    %cst_32 = arith.constant 1.000000e+00 : f32
    %154 = vector.broadcast %cst_32 : f32 to vector<2x32xf32>
    %155 = arith.addf %154, %153 : vector<2x32xf32>
    %156 = arith.divf %154, %155 : vector<2x32xf32>
    %157 = arith.mulf %148, %99 : vector<2x32xf32>
    %158 = arith.mulf %142, %150 : vector<2x32xf32>
    %159 = arith.addf %157, %158 : vector<2x32xf32>
    %160 = math.tanh %159 : vector<2x32xf32>
    %161 = arith.mulf %156, %160 : vector<2x32xf32>
    %162 = vector.extract_strided_slice %134 {offsets = [0, 128], sizes = [2, 128], strides = [1, 1]} : vector<2x256xf32> to vector<2x128xf32>
    %163 = arith.addf %132, %162 : vector<2x128xf32>
    %164 = vector.extract_strided_slice %163 {offsets = [0, 0], sizes = [2, 32], strides = [1, 1]} : vector<2x128xf32> to vector<2x32xf32>
    %165 = arith.negf %164 : vector<2x32xf32>
    %166 = math.exp %165 : vector<2x32xf32>
    %cst_33 = arith.constant 1.000000e+00 : f32
    %167 = vector.broadcast %cst_33 : f32 to vector<2x32xf32>
    %168 = arith.addf %167, %166 : vector<2x32xf32>
    %169 = arith.divf %167, %168 : vector<2x32xf32>
    %170 = vector.extract_strided_slice %163 {offsets = [0, 32], sizes = [2, 32], strides = [1, 1]} : vector<2x128xf32> to vector<2x32xf32>
    %171 = arith.negf %170 : vector<2x32xf32>
    %172 = math.exp %171 : vector<2x32xf32>
    %cst_34 = arith.constant 1.000000e+00 : f32
    %173 = vector.broadcast %cst_34 : f32 to vector<2x32xf32>
    %174 = arith.addf %173, %172 : vector<2x32xf32>
    %175 = arith.divf %173, %174 : vector<2x32xf32>
    %176 = vector.extract_strided_slice %163 {offsets = [0, 64], sizes = [2, 32], strides = [1, 1]} : vector<2x128xf32> to vector<2x32xf32>
    %177 = math.tanh %176 : vector<2x32xf32>
    %178 = vector.extract_strided_slice %163 {offsets = [0, 96], sizes = [2, 32], strides = [1, 1]} : vector<2x128xf32> to vector<2x32xf32>
    %179 = arith.negf %178 : vector<2x32xf32>
    %180 = math.exp %179 : vector<2x32xf32>
    %cst_35 = arith.constant 1.000000e+00 : f32
    %181 = vector.broadcast %cst_35 : f32 to vector<2x32xf32>
    %182 = arith.addf %181, %180 : vector<2x32xf32>
    %183 = arith.divf %181, %182 : vector<2x32xf32>
    %184 = arith.mulf %175, %126 : vector<2x32xf32>
    %185 = arith.mulf %169, %177 : vector<2x32xf32>
    %186 = arith.addf %184, %185 : vector<2x32xf32>
    %187 = math.tanh %186 : vector<2x32xf32>
    %188 = arith.mulf %183, %187 : vector<2x32xf32>
    %c4 = arith.constant 4 : index
    %c0_36 = arith.constant 0 : index
    %189 = vector.load %arg12[%c4, %c0_36] : memref<16x64xf32, #tpu.memory_space<vmem>>, vector<2x32xf32>
    tpu.vector_store %arg12[%c4, %c0_36], %161 {strides = array<i32>} : memref<16x64xf32, #tpu.memory_space<vmem>>, vector<2x32xf32>,
    %c10 = arith.constant 10 : index
    %c32_37 = arith.constant 32 : index
    %190 = vector.load %arg12[%c10, %c32_37] : memref<16x64xf32, #tpu.memory_space<vmem>>, vector<2x32xf32>
    tpu.vector_store %arg12[%c10, %c32_37], %188 {strides = array<i32>} : memref<16x64xf32, #tpu.memory_space<vmem>>, vector<2x32xf32>,
    %191 = vector.extract_strided_slice %5 {offsets = [6, 0], sizes = [2, 128], strides = [1, 1]} : vector<16x256xf32> to vector<2x128xf32>
    %192 = vector.extract_strided_slice %5 {offsets = [8, 128], sizes = [2, 128], strides = [1, 1]} : vector<16x256xf32> to vector<2x128xf32>
    %193 = tpu.concatenate %161, %188 in 1 : vector<2x32xf32>, vector<2x32xf32> -> vector<2x64xf32>
    %cst_38 = arith.constant dense<0.000000e+00> : vector<2x256xf32>
    %194 = tpu.matmul %193, %6, %cst_38 {dimension_numbers = #tpu.dot_dimension_numbers<[1], [0], [0], [1], [0, 0, 1, 1], [], []>} : vector<2x64xf32>, vector<64x256xf32>, vector<2x256xf32> -> vector<2x256xf32>
    %195 = vector.extract_strided_slice %194 {offsets = [0, 0], sizes = [2, 128], strides = [1, 1]} : vector<2x256xf32> to vector<2x128xf32>
    %196 = arith.addf %191, %195 : vector<2x128xf32>
    %197 = vector.extract_strided_slice %196 {offsets = [0, 0], sizes = [2, 32], strides = [1, 1]} : vector<2x128xf32> to vector<2x32xf32>
    %198 = arith.negf %197 : vector<2x32xf32>
    %199 = math.exp %198 : vector<2x32xf32>
    %cst_39 = arith.constant 1.000000e+00 : f32
    %200 = vector.broadcast %cst_39 : f32 to vector<2x32xf32>
    %201 = arith.addf %200, %199 : vector<2x32xf32>
    %202 = arith.divf %200, %201 : vector<2x32xf32>
    %203 = vector.extract_strided_slice %196 {offsets = [0, 32], sizes = [2, 32], strides = [1, 1]} : vector<2x128xf32> to vector<2x32xf32>
    %204 = arith.negf %203 : vector<2x32xf32>
    %205 = math.exp %204 : vector<2x32xf32>
    %cst_40 = arith.constant 1.000000e+00 : f32
    %206 = vector.broadcast %cst_40 : f32 to vector<2x32xf32>
    %207 = arith.addf %206, %205 : vector<2x32xf32>
    %208 = arith.divf %206, %207 : vector<2x32xf32>
    %209 = vector.extract_strided_slice %196 {offsets = [0, 64], sizes = [2, 32], strides = [1, 1]} : vector<2x128xf32> to vector<2x32xf32>
    %210 = math.tanh %209 : vector<2x32xf32>
    %211 = vector.extract_strided_slice %196 {offsets = [0, 96], sizes = [2, 32], strides = [1, 1]} : vector<2x128xf32> to vector<2x32xf32>
    %212 = arith.negf %211 : vector<2x32xf32>
    %213 = math.exp %212 : vector<2x32xf32>
    %cst_41 = arith.constant 1.000000e+00 : f32
    %214 = vector.broadcast %cst_41 : f32 to vector<2x32xf32>
    %215 = arith.addf %214, %213 : vector<2x32xf32>
    %216 = arith.divf %214, %215 : vector<2x32xf32>
    %217 = arith.mulf %208, %159 : vector<2x32xf32>
    %218 = arith.mulf %202, %210 : vector<2x32xf32>
    %219 = arith.addf %217, %218 : vector<2x32xf32>
    %220 = math.tanh %219 : vector<2x32xf32>
    %221 = arith.mulf %216, %220 : vector<2x32xf32>
    %222 = vector.extract_strided_slice %194 {offsets = [0, 128], sizes = [2, 128], strides = [1, 1]} : vector<2x256xf32> to vector<2x128xf32>
    %223 = arith.addf %192, %222 : vector<2x128xf32>
    %224 = vector.extract_strided_slice %223 {offsets = [0, 0], sizes = [2, 32], strides = [1, 1]} : vector<2x128xf32> to vector<2x32xf32>
    %225 = arith.negf %224 : vector<2x32xf32>
    %226 = math.exp %225 : vector<2x32xf32>
    %cst_42 = arith.constant 1.000000e+00 : f32
    %227 = vector.broadcast %cst_42 : f32 to vector<2x32xf32>
    %228 = arith.addf %227, %226 : vector<2x32xf32>
    %229 = arith.divf %227, %228 : vector<2x32xf32>
    %230 = vector.extract_strided_slice %223 {offsets = [0, 32], sizes = [2, 32], strides = [1, 1]} : vector<2x128xf32> to vector<2x32xf32>
    %231 = arith.negf %230 : vector<2x32xf32>
    %232 = math.exp %231 : vector<2x32xf32>
    %cst_43 = arith.constant 1.000000e+00 : f32
    %233 = vector.broadcast %cst_43 : f32 to vector<2x32xf32>
    %234 = arith.addf %233, %232 : vector<2x32xf32>
    %235 = arith.divf %233, %234 : vector<2x32xf32>
    %236 = vector.extract_strided_slice %223 {offsets = [0, 64], sizes = [2, 32], strides = [1, 1]} : vector<2x128xf32> to vector<2x32xf32>
    %237 = math.tanh %236 : vector<2x32xf32>
    %238 = vector.extract_strided_slice %223 {offsets = [0, 96], sizes = [2, 32], strides = [1, 1]} : vector<2x128xf32> to vector<2x32xf32>
    %239 = arith.negf %238 : vector<2x32xf32>
    %240 = math.exp %239 : vector<2x32xf32>
    %cst_44 = arith.constant 1.000000e+00 : f32
    %241 = vector.broadcast %cst_44 : f32 to vector<2x32xf32>
    %242 = arith.addf %241, %240 : vector<2x32xf32>
    %243 = arith.divf %241, %242 : vector<2x32xf32>
    %244 = arith.mulf %235, %186 : vector<2x32xf32>
    %245 = arith.mulf %229, %237 : vector<2x32xf32>
    %246 = arith.addf %244, %245 : vector<2x32xf32>
    %247 = math.tanh %246 : vector<2x32xf32>
    %248 = arith.mulf %243, %247 : vector<2x32xf32>
    %c6 = arith.constant 6 : index
    %c0_45 = arith.constant 0 : index
    %249 = vector.load %arg12[%c6, %c0_45] : memref<16x64xf32, #tpu.memory_space<vmem>>, vector<2x32xf32>
    tpu.vector_store %arg12[%c6, %c0_45], %221 {strides = array<i32>} : memref<16x64xf32, #tpu.memory_space<vmem>>, vector<2x32xf32>,
    %c8 = arith.constant 8 : index
    %c32_46 = arith.constant 32 : index
    %250 = vector.load %arg12[%c8, %c32_46] : memref<16x64xf32, #tpu.memory_space<vmem>>, vector<2x32xf32>
    tpu.vector_store %arg12[%c8, %c32_46], %248 {strides = array<i32>} : memref<16x64xf32, #tpu.memory_space<vmem>>, vector<2x32xf32>,
    %251 = vector.extract_strided_slice %5 {offsets = [8, 0], sizes = [2, 128], strides = [1, 1]} : vector<16x256xf32> to vector<2x128xf32>
    %252 = vector.extract_strided_slice %5 {offsets = [6, 128], sizes = [2, 128], strides = [1, 1]} : vector<16x256xf32> to vector<2x128xf32>
    %253 = tpu.concatenate %221, %248 in 1 : vector<2x32xf32>, vector<2x32xf32> -> vector<2x64xf32>
    %cst_47 = arith.constant dense<0.000000e+00> : vector<2x256xf32>
    %254 = tpu.matmul %253, %6, %cst_47 {dimension_numbers = #tpu.dot_dimension_numbers<[1], [0], [0], [1], [0, 0, 1, 1], [], []>} : vector<2x64xf32>, vector<64x256xf32>, vector<2x256xf32> -> vector<2x256xf32>
    %255 = vector.extract_strided_slice %254 {offsets = [0, 0], sizes = [2, 128], strides = [1, 1]} : vector<2x256xf32> to vector<2x128xf32>
    %256 = arith.addf %251, %255 : vector<2x128xf32>
    %257 = vector.extract_strided_slice %256 {offsets = [0, 0], sizes = [2, 32], strides = [1, 1]} : vector<2x128xf32> to vector<2x32xf32>
    %258 = arith.negf %257 : vector<2x32xf32>
    %259 = math.exp %258 : vector<2x32xf32>
    %cst_48 = arith.constant 1.000000e+00 : f32
    %260 = vector.broadcast %cst_48 : f32 to vector<2x32xf32>
    %261 = arith.addf %260, %259 : vector<2x32xf32>
    %262 = arith.divf %260, %261 : vector<2x32xf32>
    %263 = vector.extract_strided_slice %256 {offsets = [0, 32], sizes = [2, 32], strides = [1, 1]} : vector<2x128xf32> to vector<2x32xf32>
    %264 = arith.negf %263 : vector<2x32xf32>
    %265 = math.exp %264 : vector<2x32xf32>
    %cst_49 = arith.constant 1.000000e+00 : f32
    %266 = vector.broadcast %cst_49 : f32 to vector<2x32xf32>
    %267 = arith.addf %266, %265 : vector<2x32xf32>
    %268 = arith.divf %266, %267 : vector<2x32xf32>
    %269 = vector.extract_strided_slice %256 {offsets = [0, 64], sizes = [2, 32], strides = [1, 1]} : vector<2x128xf32> to vector<2x32xf32>
    %270 = math.tanh %269 : vector<2x32xf32>
    %271 = vector.extract_strided_slice %256 {offsets = [0, 96], sizes = [2, 32], strides = [1, 1]} : vector<2x128xf32> to vector<2x32xf32>
    %272 = arith.negf %271 : vector<2x32xf32>
    %273 = math.exp %272 : vector<2x32xf32>
    %cst_50 = arith.constant 1.000000e+00 : f32
    %274 = vector.broadcast %cst_50 : f32 to vector<2x32xf32>
    %275 = arith.addf %274, %273 : vector<2x32xf32>
    %276 = arith.divf %274, %275 : vector<2x32xf32>
    %277 = arith.mulf %268, %219 : vector<2x32xf32>
    %278 = arith.mulf %262, %270 : vector<2x32xf32>
    %279 = arith.addf %277, %278 : vector<2x32xf32>
    %280 = math.tanh %279 : vector<2x32xf32>
    %281 = arith.mulf %276, %280 : vector<2x32xf32>
    %282 = vector.extract_strided_slice %254 {offsets = [0, 128], sizes = [2, 128], strides = [1, 1]} : vector<2x256xf32> to vector<2x128xf32>
    %283 = arith.addf %252, %282 : vector<2x128xf32>
    %284 = vector.extract_strided_slice %283 {offsets = [0, 0], sizes = [2, 32], strides = [1, 1]} : vector<2x128xf32> to vector<2x32xf32>
    %285 = arith.negf %284 : vector<2x32xf32>
    %286 = math.exp %285 : vector<2x32xf32>
    %cst_51 = arith.constant 1.000000e+00 : f32
    %287 = vector.broadcast %cst_51 : f32 to vector<2x32xf32>
    %288 = arith.addf %287, %286 : vector<2x32xf32>
    %289 = arith.divf %287, %288 : vector<2x32xf32>
    %290 = vector.extract_strided_slice %283 {offsets = [0, 32], sizes = [2, 32], strides = [1, 1]} : vector<2x128xf32> to vector<2x32xf32>
    %291 = arith.negf %290 : vector<2x32xf32>
    %292 = math.exp %291 : vector<2x32xf32>
    %cst_52 = arith.constant 1.000000e+00 : f32
    %293 = vector.broadcast %cst_52 : f32 to vector<2x32xf32>
    %294 = arith.addf %293, %292 : vector<2x32xf32>
    %295 = arith.divf %293, %294 : vector<2x32xf32>
    %296 = vector.extract_strided_slice %283 {offsets = [0, 64], sizes = [2, 32], strides = [1, 1]} : vector<2x128xf32> to vector<2x32xf32>
    %297 = math.tanh %296 : vector<2x32xf32>
    %298 = vector.extract_strided_slice %283 {offsets = [0, 96], sizes = [2, 32], strides = [1, 1]} : vector<2x128xf32> to vector<2x32xf32>
    %299 = arith.negf %298 : vector<2x32xf32>
    %300 = math.exp %299 : vector<2x32xf32>
    %cst_53 = arith.constant 1.000000e+00 : f32
    %301 = vector.broadcast %cst_53 : f32 to vector<2x32xf32>
    %302 = arith.addf %301, %300 : vector<2x32xf32>
    %303 = arith.divf %301, %302 : vector<2x32xf32>
    %304 = arith.mulf %295, %246 : vector<2x32xf32>
    %305 = arith.mulf %289, %297 : vector<2x32xf32>
    %306 = arith.addf %304, %305 : vector<2x32xf32>
    %307 = math.tanh %306 : vector<2x32xf32>
    %308 = arith.mulf %303, %307 : vector<2x32xf32>
    %c8_54 = arith.constant 8 : index
    %c0_55 = arith.constant 0 : index
    %309 = vector.load %arg12[%c8_54, %c0_55] : memref<16x64xf32, #tpu.memory_space<vmem>>, vector<2x32xf32>
    tpu.vector_store %arg12[%c8_54, %c0_55], %281 {strides = array<i32>} : memref<16x64xf32, #tpu.memory_space<vmem>>, vector<2x32xf32>,
    %c6_56 = arith.constant 6 : index
    %c32_57 = arith.constant 32 : index
    %310 = vector.load %arg12[%c6_56, %c32_57] : memref<16x64xf32, #tpu.memory_space<vmem>>, vector<2x32xf32>
    tpu.vector_store %arg12[%c6_56, %c32_57], %308 {strides = array<i32>} : memref<16x64xf32, #tpu.memory_space<vmem>>, vector<2x32xf32>,
    %311 = vector.extract_strided_slice %5 {offsets = [10, 0], sizes = [2, 128], strides = [1, 1]} : vector<16x256xf32> to vector<2x128xf32>
    %312 = vector.extract_strided_slice %5 {offsets = [4, 128], sizes = [2, 128], strides = [1, 1]} : vector<16x256xf32> to vector<2x128xf32>
    %313 = tpu.concatenate %281, %308 in 1 : vector<2x32xf32>, vector<2x32xf32> -> vector<2x64xf32>
    %cst_58 = arith.constant dense<0.000000e+00> : vector<2x256xf32>
    %314 = tpu.matmul %313, %6, %cst_58 {dimension_numbers = #tpu.dot_dimension_numbers<[1], [0], [0], [1], [0, 0, 1, 1], [], []>} : vector<2x64xf32>, vector<64x256xf32>, vector<2x256xf32> -> vector<2x256xf32>
    %315 = vector.extract_strided_slice %314 {offsets = [0, 0], sizes = [2, 128], strides = [1, 1]} : vector<2x256xf32> to vector<2x128xf32>
    %316 = arith.addf %311, %315 : vector<2x128xf32>
    %317 = vector.extract_strided_slice %316 {offsets = [0, 0], sizes = [2, 32], strides = [1, 1]} : vector<2x128xf32> to vector<2x32xf32>
    %318 = arith.negf %317 : vector<2x32xf32>
    %319 = math.exp %318 : vector<2x32xf32>
    %cst_59 = arith.constant 1.000000e+00 : f32
    %320 = vector.broadcast %cst_59 : f32 to vector<2x32xf32>
    %321 = arith.addf %320, %319 : vector<2x32xf32>
    %322 = arith.divf %320, %321 : vector<2x32xf32>
    %323 = vector.extract_strided_slice %316 {offsets = [0, 32], sizes = [2, 32], strides = [1, 1]} : vector<2x128xf32> to vector<2x32xf32>
    %324 = arith.negf %323 : vector<2x32xf32>
    %325 = math.exp %324 : vector<2x32xf32>
    %cst_60 = arith.constant 1.000000e+00 : f32
    %326 = vector.broadcast %cst_60 : f32 to vector<2x32xf32>
    %327 = arith.addf %326, %325 : vector<2x32xf32>
    %328 = arith.divf %326, %327 : vector<2x32xf32>
    %329 = vector.extract_strided_slice %316 {offsets = [0, 64], sizes = [2, 32], strides = [1, 1]} : vector<2x128xf32> to vector<2x32xf32>
    %330 = math.tanh %329 : vector<2x32xf32>
    %331 = vector.extract_strided_slice %316 {offsets = [0, 96], sizes = [2, 32], strides = [1, 1]} : vector<2x128xf32> to vector<2x32xf32>
    %332 = arith.negf %331 : vector<2x32xf32>
    %333 = math.exp %332 : vector<2x32xf32>
    %cst_61 = arith.constant 1.000000e+00 : f32
    %334 = vector.broadcast %cst_61 : f32 to vector<2x32xf32>
    %335 = arith.addf %334, %333 : vector<2x32xf32>
    %336 = arith.divf %334, %335 : vector<2x32xf32>
    %337 = arith.mulf %328, %279 : vector<2x32xf32>
    %338 = arith.mulf %322, %330 : vector<2x32xf32>
    %339 = arith.addf %337, %338 : vector<2x32xf32>
    %340 = math.tanh %339 : vector<2x32xf32>
    %341 = arith.mulf %336, %340 : vector<2x32xf32>
    %342 = vector.extract_strided_slice %314 {offsets = [0, 128], sizes = [2, 128], strides = [1, 1]} : vector<2x256xf32> to vector<2x128xf32>
    %343 = arith.addf %312, %342 : vector<2x128xf32>
    %344 = vector.extract_strided_slice %343 {offsets = [0, 0], sizes = [2, 32], strides = [1, 1]} : vector<2x128xf32> to vector<2x32xf32>
    %345 = arith.negf %344 : vector<2x32xf32>
    %346 = math.exp %345 : vector<2x32xf32>
    %cst_62 = arith.constant 1.000000e+00 : f32
    %347 = vector.broadcast %cst_62 : f32 to vector<2x32xf32>
    %348 = arith.addf %347, %346 : vector<2x32xf32>
    %349 = arith.divf %347, %348 : vector<2x32xf32>
    %350 = vector.extract_strided_slice %343 {offsets = [0, 32], sizes = [2, 32], strides = [1, 1]} : vector<2x128xf32> to vector<2x32xf32>
    %351 = arith.negf %350 : vector<2x32xf32>
    %352 = math.exp %351 : vector<2x32xf32>
    %cst_63 = arith.constant 1.000000e+00 : f32
    %353 = vector.broadcast %cst_63 : f32 to vector<2x32xf32>
    %354 = arith.addf %353, %352 : vector<2x32xf32>
    %355 = arith.divf %353, %354 : vector<2x32xf32>
    %356 = vector.extract_strided_slice %343 {offsets = [0, 64], sizes = [2, 32], strides = [1, 1]} : vector<2x128xf32> to vector<2x32xf32>
    %357 = math.tanh %356 : vector<2x32xf32>
    %358 = vector.extract_strided_slice %343 {offsets = [0, 96], sizes = [2, 32], strides = [1, 1]} : vector<2x128xf32> to vector<2x32xf32>
    %359 = arith.negf %358 : vector<2x32xf32>
    %360 = math.exp %359 : vector<2x32xf32>
    %cst_64 = arith.constant 1.000000e+00 : f32
    %361 = vector.broadcast %cst_64 : f32 to vector<2x32xf32>
    %362 = arith.addf %361, %360 : vector<2x32xf32>
    %363 = arith.divf %361, %362 : vector<2x32xf32>
    %364 = arith.mulf %355, %306 : vector<2x32xf32>
    %365 = arith.mulf %349, %357 : vector<2x32xf32>
    %366 = arith.addf %364, %365 : vector<2x32xf32>
    %367 = math.tanh %366 : vector<2x32xf32>
    %368 = arith.mulf %363, %367 : vector<2x32xf32>
    %c10_65 = arith.constant 10 : index
    %c0_66 = arith.constant 0 : index
    %369 = vector.load %arg12[%c10_65, %c0_66] : memref<16x64xf32, #tpu.memory_space<vmem>>, vector<2x32xf32>
    tpu.vector_store %arg12[%c10_65, %c0_66], %341 {strides = array<i32>} : memref<16x64xf32, #tpu.memory_space<vmem>>, vector<2x32xf32>,
    %c4_67 = arith.constant 4 : index
    %c32_68 = arith.constant 32 : index
    %370 = vector.load %arg12[%c4_67, %c32_68] : memref<16x64xf32, #tpu.memory_space<vmem>>, vector<2x32xf32>
    tpu.vector_store %arg12[%c4_67, %c32_68], %368 {strides = array<i32>} : memref<16x64xf32, #tpu.memory_space<vmem>>, vector<2x32xf32>,
    %371 = vector.extract_strided_slice %5 {offsets = [12, 0], sizes = [2, 128], strides = [1, 1]} : vector<16x256xf32> to vector<2x128xf32>
    %372 = vector.extract_strided_slice %5 {offsets = [2, 128], sizes = [2, 128], strides = [1, 1]} : vector<16x256xf32> to vector<2x128xf32>
    %373 = tpu.concatenate %341, %368 in 1 : vector<2x32xf32>, vector<2x32xf32> -> vector<2x64xf32>
    %cst_69 = arith.constant dense<0.000000e+00> : vector<2x256xf32>
    %374 = tpu.matmul %373, %6, %cst_69 {dimension_numbers = #tpu.dot_dimension_numbers<[1], [0], [0], [1], [0, 0, 1, 1], [], []>} : vector<2x64xf32>, vector<64x256xf32>, vector<2x256xf32> -> vector<2x256xf32>
    %375 = vector.extract_strided_slice %374 {offsets = [0, 0], sizes = [2, 128], strides = [1, 1]} : vector<2x256xf32> to vector<2x128xf32>
    %376 = arith.addf %371, %375 : vector<2x128xf32>
    %377 = vector.extract_strided_slice %376 {offsets = [0, 0], sizes = [2, 32], strides = [1, 1]} : vector<2x128xf32> to vector<2x32xf32>
    %378 = arith.negf %377 : vector<2x32xf32>
    %379 = math.exp %378 : vector<2x32xf32>
    %cst_70 = arith.constant 1.000000e+00 : f32
    %380 = vector.broadcast %cst_70 : f32 to vector<2x32xf32>
    %381 = arith.addf %380, %379 : vector<2x32xf32>
    %382 = arith.divf %380, %381 : vector<2x32xf32>
    %383 = vector.extract_strided_slice %376 {offsets = [0, 32], sizes = [2, 32], strides = [1, 1]} : vector<2x128xf32> to vector<2x32xf32>
    %384 = arith.negf %383 : vector<2x32xf32>
    %385 = math.exp %384 : vector<2x32xf32>
    %cst_71 = arith.constant 1.000000e+00 : f32
    %386 = vector.broadcast %cst_71 : f32 to vector<2x32xf32>
    %387 = arith.addf %386, %385 : vector<2x32xf32>
    %388 = arith.divf %386, %387 : vector<2x32xf32>
    %389 = vector.extract_strided_slice %376 {offsets = [0, 64], sizes = [2, 32], strides = [1, 1]} : vector<2x128xf32> to vector<2x32xf32>
    %390 = math.tanh %389 : vector<2x32xf32>
    %391 = vector.extract_strided_slice %376 {offsets = [0, 96], sizes = [2, 32], strides = [1, 1]} : vector<2x128xf32> to vector<2x32xf32>
    %392 = arith.negf %391 : vector<2x32xf32>
    %393 = math.exp %392 : vector<2x32xf32>
    %cst_72 = arith.constant 1.000000e+00 : f32
    %394 = vector.broadcast %cst_72 : f32 to vector<2x32xf32>
    %395 = arith.addf %394, %393 : vector<2x32xf32>
    %396 = arith.divf %394, %395 : vector<2x32xf32>
    %397 = arith.mulf %388, %339 : vector<2x32xf32>
    %398 = arith.mulf %382, %390 : vector<2x32xf32>
    %399 = arith.addf %397, %398 : vector<2x32xf32>
    %400 = math.tanh %399 : vector<2x32xf32>
    %401 = arith.mulf %396, %400 : vector<2x32xf32>
    %402 = vector.extract_strided_slice %374 {offsets = [0, 128], sizes = [2, 128], strides = [1, 1]} : vector<2x256xf32> to vector<2x128xf32>
    %403 = arith.addf %372, %402 : vector<2x128xf32>
    %404 = vector.extract_strided_slice %403 {offsets = [0, 0], sizes = [2, 32], strides = [1, 1]} : vector<2x128xf32> to vector<2x32xf32>
    %405 = arith.negf %404 : vector<2x32xf32>
    %406 = math.exp %405 : vector<2x32xf32>
    %cst_73 = arith.constant 1.000000e+00 : f32
    %407 = vector.broadcast %cst_73 : f32 to vector<2x32xf32>
    %408 = arith.addf %407, %406 : vector<2x32xf32>
    %409 = arith.divf %407, %408 : vector<2x32xf32>
    %410 = vector.extract_strided_slice %403 {offsets = [0, 32], sizes = [2, 32], strides = [1, 1]} : vector<2x128xf32> to vector<2x32xf32>
    %411 = arith.negf %410 : vector<2x32xf32>
    %412 = math.exp %411 : vector<2x32xf32>
    %cst_74 = arith.constant 1.000000e+00 : f32
    %413 = vector.broadcast %cst_74 : f32 to vector<2x32xf32>
    %414 = arith.addf %413, %412 : vector<2x32xf32>
    %415 = arith.divf %413, %414 : vector<2x32xf32>
    %416 = vector.extract_strided_slice %403 {offsets = [0, 64], sizes = [2, 32], strides = [1, 1]} : vector<2x128xf32> to vector<2x32xf32>
    %417 = math.tanh %416 : vector<2x32xf32>
    %418 = vector.extract_strided_slice %403 {offsets = [0, 96], sizes = [2, 32], strides = [1, 1]} : vector<2x128xf32> to vector<2x32xf32>
    %419 = arith.negf %418 : vector<2x32xf32>
    %420 = math.exp %419 : vector<2x32xf32>
    %cst_75 = arith.constant 1.000000e+00 : f32
    %421 = vector.broadcast %cst_75 : f32 to vector<2x32xf32>
    %422 = arith.addf %421, %420 : vector<2x32xf32>
    %423 = arith.divf %421, %422 : vector<2x32xf32>
    %424 = arith.mulf %415, %366 : vector<2x32xf32>
    %425 = arith.mulf %409, %417 : vector<2x32xf32>
    %426 = arith.addf %424, %425 : vector<2x32xf32>
    %427 = math.tanh %426 : vector<2x32xf32>
    %428 = arith.mulf %423, %427 : vector<2x32xf32>
    %c12_76 = arith.constant 12 : index
    %c0_77 = arith.constant 0 : index
    %429 = vector.load %arg12[%c12_76, %c0_77] : memref<16x64xf32, #tpu.memory_space<vmem>>, vector<2x32xf32>
    tpu.vector_store %arg12[%c12_76, %c0_77], %401 {strides = array<i32>} : memref<16x64xf32, #tpu.memory_space<vmem>>, vector<2x32xf32>,
    %c2_78 = arith.constant 2 : index
    %c32_79 = arith.constant 32 : index
    %430 = vector.load %arg12[%c2_78, %c32_79] : memref<16x64xf32, #tpu.memory_space<vmem>>, vector<2x32xf32>
    tpu.vector_store %arg12[%c2_78, %c32_79], %428 {strides = array<i32>} : memref<16x64xf32, #tpu.memory_space<vmem>>, vector<2x32xf32>,
    %431 = vector.extract_strided_slice %5 {offsets = [14, 0], sizes = [2, 128], strides = [1, 1]} : vector<16x256xf32> to vector<2x128xf32>
    %432 = vector.extract_strided_slice %5 {offsets = [0, 128], sizes = [2, 128], strides = [1, 1]} : vector<16x256xf32> to vector<2x128xf32>
    %433 = tpu.concatenate %401, %428 in 1 : vector<2x32xf32>, vector<2x32xf32> -> vector<2x64xf32>
    %cst_80 = arith.constant dense<0.000000e+00> : vector<2x256xf32>
    %434 = tpu.matmul %433, %6, %cst_80 {dimension_numbers = #tpu.dot_dimension_numbers<[1], [0], [0], [1], [0, 0, 1, 1], [], []>} : vector<2x64xf32>, vector<64x256xf32>, vector<2x256xf32> -> vector<2x256xf32>
    %435 = vector.extract_strided_slice %434 {offsets = [0, 0], sizes = [2, 128], strides = [1, 1]} : vector<2x256xf32> to vector<2x128xf32>
    %436 = arith.addf %431, %435 : vector<2x128xf32>
    %437 = vector.extract_strided_slice %436 {offsets = [0, 0], sizes = [2, 32], strides = [1, 1]} : vector<2x128xf32> to vector<2x32xf32>
    %438 = arith.negf %437 : vector<2x32xf32>
    %439 = math.exp %438 : vector<2x32xf32>
    %cst_81 = arith.constant 1.000000e+00 : f32
    %440 = vector.broadcast %cst_81 : f32 to vector<2x32xf32>
    %441 = arith.addf %440, %439 : vector<2x32xf32>
    %442 = arith.divf %440, %441 : vector<2x32xf32>
    %443 = vector.extract_strided_slice %436 {offsets = [0, 32], sizes = [2, 32], strides = [1, 1]} : vector<2x128xf32> to vector<2x32xf32>
    %444 = arith.negf %443 : vector<2x32xf32>
    %445 = math.exp %444 : vector<2x32xf32>
    %cst_82 = arith.constant 1.000000e+00 : f32
    %446 = vector.broadcast %cst_82 : f32 to vector<2x32xf32>
    %447 = arith.addf %446, %445 : vector<2x32xf32>
    %448 = arith.divf %446, %447 : vector<2x32xf32>
    %449 = vector.extract_strided_slice %436 {offsets = [0, 64], sizes = [2, 32], strides = [1, 1]} : vector<2x128xf32> to vector<2x32xf32>
    %450 = math.tanh %449 : vector<2x32xf32>
    %451 = vector.extract_strided_slice %436 {offsets = [0, 96], sizes = [2, 32], strides = [1, 1]} : vector<2x128xf32> to vector<2x32xf32>
    %452 = arith.negf %451 : vector<2x32xf32>
    %453 = math.exp %452 : vector<2x32xf32>
    %cst_83 = arith.constant 1.000000e+00 : f32
    %454 = vector.broadcast %cst_83 : f32 to vector<2x32xf32>
    %455 = arith.addf %454, %453 : vector<2x32xf32>
    %456 = arith.divf %454, %455 : vector<2x32xf32>
    %457 = arith.mulf %448, %399 : vector<2x32xf32>
    %458 = arith.mulf %442, %450 : vector<2x32xf32>
    %459 = arith.addf %457, %458 : vector<2x32xf32>
    %460 = math.tanh %459 : vector<2x32xf32>
    %461 = arith.mulf %456, %460 : vector<2x32xf32>
    %462 = vector.extract_strided_slice %434 {offsets = [0, 128], sizes = [2, 128], strides = [1, 1]} : vector<2x256xf32> to vector<2x128xf32>
    %463 = arith.addf %432, %462 : vector<2x128xf32>
    %464 = vector.extract_strided_slice %463 {offsets = [0, 0], sizes = [2, 32], strides = [1, 1]} : vector<2x128xf32> to vector<2x32xf32>
    %465 = arith.negf %464 : vector<2x32xf32>
    %466 = math.exp %465 : vector<2x32xf32>
    %cst_84 = arith.constant 1.000000e+00 : f32
    %467 = vector.broadcast %cst_84 : f32 to vector<2x32xf32>
    %468 = arith.addf %467, %466 : vector<2x32xf32>
    %469 = arith.divf %467, %468 : vector<2x32xf32>
    %470 = vector.extract_strided_slice %463 {offsets = [0, 32], sizes = [2, 32], strides = [1, 1]} : vector<2x128xf32> to vector<2x32xf32>
    %471 = arith.negf %470 : vector<2x32xf32>
    %472 = math.exp %471 : vector<2x32xf32>
    %cst_85 = arith.constant 1.000000e+00 : f32
    %473 = vector.broadcast %cst_85 : f32 to vector<2x32xf32>
    %474 = arith.addf %473, %472 : vector<2x32xf32>
    %475 = arith.divf %473, %474 : vector<2x32xf32>
    %476 = vector.extract_strided_slice %463 {offsets = [0, 64], sizes = [2, 32], strides = [1, 1]} : vector<2x128xf32> to vector<2x32xf32>
    %477 = math.tanh %476 : vector<2x32xf32>
    %478 = vector.extract_strided_slice %463 {offsets = [0, 96], sizes = [2, 32], strides = [1, 1]} : vector<2x128xf32> to vector<2x32xf32>
    %479 = arith.negf %478 : vector<2x32xf32>
    %480 = math.exp %479 : vector<2x32xf32>
    %cst_86 = arith.constant 1.000000e+00 : f32
    %481 = vector.broadcast %cst_86 : f32 to vector<2x32xf32>
    %482 = arith.addf %481, %480 : vector<2x32xf32>
    %483 = arith.divf %481, %482 : vector<2x32xf32>
    %484 = arith.mulf %475, %426 : vector<2x32xf32>
    %485 = arith.mulf %469, %477 : vector<2x32xf32>
    %486 = arith.addf %484, %485 : vector<2x32xf32>
    %487 = math.tanh %486 : vector<2x32xf32>
    %488 = arith.mulf %483, %487 : vector<2x32xf32>
    %c14_87 = arith.constant 14 : index
    %c0_88 = arith.constant 0 : index
    %489 = vector.load %arg12[%c14_87, %c0_88] : memref<16x64xf32, #tpu.memory_space<vmem>>, vector<2x32xf32>
    tpu.vector_store %arg12[%c14_87, %c0_88], %461 {strides = array<i32>} : memref<16x64xf32, #tpu.memory_space<vmem>>, vector<2x32xf32>,
    %c0_89 = arith.constant 0 : index
    %c32_90 = arith.constant 32 : index
    %490 = vector.load %arg12[%c0_89, %c32_90] : memref<16x64xf32, #tpu.memory_space<vmem>>, vector<2x32xf32>
    tpu.vector_store %arg12[%c0_89, %c32_90], %488 {strides = array<i32>} : memref<16x64xf32, #tpu.memory_space<vmem>>, vector<2x32xf32>,
    %c0_91 = arith.constant 0 : index
    %c0_92 = arith.constant 0 : index
    %491 = vector.load %arg12[%c0_91, %c0_92] : memref<16x64xf32, #tpu.memory_space<vmem>>, vector<16x64xf32>
    %c0_93 = arith.constant 0 : index
    %c0_94 = arith.constant 0 : index
    %492 = vector.load %arg4[%c0_93, %c0_94] : memref<64x256xf32, #tpu.memory_space<vmem>>, vector<64x256xf32>
    %cst_95 = arith.constant dense<0.000000e+00> : vector<16x256xf32>
    %493 = tpu.matmul %491, %492, %cst_95 {dimension_numbers = #tpu.dot_dimension_numbers<[1], [0], [0], [1], [0, 0, 1, 1], [], []>} : vector<16x64xf32>, vector<64x256xf32>, vector<16x256xf32> -> vector<16x256xf32>
    %c0_96 = arith.constant 0 : index
    %c0_97 = arith.constant 0 : index
    %494 = vector.load %arg5[%c0_96, %c0_97] : memref<1x256xf32, #tpu.memory_space<vmem>>, vector<1x256xf32>
    %495 = vector.broadcast %494 : vector<1x256xf32> to vector<16x256xf32>
    %496 = arith.addf %493, %495 : vector<16x256xf32>
    %c0_98 = arith.constant 0 : index
    %c0_99 = arith.constant 0 : index
    %497 = vector.load %arg6[%c0_98, %c0_99] : memref<64x256xf32, #tpu.memory_space<vmem>>, vector<64x256xf32>
    %cst_100 = arith.constant 0.000000e+00 : f32
    %498 = vector.broadcast %cst_100 : f32 to vector<2x32xf32>
    %cst_101 = arith.constant 0.000000e+00 : f32
    %499 = vector.broadcast %cst_101 : f32 to vector<2x32xf32>
    %cst_102 = arith.constant 0.000000e+00 : f32
    %500 = vector.broadcast %cst_102 : f32 to vector<2x32xf32>
    %cst_103 = arith.constant 0.000000e+00 : f32
    %501 = vector.broadcast %cst_103 : f32 to vector<2x32xf32>
    %502 = vector.extract_strided_slice %496 {offsets = [0, 0], sizes = [2, 128], strides = [1, 1]} : vector<16x256xf32> to vector<2x128xf32>
    %503 = vector.extract_strided_slice %496 {offsets = [14, 128], sizes = [2, 128], strides = [1, 1]} : vector<16x256xf32> to vector<2x128xf32>
    %504 = tpu.concatenate %498, %500 in 1 : vector<2x32xf32>, vector<2x32xf32> -> vector<2x64xf32>
    %cst_104 = arith.constant dense<0.000000e+00> : vector<2x256xf32>
    %505 = tpu.matmul %504, %497, %cst_104 {dimension_numbers = #tpu.dot_dimension_numbers<[1], [0], [0], [1], [0, 0, 1, 1], [], []>} : vector<2x64xf32>, vector<64x256xf32>, vector<2x256xf32> -> vector<2x256xf32>
    %506 = vector.extract_strided_slice %505 {offsets = [0, 0], sizes = [2, 128], strides = [1, 1]} : vector<2x256xf32> to vector<2x128xf32>
    %507 = arith.addf %502, %506 : vector<2x128xf32>
    %508 = vector.extract_strided_slice %507 {offsets = [0, 0], sizes = [2, 32], strides = [1, 1]} : vector<2x128xf32> to vector<2x32xf32>
    %509 = arith.negf %508 : vector<2x32xf32>
    %510 = math.exp %509 : vector<2x32xf32>
    %cst_105 = arith.constant 1.000000e+00 : f32
    %511 = vector.broadcast %cst_105 : f32 to vector<2x32xf32>
    %512 = arith.addf %511, %510 : vector<2x32xf32>
    %513 = arith.divf %511, %512 : vector<2x32xf32>
    %514 = vector.extract_strided_slice %507 {offsets = [0, 32], sizes = [2, 32], strides = [1, 1]} : vector<2x128xf32> to vector<2x32xf32>
    %515 = arith.negf %514 : vector<2x32xf32>
    %516 = math.exp %515 : vector<2x32xf32>
    %cst_106 = arith.constant 1.000000e+00 : f32
    %517 = vector.broadcast %cst_106 : f32 to vector<2x32xf32>
    %518 = arith.addf %517, %516 : vector<2x32xf32>
    %519 = arith.divf %517, %518 : vector<2x32xf32>
    %520 = vector.extract_strided_slice %507 {offsets = [0, 64], sizes = [2, 32], strides = [1, 1]} : vector<2x128xf32> to vector<2x32xf32>
    %521 = math.tanh %520 : vector<2x32xf32>
    %522 = vector.extract_strided_slice %507 {offsets = [0, 96], sizes = [2, 32], strides = [1, 1]} : vector<2x128xf32> to vector<2x32xf32>
    %523 = arith.negf %522 : vector<2x32xf32>
    %524 = math.exp %523 : vector<2x32xf32>
    %cst_107 = arith.constant 1.000000e+00 : f32
    %525 = vector.broadcast %cst_107 : f32 to vector<2x32xf32>
    %526 = arith.addf %525, %524 : vector<2x32xf32>
    %527 = arith.divf %525, %526 : vector<2x32xf32>
    %528 = arith.mulf %519, %499 : vector<2x32xf32>
    %529 = arith.mulf %513, %521 : vector<2x32xf32>
    %530 = arith.addf %528, %529 : vector<2x32xf32>
    %531 = math.tanh %530 : vector<2x32xf32>
    %532 = arith.mulf %527, %531 : vector<2x32xf32>
    %533 = vector.extract_strided_slice %505 {offsets = [0, 128], sizes = [2, 128], strides = [1, 1]} : vector<2x256xf32> to vector<2x128xf32>
    %534 = arith.addf %503, %533 : vector<2x128xf32>
    %535 = vector.extract_strided_slice %534 {offsets = [0, 0], sizes = [2, 32], strides = [1, 1]} : vector<2x128xf32> to vector<2x32xf32>
    %536 = arith.negf %535 : vector<2x32xf32>
    %537 = math.exp %536 : vector<2x32xf32>
    %cst_108 = arith.constant 1.000000e+00 : f32
    %538 = vector.broadcast %cst_108 : f32 to vector<2x32xf32>
    %539 = arith.addf %538, %537 : vector<2x32xf32>
    %540 = arith.divf %538, %539 : vector<2x32xf32>
    %541 = vector.extract_strided_slice %534 {offsets = [0, 32], sizes = [2, 32], strides = [1, 1]} : vector<2x128xf32> to vector<2x32xf32>
    %542 = arith.negf %541 : vector<2x32xf32>
    %543 = math.exp %542 : vector<2x32xf32>
    %cst_109 = arith.constant 1.000000e+00 : f32
    %544 = vector.broadcast %cst_109 : f32 to vector<2x32xf32>
    %545 = arith.addf %544, %543 : vector<2x32xf32>
    %546 = arith.divf %544, %545 : vector<2x32xf32>
    %547 = vector.extract_strided_slice %534 {offsets = [0, 64], sizes = [2, 32], strides = [1, 1]} : vector<2x128xf32> to vector<2x32xf32>
    %548 = math.tanh %547 : vector<2x32xf32>
    %549 = vector.extract_strided_slice %534 {offsets = [0, 96], sizes = [2, 32], strides = [1, 1]} : vector<2x128xf32> to vector<2x32xf32>
    %550 = arith.negf %549 : vector<2x32xf32>
    %551 = math.exp %550 : vector<2x32xf32>
    %cst_110 = arith.constant 1.000000e+00 : f32
    %552 = vector.broadcast %cst_110 : f32 to vector<2x32xf32>
    %553 = arith.addf %552, %551 : vector<2x32xf32>
    %554 = arith.divf %552, %553 : vector<2x32xf32>
    %555 = arith.mulf %546, %501 : vector<2x32xf32>
    %556 = arith.mulf %540, %548 : vector<2x32xf32>
    %557 = arith.addf %555, %556 : vector<2x32xf32>
    %558 = math.tanh %557 : vector<2x32xf32>
    %559 = arith.mulf %554, %558 : vector<2x32xf32>
    %c0_111 = arith.constant 0 : index
    %c0_112 = arith.constant 0 : index
    %560 = vector.load %arg13[%c0_111, %c0_112] : memref<16x64xf32, #tpu.memory_space<vmem>>, vector<2x32xf32>
    tpu.vector_store %arg13[%c0_111, %c0_112], %532 {strides = array<i32>} : memref<16x64xf32, #tpu.memory_space<vmem>>, vector<2x32xf32>,
    %c14_113 = arith.constant 14 : index
    %c32_114 = arith.constant 32 : index
    %561 = vector.load %arg13[%c14_113, %c32_114] : memref<16x64xf32, #tpu.memory_space<vmem>>, vector<2x32xf32>
    tpu.vector_store %arg13[%c14_113, %c32_114], %559 {strides = array<i32>} : memref<16x64xf32, #tpu.memory_space<vmem>>, vector<2x32xf32>,
    %562 = vector.extract_strided_slice %496 {offsets = [2, 0], sizes = [2, 128], strides = [1, 1]} : vector<16x256xf32> to vector<2x128xf32>
    %563 = vector.extract_strided_slice %496 {offsets = [12, 128], sizes = [2, 128], strides = [1, 1]} : vector<16x256xf32> to vector<2x128xf32>
    %564 = tpu.concatenate %532, %559 in 1 : vector<2x32xf32>, vector<2x32xf32> -> vector<2x64xf32>
    %cst_115 = arith.constant dense<0.000000e+00> : vector<2x256xf32>
    %565 = tpu.matmul %564, %497, %cst_115 {dimension_numbers = #tpu.dot_dimension_numbers<[1], [0], [0], [1], [0, 0, 1, 1], [], []>} : vector<2x64xf32>, vector<64x256xf32>, vector<2x256xf32> -> vector<2x256xf32>
    %566 = vector.extract_strided_slice %565 {offsets = [0, 0], sizes = [2, 128], strides = [1, 1]} : vector<2x256xf32> to vector<2x128xf32>
    %567 = arith.addf %562, %566 : vector<2x128xf32>
    %568 = vector.extract_strided_slice %567 {offsets = [0, 0], sizes = [2, 32], strides = [1, 1]} : vector<2x128xf32> to vector<2x32xf32>
    %569 = arith.negf %568 : vector<2x32xf32>
    %570 = math.exp %569 : vector<2x32xf32>
    %cst_116 = arith.constant 1.000000e+00 : f32
    %571 = vector.broadcast %cst_116 : f32 to vector<2x32xf32>
    %572 = arith.addf %571, %570 : vector<2x32xf32>
    %573 = arith.divf %571, %572 : vector<2x32xf32>
    %574 = vector.extract_strided_slice %567 {offsets = [0, 32], sizes = [2, 32], strides = [1, 1]} : vector<2x128xf32> to vector<2x32xf32>
    %575 = arith.negf %574 : vector<2x32xf32>
    %576 = math.exp %575 : vector<2x32xf32>
    %cst_117 = arith.constant 1.000000e+00 : f32
    %577 = vector.broadcast %cst_117 : f32 to vector<2x32xf32>
    %578 = arith.addf %577, %576 : vector<2x32xf32>
    %579 = arith.divf %577, %578 : vector<2x32xf32>
    %580 = vector.extract_strided_slice %567 {offsets = [0, 64], sizes = [2, 32], strides = [1, 1]} : vector<2x128xf32> to vector<2x32xf32>
    %581 = math.tanh %580 : vector<2x32xf32>
    %582 = vector.extract_strided_slice %567 {offsets = [0, 96], sizes = [2, 32], strides = [1, 1]} : vector<2x128xf32> to vector<2x32xf32>
    %583 = arith.negf %582 : vector<2x32xf32>
    %584 = math.exp %583 : vector<2x32xf32>
    %cst_118 = arith.constant 1.000000e+00 : f32
    %585 = vector.broadcast %cst_118 : f32 to vector<2x32xf32>
    %586 = arith.addf %585, %584 : vector<2x32xf32>
    %587 = arith.divf %585, %586 : vector<2x32xf32>
    %588 = arith.mulf %579, %530 : vector<2x32xf32>
    %589 = arith.mulf %573, %581 : vector<2x32xf32>
    %590 = arith.addf %588, %589 : vector<2x32xf32>
    %591 = math.tanh %590 : vector<2x32xf32>
    %592 = arith.mulf %587, %591 : vector<2x32xf32>
    %593 = vector.extract_strided_slice %565 {offsets = [0, 128], sizes = [2, 128], strides = [1, 1]} : vector<2x256xf32> to vector<2x128xf32>
    %594 = arith.addf %563, %593 : vector<2x128xf32>
    %595 = vector.extract_strided_slice %594 {offsets = [0, 0], sizes = [2, 32], strides = [1, 1]} : vector<2x128xf32> to vector<2x32xf32>
    %596 = arith.negf %595 : vector<2x32xf32>
    %597 = math.exp %596 : vector<2x32xf32>
    %cst_119 = arith.constant 1.000000e+00 : f32
    %598 = vector.broadcast %cst_119 : f32 to vector<2x32xf32>
    %599 = arith.addf %598, %597 : vector<2x32xf32>
    %600 = arith.divf %598, %599 : vector<2x32xf32>
    %601 = vector.extract_strided_slice %594 {offsets = [0, 32], sizes = [2, 32], strides = [1, 1]} : vector<2x128xf32> to vector<2x32xf32>
    %602 = arith.negf %601 : vector<2x32xf32>
    %603 = math.exp %602 : vector<2x32xf32>
    %cst_120 = arith.constant 1.000000e+00 : f32
    %604 = vector.broadcast %cst_120 : f32 to vector<2x32xf32>
    %605 = arith.addf %604, %603 : vector<2x32xf32>
    %606 = arith.divf %604, %605 : vector<2x32xf32>
    %607 = vector.extract_strided_slice %594 {offsets = [0, 64], sizes = [2, 32], strides = [1, 1]} : vector<2x128xf32> to vector<2x32xf32>
    %608 = math.tanh %607 : vector<2x32xf32>
    %609 = vector.extract_strided_slice %594 {offsets = [0, 96], sizes = [2, 32], strides = [1, 1]} : vector<2x128xf32> to vector<2x32xf32>
    %610 = arith.negf %609 : vector<2x32xf32>
    %611 = math.exp %610 : vector<2x32xf32>
    %cst_121 = arith.constant 1.000000e+00 : f32
    %612 = vector.broadcast %cst_121 : f32 to vector<2x32xf32>
    %613 = arith.addf %612, %611 : vector<2x32xf32>
    %614 = arith.divf %612, %613 : vector<2x32xf32>
    %615 = arith.mulf %606, %557 : vector<2x32xf32>
    %616 = arith.mulf %600, %608 : vector<2x32xf32>
    %617 = arith.addf %615, %616 : vector<2x32xf32>
    %618 = math.tanh %617 : vector<2x32xf32>
    %619 = arith.mulf %614, %618 : vector<2x32xf32>
    %c2_122 = arith.constant 2 : index
    %c0_123 = arith.constant 0 : index
    %620 = vector.load %arg13[%c2_122, %c0_123] : memref<16x64xf32, #tpu.memory_space<vmem>>, vector<2x32xf32>
    tpu.vector_store %arg13[%c2_122, %c0_123], %592 {strides = array<i32>} : memref<16x64xf32, #tpu.memory_space<vmem>>, vector<2x32xf32>,
    %c12_124 = arith.constant 12 : index
    %c32_125 = arith.constant 32 : index
    %621 = vector.load %arg13[%c12_124, %c32_125] : memref<16x64xf32, #tpu.memory_space<vmem>>, vector<2x32xf32>
    tpu.vector_store %arg13[%c12_124, %c32_125], %619 {strides = array<i32>} : memref<16x64xf32, #tpu.memory_space<vmem>>, vector<2x32xf32>,
    %622 = vector.extract_strided_slice %496 {offsets = [4, 0], sizes = [2, 128], strides = [1, 1]} : vector<16x256xf32> to vector<2x128xf32>
    %623 = vector.extract_strided_slice %496 {offsets = [10, 128], sizes = [2, 128], strides = [1, 1]} : vector<16x256xf32> to vector<2x128xf32>
    %624 = tpu.concatenate %592, %619 in 1 : vector<2x32xf32>, vector<2x32xf32> -> vector<2x64xf32>
    %cst_126 = arith.constant dense<0.000000e+00> : vector<2x256xf32>
    %625 = tpu.matmul %624, %497, %cst_126 {dimension_numbers = #tpu.dot_dimension_numbers<[1], [0], [0], [1], [0, 0, 1, 1], [], []>} : vector<2x64xf32>, vector<64x256xf32>, vector<2x256xf32> -> vector<2x256xf32>
    %626 = vector.extract_strided_slice %625 {offsets = [0, 0], sizes = [2, 128], strides = [1, 1]} : vector<2x256xf32> to vector<2x128xf32>
    %627 = arith.addf %622, %626 : vector<2x128xf32>
    %628 = vector.extract_strided_slice %627 {offsets = [0, 0], sizes = [2, 32], strides = [1, 1]} : vector<2x128xf32> to vector<2x32xf32>
    %629 = arith.negf %628 : vector<2x32xf32>
    %630 = math.exp %629 : vector<2x32xf32>
    %cst_127 = arith.constant 1.000000e+00 : f32
    %631 = vector.broadcast %cst_127 : f32 to vector<2x32xf32>
    %632 = arith.addf %631, %630 : vector<2x32xf32>
    %633 = arith.divf %631, %632 : vector<2x32xf32>
    %634 = vector.extract_strided_slice %627 {offsets = [0, 32], sizes = [2, 32], strides = [1, 1]} : vector<2x128xf32> to vector<2x32xf32>
    %635 = arith.negf %634 : vector<2x32xf32>
    %636 = math.exp %635 : vector<2x32xf32>
    %cst_128 = arith.constant 1.000000e+00 : f32
    %637 = vector.broadcast %cst_128 : f32 to vector<2x32xf32>
    %638 = arith.addf %637, %636 : vector<2x32xf32>
    %639 = arith.divf %637, %638 : vector<2x32xf32>
    %640 = vector.extract_strided_slice %627 {offsets = [0, 64], sizes = [2, 32], strides = [1, 1]} : vector<2x128xf32> to vector<2x32xf32>
    %641 = math.tanh %640 : vector<2x32xf32>
    %642 = vector.extract_strided_slice %627 {offsets = [0, 96], sizes = [2, 32], strides = [1, 1]} : vector<2x128xf32> to vector<2x32xf32>
    %643 = arith.negf %642 : vector<2x32xf32>
    %644 = math.exp %643 : vector<2x32xf32>
    %cst_129 = arith.constant 1.000000e+00 : f32
    %645 = vector.broadcast %cst_129 : f32 to vector<2x32xf32>
    %646 = arith.addf %645, %644 : vector<2x32xf32>
    %647 = arith.divf %645, %646 : vector<2x32xf32>
    %648 = arith.mulf %639, %590 : vector<2x32xf32>
    %649 = arith.mulf %633, %641 : vector<2x32xf32>
    %650 = arith.addf %648, %649 : vector<2x32xf32>
    %651 = math.tanh %650 : vector<2x32xf32>
    %652 = arith.mulf %647, %651 : vector<2x32xf32>
    %653 = vector.extract_strided_slice %625 {offsets = [0, 128], sizes = [2, 128], strides = [1, 1]} : vector<2x256xf32> to vector<2x128xf32>
    %654 = arith.addf %623, %653 : vector<2x128xf32>
    %655 = vector.extract_strided_slice %654 {offsets = [0, 0], sizes = [2, 32], strides = [1, 1]} : vector<2x128xf32> to vector<2x32xf32>
    %656 = arith.negf %655 : vector<2x32xf32>
    %657 = math.exp %656 : vector<2x32xf32>
    %cst_130 = arith.constant 1.000000e+00 : f32
    %658 = vector.broadcast %cst_130 : f32 to vector<2x32xf32>
    %659 = arith.addf %658, %657 : vector<2x32xf32>
    %660 = arith.divf %658, %659 : vector<2x32xf32>
    %661 = vector.extract_strided_slice %654 {offsets = [0, 32], sizes = [2, 32], strides = [1, 1]} : vector<2x128xf32> to vector<2x32xf32>
    %662 = arith.negf %661 : vector<2x32xf32>
    %663 = math.exp %662 : vector<2x32xf32>
    %cst_131 = arith.constant 1.000000e+00 : f32
    %664 = vector.broadcast %cst_131 : f32 to vector<2x32xf32>
    %665 = arith.addf %664, %663 : vector<2x32xf32>
    %666 = arith.divf %664, %665 : vector<2x32xf32>
    %667 = vector.extract_strided_slice %654 {offsets = [0, 64], sizes = [2, 32], strides = [1, 1]} : vector<2x128xf32> to vector<2x32xf32>
    %668 = math.tanh %667 : vector<2x32xf32>
    %669 = vector.extract_strided_slice %654 {offsets = [0, 96], sizes = [2, 32], strides = [1, 1]} : vector<2x128xf32> to vector<2x32xf32>
    %670 = arith.negf %669 : vector<2x32xf32>
    %671 = math.exp %670 : vector<2x32xf32>
    %cst_132 = arith.constant 1.000000e+00 : f32
    %672 = vector.broadcast %cst_132 : f32 to vector<2x32xf32>
    %673 = arith.addf %672, %671 : vector<2x32xf32>
    %674 = arith.divf %672, %673 : vector<2x32xf32>
    %675 = arith.mulf %666, %617 : vector<2x32xf32>
    %676 = arith.mulf %660, %668 : vector<2x32xf32>
    %677 = arith.addf %675, %676 : vector<2x32xf32>
    %678 = math.tanh %677 : vector<2x32xf32>
    %679 = arith.mulf %674, %678 : vector<2x32xf32>
    %c4_133 = arith.constant 4 : index
    %c0_134 = arith.constant 0 : index
    %680 = vector.load %arg13[%c4_133, %c0_134] : memref<16x64xf32, #tpu.memory_space<vmem>>, vector<2x32xf32>
    tpu.vector_store %arg13[%c4_133, %c0_134], %652 {strides = array<i32>} : memref<16x64xf32, #tpu.memory_space<vmem>>, vector<2x32xf32>,
    %c10_135 = arith.constant 10 : index
    %c32_136 = arith.constant 32 : index
    %681 = vector.load %arg13[%c10_135, %c32_136] : memref<16x64xf32, #tpu.memory_space<vmem>>, vector<2x32xf32>
    tpu.vector_store %arg13[%c10_135, %c32_136], %679 {strides = array<i32>} : memref<16x64xf32, #tpu.memory_space<vmem>>, vector<2x32xf32>,
    %682 = vector.extract_strided_slice %496 {offsets = [6, 0], sizes = [2, 128], strides = [1, 1]} : vector<16x256xf32> to vector<2x128xf32>
    %683 = vector.extract_strided_slice %496 {offsets = [8, 128], sizes = [2, 128], strides = [1, 1]} : vector<16x256xf32> to vector<2x128xf32>
    %684 = tpu.concatenate %652, %679 in 1 : vector<2x32xf32>, vector<2x32xf32> -> vector<2x64xf32>
    %cst_137 = arith.constant dense<0.000000e+00> : vector<2x256xf32>
    %685 = tpu.matmul %684, %497, %cst_137 {dimension_numbers = #tpu.dot_dimension_numbers<[1], [0], [0], [1], [0, 0, 1, 1], [], []>} : vector<2x64xf32>, vector<64x256xf32>, vector<2x256xf32> -> vector<2x256xf32>
    %686 = vector.extract_strided_slice %685 {offsets = [0, 0], sizes = [2, 128], strides = [1, 1]} : vector<2x256xf32> to vector<2x128xf32>
    %687 = arith.addf %682, %686 : vector<2x128xf32>
    %688 = vector.extract_strided_slice %687 {offsets = [0, 0], sizes = [2, 32], strides = [1, 1]} : vector<2x128xf32> to vector<2x32xf32>
    %689 = arith.negf %688 : vector<2x32xf32>
    %690 = math.exp %689 : vector<2x32xf32>
    %cst_138 = arith.constant 1.000000e+00 : f32
    %691 = vector.broadcast %cst_138 : f32 to vector<2x32xf32>
    %692 = arith.addf %691, %690 : vector<2x32xf32>
    %693 = arith.divf %691, %692 : vector<2x32xf32>
    %694 = vector.extract_strided_slice %687 {offsets = [0, 32], sizes = [2, 32], strides = [1, 1]} : vector<2x128xf32> to vector<2x32xf32>
    %695 = arith.negf %694 : vector<2x32xf32>
    %696 = math.exp %695 : vector<2x32xf32>
    %cst_139 = arith.constant 1.000000e+00 : f32
    %697 = vector.broadcast %cst_139 : f32 to vector<2x32xf32>
    %698 = arith.addf %697, %696 : vector<2x32xf32>
    %699 = arith.divf %697, %698 : vector<2x32xf32>
    %700 = vector.extract_strided_slice %687 {offsets = [0, 64], sizes = [2, 32], strides = [1, 1]} : vector<2x128xf32> to vector<2x32xf32>
    %701 = math.tanh %700 : vector<2x32xf32>
    %702 = vector.extract_strided_slice %687 {offsets = [0, 96], sizes = [2, 32], strides = [1, 1]} : vector<2x128xf32> to vector<2x32xf32>
    %703 = arith.negf %702 : vector<2x32xf32>
    %704 = math.exp %703 : vector<2x32xf32>
    %cst_140 = arith.constant 1.000000e+00 : f32
    %705 = vector.broadcast %cst_140 : f32 to vector<2x32xf32>
    %706 = arith.addf %705, %704 : vector<2x32xf32>
    %707 = arith.divf %705, %706 : vector<2x32xf32>
    %708 = arith.mulf %699, %650 : vector<2x32xf32>
    %709 = arith.mulf %693, %701 : vector<2x32xf32>
    %710 = arith.addf %708, %709 : vector<2x32xf32>
    %711 = math.tanh %710 : vector<2x32xf32>
    %712 = arith.mulf %707, %711 : vector<2x32xf32>
    %713 = vector.extract_strided_slice %685 {offsets = [0, 128], sizes = [2, 128], strides = [1, 1]} : vector<2x256xf32> to vector<2x128xf32>
    %714 = arith.addf %683, %713 : vector<2x128xf32>
    %715 = vector.extract_strided_slice %714 {offsets = [0, 0], sizes = [2, 32], strides = [1, 1]} : vector<2x128xf32> to vector<2x32xf32>
    %716 = arith.negf %715 : vector<2x32xf32>
    %717 = math.exp %716 : vector<2x32xf32>
    %cst_141 = arith.constant 1.000000e+00 : f32
    %718 = vector.broadcast %cst_141 : f32 to vector<2x32xf32>
    %719 = arith.addf %718, %717 : vector<2x32xf32>
    %720 = arith.divf %718, %719 : vector<2x32xf32>
    %721 = vector.extract_strided_slice %714 {offsets = [0, 32], sizes = [2, 32], strides = [1, 1]} : vector<2x128xf32> to vector<2x32xf32>
    %722 = arith.negf %721 : vector<2x32xf32>
    %723 = math.exp %722 : vector<2x32xf32>
    %cst_142 = arith.constant 1.000000e+00 : f32
    %724 = vector.broadcast %cst_142 : f32 to vector<2x32xf32>
    %725 = arith.addf %724, %723 : vector<2x32xf32>
    %726 = arith.divf %724, %725 : vector<2x32xf32>
    %727 = vector.extract_strided_slice %714 {offsets = [0, 64], sizes = [2, 32], strides = [1, 1]} : vector<2x128xf32> to vector<2x32xf32>
    %728 = math.tanh %727 : vector<2x32xf32>
    %729 = vector.extract_strided_slice %714 {offsets = [0, 96], sizes = [2, 32], strides = [1, 1]} : vector<2x128xf32> to vector<2x32xf32>
    %730 = arith.negf %729 : vector<2x32xf32>
    %731 = math.exp %730 : vector<2x32xf32>
    %cst_143 = arith.constant 1.000000e+00 : f32
    %732 = vector.broadcast %cst_143 : f32 to vector<2x32xf32>
    %733 = arith.addf %732, %731 : vector<2x32xf32>
    %734 = arith.divf %732, %733 : vector<2x32xf32>
    %735 = arith.mulf %726, %677 : vector<2x32xf32>
    %736 = arith.mulf %720, %728 : vector<2x32xf32>
    %737 = arith.addf %735, %736 : vector<2x32xf32>
    %738 = math.tanh %737 : vector<2x32xf32>
    %739 = arith.mulf %734, %738 : vector<2x32xf32>
    %c6_144 = arith.constant 6 : index
    %c0_145 = arith.constant 0 : index
    %740 = vector.load %arg13[%c6_144, %c0_145] : memref<16x64xf32, #tpu.memory_space<vmem>>, vector<2x32xf32>
    tpu.vector_store %arg13[%c6_144, %c0_145], %712 {strides = array<i32>} : memref<16x64xf32, #tpu.memory_space<vmem>>, vector<2x32xf32>,
    %c8_146 = arith.constant 8 : index
    %c32_147 = arith.constant 32 : index
    %741 = vector.load %arg13[%c8_146, %c32_147] : memref<16x64xf32, #tpu.memory_space<vmem>>, vector<2x32xf32>
    tpu.vector_store %arg13[%c8_146, %c32_147], %739 {strides = array<i32>} : memref<16x64xf32, #tpu.memory_space<vmem>>, vector<2x32xf32>,
    %742 = vector.extract_strided_slice %496 {offsets = [8, 0], sizes = [2, 128], strides = [1, 1]} : vector<16x256xf32> to vector<2x128xf32>
    %743 = vector.extract_strided_slice %496 {offsets = [6, 128], sizes = [2, 128], strides = [1, 1]} : vector<16x256xf32> to vector<2x128xf32>
    %744 = tpu.concatenate %712, %739 in 1 : vector<2x32xf32>, vector<2x32xf32> -> vector<2x64xf32>
    %cst_148 = arith.constant dense<0.000000e+00> : vector<2x256xf32>
    %745 = tpu.matmul %744, %497, %cst_148 {dimension_numbers = #tpu.dot_dimension_numbers<[1], [0], [0], [1], [0, 0, 1, 1], [], []>} : vector<2x64xf32>, vector<64x256xf32>, vector<2x256xf32> -> vector<2x256xf32>
    %746 = vector.extract_strided_slice %745 {offsets = [0, 0], sizes = [2, 128], strides = [1, 1]} : vector<2x256xf32> to vector<2x128xf32>
    %747 = arith.addf %742, %746 : vector<2x128xf32>
    %748 = vector.extract_strided_slice %747 {offsets = [0, 0], sizes = [2, 32], strides = [1, 1]} : vector<2x128xf32> to vector<2x32xf32>
    %749 = arith.negf %748 : vector<2x32xf32>
    %750 = math.exp %749 : vector<2x32xf32>
    %cst_149 = arith.constant 1.000000e+00 : f32
    %751 = vector.broadcast %cst_149 : f32 to vector<2x32xf32>
    %752 = arith.addf %751, %750 : vector<2x32xf32>
    %753 = arith.divf %751, %752 : vector<2x32xf32>
    %754 = vector.extract_strided_slice %747 {offsets = [0, 32], sizes = [2, 32], strides = [1, 1]} : vector<2x128xf32> to vector<2x32xf32>
    %755 = arith.negf %754 : vector<2x32xf32>
    %756 = math.exp %755 : vector<2x32xf32>
    %cst_150 = arith.constant 1.000000e+00 : f32
    %757 = vector.broadcast %cst_150 : f32 to vector<2x32xf32>
    %758 = arith.addf %757, %756 : vector<2x32xf32>
    %759 = arith.divf %757, %758 : vector<2x32xf32>
    %760 = vector.extract_strided_slice %747 {offsets = [0, 64], sizes = [2, 32], strides = [1, 1]} : vector<2x128xf32> to vector<2x32xf32>
    %761 = math.tanh %760 : vector<2x32xf32>
    %762 = vector.extract_strided_slice %747 {offsets = [0, 96], sizes = [2, 32], strides = [1, 1]} : vector<2x128xf32> to vector<2x32xf32>
    %763 = arith.negf %762 : vector<2x32xf32>
    %764 = math.exp %763 : vector<2x32xf32>
    %cst_151 = arith.constant 1.000000e+00 : f32
    %765 = vector.broadcast %cst_151 : f32 to vector<2x32xf32>
    %766 = arith.addf %765, %764 : vector<2x32xf32>
    %767 = arith.divf %765, %766 : vector<2x32xf32>
    %768 = arith.mulf %759, %710 : vector<2x32xf32>
    %769 = arith.mulf %753, %761 : vector<2x32xf32>
    %770 = arith.addf %768, %769 : vector<2x32xf32>
    %771 = math.tanh %770 : vector<2x32xf32>
    %772 = arith.mulf %767, %771 : vector<2x32xf32>
    %773 = vector.extract_strided_slice %745 {offsets = [0, 128], sizes = [2, 128], strides = [1, 1]} : vector<2x256xf32> to vector<2x128xf32>
    %774 = arith.addf %743, %773 : vector<2x128xf32>
    %775 = vector.extract_strided_slice %774 {offsets = [0, 0], sizes = [2, 32], strides = [1, 1]} : vector<2x128xf32> to vector<2x32xf32>
    %776 = arith.negf %775 : vector<2x32xf32>
    %777 = math.exp %776 : vector<2x32xf32>
    %cst_152 = arith.constant 1.000000e+00 : f32
    %778 = vector.broadcast %cst_152 : f32 to vector<2x32xf32>
    %779 = arith.addf %778, %777 : vector<2x32xf32>
    %780 = arith.divf %778, %779 : vector<2x32xf32>
    %781 = vector.extract_strided_slice %774 {offsets = [0, 32], sizes = [2, 32], strides = [1, 1]} : vector<2x128xf32> to vector<2x32xf32>
    %782 = arith.negf %781 : vector<2x32xf32>
    %783 = math.exp %782 : vector<2x32xf32>
    %cst_153 = arith.constant 1.000000e+00 : f32
    %784 = vector.broadcast %cst_153 : f32 to vector<2x32xf32>
    %785 = arith.addf %784, %783 : vector<2x32xf32>
    %786 = arith.divf %784, %785 : vector<2x32xf32>
    %787 = vector.extract_strided_slice %774 {offsets = [0, 64], sizes = [2, 32], strides = [1, 1]} : vector<2x128xf32> to vector<2x32xf32>
    %788 = math.tanh %787 : vector<2x32xf32>
    %789 = vector.extract_strided_slice %774 {offsets = [0, 96], sizes = [2, 32], strides = [1, 1]} : vector<2x128xf32> to vector<2x32xf32>
    %790 = arith.negf %789 : vector<2x32xf32>
    %791 = math.exp %790 : vector<2x32xf32>
    %cst_154 = arith.constant 1.000000e+00 : f32
    %792 = vector.broadcast %cst_154 : f32 to vector<2x32xf32>
    %793 = arith.addf %792, %791 : vector<2x32xf32>
    %794 = arith.divf %792, %793 : vector<2x32xf32>
    %795 = arith.mulf %786, %737 : vector<2x32xf32>
    %796 = arith.mulf %780, %788 : vector<2x32xf32>
    %797 = arith.addf %795, %796 : vector<2x32xf32>
    %798 = math.tanh %797 : vector<2x32xf32>
    %799 = arith.mulf %794, %798 : vector<2x32xf32>
    %c8_155 = arith.constant 8 : index
    %c0_156 = arith.constant 0 : index
    %800 = vector.load %arg13[%c8_155, %c0_156] : memref<16x64xf32, #tpu.memory_space<vmem>>, vector<2x32xf32>
    tpu.vector_store %arg13[%c8_155, %c0_156], %772 {strides = array<i32>} : memref<16x64xf32, #tpu.memory_space<vmem>>, vector<2x32xf32>,
    %c6_157 = arith.constant 6 : index
    %c32_158 = arith.constant 32 : index
    %801 = vector.load %arg13[%c6_157, %c32_158] : memref<16x64xf32, #tpu.memory_space<vmem>>, vector<2x32xf32>
    tpu.vector_store %arg13[%c6_157, %c32_158], %799 {strides = array<i32>} : memref<16x64xf32, #tpu.memory_space<vmem>>, vector<2x32xf32>,
    %802 = vector.extract_strided_slice %496 {offsets = [10, 0], sizes = [2, 128], strides = [1, 1]} : vector<16x256xf32> to vector<2x128xf32>
    %803 = vector.extract_strided_slice %496 {offsets = [4, 128], sizes = [2, 128], strides = [1, 1]} : vector<16x256xf32> to vector<2x128xf32>
    %804 = tpu.concatenate %772, %799 in 1 : vector<2x32xf32>, vector<2x32xf32> -> vector<2x64xf32>
    %cst_159 = arith.constant dense<0.000000e+00> : vector<2x256xf32>
    %805 = tpu.matmul %804, %497, %cst_159 {dimension_numbers = #tpu.dot_dimension_numbers<[1], [0], [0], [1], [0, 0, 1, 1], [], []>} : vector<2x64xf32>, vector<64x256xf32>, vector<2x256xf32> -> vector<2x256xf32>
    %806 = vector.extract_strided_slice %805 {offsets = [0, 0], sizes = [2, 128], strides = [1, 1]} : vector<2x256xf32> to vector<2x128xf32>
    %807 = arith.addf %802, %806 : vector<2x128xf32>
    %808 = vector.extract_strided_slice %807 {offsets = [0, 0], sizes = [2, 32], strides = [1, 1]} : vector<2x128xf32> to vector<2x32xf32>
    %809 = arith.negf %808 : vector<2x32xf32>
    %810 = math.exp %809 : vector<2x32xf32>
    %cst_160 = arith.constant 1.000000e+00 : f32
    %811 = vector.broadcast %cst_160 : f32 to vector<2x32xf32>
    %812 = arith.addf %811, %810 : vector<2x32xf32>
    %813 = arith.divf %811, %812 : vector<2x32xf32>
    %814 = vector.extract_strided_slice %807 {offsets = [0, 32], sizes = [2, 32], strides = [1, 1]} : vector<2x128xf32> to vector<2x32xf32>
    %815 = arith.negf %814 : vector<2x32xf32>
    %816 = math.exp %815 : vector<2x32xf32>
    %cst_161 = arith.constant 1.000000e+00 : f32
    %817 = vector.broadcast %cst_161 : f32 to vector<2x32xf32>
    %818 = arith.addf %817, %816 : vector<2x32xf32>
    %819 = arith.divf %817, %818 : vector<2x32xf32>
    %820 = vector.extract_strided_slice %807 {offsets = [0, 64], sizes = [2, 32], strides = [1, 1]} : vector<2x128xf32> to vector<2x32xf32>
    %821 = math.tanh %820 : vector<2x32xf32>
    %822 = vector.extract_strided_slice %807 {offsets = [0, 96], sizes = [2, 32], strides = [1, 1]} : vector<2x128xf32> to vector<2x32xf32>
    %823 = arith.negf %822 : vector<2x32xf32>
    %824 = math.exp %823 : vector<2x32xf32>
    %cst_162 = arith.constant 1.000000e+00 : f32
    %825 = vector.broadcast %cst_162 : f32 to vector<2x32xf32>
    %826 = arith.addf %825, %824 : vector<2x32xf32>
    %827 = arith.divf %825, %826 : vector<2x32xf32>
    %828 = arith.mulf %819, %770 : vector<2x32xf32>
    %829 = arith.mulf %813, %821 : vector<2x32xf32>
    %830 = arith.addf %828, %829 : vector<2x32xf32>
    %831 = math.tanh %830 : vector<2x32xf32>
    %832 = arith.mulf %827, %831 : vector<2x32xf32>
    %833 = vector.extract_strided_slice %805 {offsets = [0, 128], sizes = [2, 128], strides = [1, 1]} : vector<2x256xf32> to vector<2x128xf32>
    %834 = arith.addf %803, %833 : vector<2x128xf32>
    %835 = vector.extract_strided_slice %834 {offsets = [0, 0], sizes = [2, 32], strides = [1, 1]} : vector<2x128xf32> to vector<2x32xf32>
    %836 = arith.negf %835 : vector<2x32xf32>
    %837 = math.exp %836 : vector<2x32xf32>
    %cst_163 = arith.constant 1.000000e+00 : f32
    %838 = vector.broadcast %cst_163 : f32 to vector<2x32xf32>
    %839 = arith.addf %838, %837 : vector<2x32xf32>
    %840 = arith.divf %838, %839 : vector<2x32xf32>
    %841 = vector.extract_strided_slice %834 {offsets = [0, 32], sizes = [2, 32], strides = [1, 1]} : vector<2x128xf32> to vector<2x32xf32>
    %842 = arith.negf %841 : vector<2x32xf32>
    %843 = math.exp %842 : vector<2x32xf32>
    %cst_164 = arith.constant 1.000000e+00 : f32
    %844 = vector.broadcast %cst_164 : f32 to vector<2x32xf32>
    %845 = arith.addf %844, %843 : vector<2x32xf32>
    %846 = arith.divf %844, %845 : vector<2x32xf32>
    %847 = vector.extract_strided_slice %834 {offsets = [0, 64], sizes = [2, 32], strides = [1, 1]} : vector<2x128xf32> to vector<2x32xf32>
    %848 = math.tanh %847 : vector<2x32xf32>
    %849 = vector.extract_strided_slice %834 {offsets = [0, 96], sizes = [2, 32], strides = [1, 1]} : vector<2x128xf32> to vector<2x32xf32>
    %850 = arith.negf %849 : vector<2x32xf32>
    %851 = math.exp %850 : vector<2x32xf32>
    %cst_165 = arith.constant 1.000000e+00 : f32
    %852 = vector.broadcast %cst_165 : f32 to vector<2x32xf32>
    %853 = arith.addf %852, %851 : vector<2x32xf32>
    %854 = arith.divf %852, %853 : vector<2x32xf32>
    %855 = arith.mulf %846, %797 : vector<2x32xf32>
    %856 = arith.mulf %840, %848 : vector<2x32xf32>
    %857 = arith.addf %855, %856 : vector<2x32xf32>
    %858 = math.tanh %857 : vector<2x32xf32>
    %859 = arith.mulf %854, %858 : vector<2x32xf32>
    %c10_166 = arith.constant 10 : index
    %c0_167 = arith.constant 0 : index
    %860 = vector.load %arg13[%c10_166, %c0_167] : memref<16x64xf32, #tpu.memory_space<vmem>>, vector<2x32xf32>
    tpu.vector_store %arg13[%c10_166, %c0_167], %832 {strides = array<i32>} : memref<16x64xf32, #tpu.memory_space<vmem>>, vector<2x32xf32>,
    %c4_168 = arith.constant 4 : index
    %c32_169 = arith.constant 32 : index
    %861 = vector.load %arg13[%c4_168, %c32_169] : memref<16x64xf32, #tpu.memory_space<vmem>>, vector<2x32xf32>
    tpu.vector_store %arg13[%c4_168, %c32_169], %859 {strides = array<i32>} : memref<16x64xf32, #tpu.memory_space<vmem>>, vector<2x32xf32>,
    %862 = vector.extract_strided_slice %496 {offsets = [12, 0], sizes = [2, 128], strides = [1, 1]} : vector<16x256xf32> to vector<2x128xf32>
    %863 = vector.extract_strided_slice %496 {offsets = [2, 128], sizes = [2, 128], strides = [1, 1]} : vector<16x256xf32> to vector<2x128xf32>
    %864 = tpu.concatenate %832, %859 in 1 : vector<2x32xf32>, vector<2x32xf32> -> vector<2x64xf32>
    %cst_170 = arith.constant dense<0.000000e+00> : vector<2x256xf32>
    %865 = tpu.matmul %864, %497, %cst_170 {dimension_numbers = #tpu.dot_dimension_numbers<[1], [0], [0], [1], [0, 0, 1, 1], [], []>} : vector<2x64xf32>, vector<64x256xf32>, vector<2x256xf32> -> vector<2x256xf32>
    %866 = vector.extract_strided_slice %865 {offsets = [0, 0], sizes = [2, 128], strides = [1, 1]} : vector<2x256xf32> to vector<2x128xf32>
    %867 = arith.addf %862, %866 : vector<2x128xf32>
    %868 = vector.extract_strided_slice %867 {offsets = [0, 0], sizes = [2, 32], strides = [1, 1]} : vector<2x128xf32> to vector<2x32xf32>
    %869 = arith.negf %868 : vector<2x32xf32>
    %870 = math.exp %869 : vector<2x32xf32>
    %cst_171 = arith.constant 1.000000e+00 : f32
    %871 = vector.broadcast %cst_171 : f32 to vector<2x32xf32>
    %872 = arith.addf %871, %870 : vector<2x32xf32>
    %873 = arith.divf %871, %872 : vector<2x32xf32>
    %874 = vector.extract_strided_slice %867 {offsets = [0, 32], sizes = [2, 32], strides = [1, 1]} : vector<2x128xf32> to vector<2x32xf32>
    %875 = arith.negf %874 : vector<2x32xf32>
    %876 = math.exp %875 : vector<2x32xf32>
    %cst_172 = arith.constant 1.000000e+00 : f32
    %877 = vector.broadcast %cst_172 : f32 to vector<2x32xf32>
    %878 = arith.addf %877, %876 : vector<2x32xf32>
    %879 = arith.divf %877, %878 : vector<2x32xf32>
    %880 = vector.extract_strided_slice %867 {offsets = [0, 64], sizes = [2, 32], strides = [1, 1]} : vector<2x128xf32> to vector<2x32xf32>
    %881 = math.tanh %880 : vector<2x32xf32>
    %882 = vector.extract_strided_slice %867 {offsets = [0, 96], sizes = [2, 32], strides = [1, 1]} : vector<2x128xf32> to vector<2x32xf32>
    %883 = arith.negf %882 : vector<2x32xf32>
    %884 = math.exp %883 : vector<2x32xf32>
    %cst_173 = arith.constant 1.000000e+00 : f32
    %885 = vector.broadcast %cst_173 : f32 to vector<2x32xf32>
    %886 = arith.addf %885, %884 : vector<2x32xf32>
    %887 = arith.divf %885, %886 : vector<2x32xf32>
    %888 = arith.mulf %879, %830 : vector<2x32xf32>
    %889 = arith.mulf %873, %881 : vector<2x32xf32>
    %890 = arith.addf %888, %889 : vector<2x32xf32>
    %891 = math.tanh %890 : vector<2x32xf32>
    %892 = arith.mulf %887, %891 : vector<2x32xf32>
    %893 = vector.extract_strided_slice %865 {offsets = [0, 128], sizes = [2, 128], strides = [1, 1]} : vector<2x256xf32> to vector<2x128xf32>
    %894 = arith.addf %863, %893 : vector<2x128xf32>
    %895 = vector.extract_strided_slice %894 {offsets = [0, 0], sizes = [2, 32], strides = [1, 1]} : vector<2x128xf32> to vector<2x32xf32>
    %896 = arith.negf %895 : vector<2x32xf32>
    %897 = math.exp %896 : vector<2x32xf32>
    %cst_174 = arith.constant 1.000000e+00 : f32
    %898 = vector.broadcast %cst_174 : f32 to vector<2x32xf32>
    %899 = arith.addf %898, %897 : vector<2x32xf32>
    %900 = arith.divf %898, %899 : vector<2x32xf32>
    %901 = vector.extract_strided_slice %894 {offsets = [0, 32], sizes = [2, 32], strides = [1, 1]} : vector<2x128xf32> to vector<2x32xf32>
    %902 = arith.negf %901 : vector<2x32xf32>
    %903 = math.exp %902 : vector<2x32xf32>
    %cst_175 = arith.constant 1.000000e+00 : f32
    %904 = vector.broadcast %cst_175 : f32 to vector<2x32xf32>
    %905 = arith.addf %904, %903 : vector<2x32xf32>
    %906 = arith.divf %904, %905 : vector<2x32xf32>
    %907 = vector.extract_strided_slice %894 {offsets = [0, 64], sizes = [2, 32], strides = [1, 1]} : vector<2x128xf32> to vector<2x32xf32>
    %908 = math.tanh %907 : vector<2x32xf32>
    %909 = vector.extract_strided_slice %894 {offsets = [0, 96], sizes = [2, 32], strides = [1, 1]} : vector<2x128xf32> to vector<2x32xf32>
    %910 = arith.negf %909 : vector<2x32xf32>
    %911 = math.exp %910 : vector<2x32xf32>
    %cst_176 = arith.constant 1.000000e+00 : f32
    %912 = vector.broadcast %cst_176 : f32 to vector<2x32xf32>
    %913 = arith.addf %912, %911 : vector<2x32xf32>
    %914 = arith.divf %912, %913 : vector<2x32xf32>
    %915 = arith.mulf %906, %857 : vector<2x32xf32>
    %916 = arith.mulf %900, %908 : vector<2x32xf32>
    %917 = arith.addf %915, %916 : vector<2x32xf32>
    %918 = math.tanh %917 : vector<2x32xf32>
    %919 = arith.mulf %914, %918 : vector<2x32xf32>
    %c12_177 = arith.constant 12 : index
    %c0_178 = arith.constant 0 : index
    %920 = vector.load %arg13[%c12_177, %c0_178] : memref<16x64xf32, #tpu.memory_space<vmem>>, vector<2x32xf32>
    tpu.vector_store %arg13[%c12_177, %c0_178], %892 {strides = array<i32>} : memref<16x64xf32, #tpu.memory_space<vmem>>, vector<2x32xf32>,
    %c2_179 = arith.constant 2 : index
    %c32_180 = arith.constant 32 : index
    %921 = vector.load %arg13[%c2_179, %c32_180] : memref<16x64xf32, #tpu.memory_space<vmem>>, vector<2x32xf32>
    tpu.vector_store %arg13[%c2_179, %c32_180], %919 {strides = array<i32>} : memref<16x64xf32, #tpu.memory_space<vmem>>, vector<2x32xf32>,
    %922 = vector.extract_strided_slice %496 {offsets = [14, 0], sizes = [2, 128], strides = [1, 1]} : vector<16x256xf32> to vector<2x128xf32>
    %923 = vector.extract_strided_slice %496 {offsets = [0, 128], sizes = [2, 128], strides = [1, 1]} : vector<16x256xf32> to vector<2x128xf32>
    %924 = tpu.concatenate %892, %919 in 1 : vector<2x32xf32>, vector<2x32xf32> -> vector<2x64xf32>
    %cst_181 = arith.constant dense<0.000000e+00> : vector<2x256xf32>
    %925 = tpu.matmul %924, %497, %cst_181 {dimension_numbers = #tpu.dot_dimension_numbers<[1], [0], [0], [1], [0, 0, 1, 1], [], []>} : vector<2x64xf32>, vector<64x256xf32>, vector<2x256xf32> -> vector<2x256xf32>
    %926 = vector.extract_strided_slice %925 {offsets = [0, 0], sizes = [2, 128], strides = [1, 1]} : vector<2x256xf32> to vector<2x128xf32>
    %927 = arith.addf %922, %926 : vector<2x128xf32>
    %928 = vector.extract_strided_slice %927 {offsets = [0, 0], sizes = [2, 32], strides = [1, 1]} : vector<2x128xf32> to vector<2x32xf32>
    %929 = arith.negf %928 : vector<2x32xf32>
    %930 = math.exp %929 : vector<2x32xf32>
    %cst_182 = arith.constant 1.000000e+00 : f32
    %931 = vector.broadcast %cst_182 : f32 to vector<2x32xf32>
    %932 = arith.addf %931, %930 : vector<2x32xf32>
    %933 = arith.divf %931, %932 : vector<2x32xf32>
    %934 = vector.extract_strided_slice %927 {offsets = [0, 32], sizes = [2, 32], strides = [1, 1]} : vector<2x128xf32> to vector<2x32xf32>
    %935 = arith.negf %934 : vector<2x32xf32>
    %936 = math.exp %935 : vector<2x32xf32>
    %cst_183 = arith.constant 1.000000e+00 : f32
    %937 = vector.broadcast %cst_183 : f32 to vector<2x32xf32>
    %938 = arith.addf %937, %936 : vector<2x32xf32>
    %939 = arith.divf %937, %938 : vector<2x32xf32>
    %940 = vector.extract_strided_slice %927 {offsets = [0, 64], sizes = [2, 32], strides = [1, 1]} : vector<2x128xf32> to vector<2x32xf32>
    %941 = math.tanh %940 : vector<2x32xf32>
    %942 = vector.extract_strided_slice %927 {offsets = [0, 96], sizes = [2, 32], strides = [1, 1]} : vector<2x128xf32> to vector<2x32xf32>
    %943 = arith.negf %942 : vector<2x32xf32>
    %944 = math.exp %943 : vector<2x32xf32>
    %cst_184 = arith.constant 1.000000e+00 : f32
    %945 = vector.broadcast %cst_184 : f32 to vector<2x32xf32>
    %946 = arith.addf %945, %944 : vector<2x32xf32>
    %947 = arith.divf %945, %946 : vector<2x32xf32>
    %948 = arith.mulf %939, %890 : vector<2x32xf32>
    %949 = arith.mulf %933, %941 : vector<2x32xf32>
    %950 = arith.addf %948, %949 : vector<2x32xf32>
    %951 = math.tanh %950 : vector<2x32xf32>
    %952 = arith.mulf %947, %951 : vector<2x32xf32>
    %953 = vector.extract_strided_slice %925 {offsets = [0, 128], sizes = [2, 128], strides = [1, 1]} : vector<2x256xf32> to vector<2x128xf32>
    %954 = arith.addf %923, %953 : vector<2x128xf32>
    %955 = vector.extract_strided_slice %954 {offsets = [0, 0], sizes = [2, 32], strides = [1, 1]} : vector<2x128xf32> to vector<2x32xf32>
    %956 = arith.negf %955 : vector<2x32xf32>
    %957 = math.exp %956 : vector<2x32xf32>
    %cst_185 = arith.constant 1.000000e+00 : f32
    %958 = vector.broadcast %cst_185 : f32 to vector<2x32xf32>
    %959 = arith.addf %958, %957 : vector<2x32xf32>
    %960 = arith.divf %958, %959 : vector<2x32xf32>
    %961 = vector.extract_strided_slice %954 {offsets = [0, 32], sizes = [2, 32], strides = [1, 1]} : vector<2x128xf32> to vector<2x32xf32>
    %962 = arith.negf %961 : vector<2x32xf32>
    %963 = math.exp %962 : vector<2x32xf32>
    %cst_186 = arith.constant 1.000000e+00 : f32
    %964 = vector.broadcast %cst_186 : f32 to vector<2x32xf32>
    %965 = arith.addf %964, %963 : vector<2x32xf32>
    %966 = arith.divf %964, %965 : vector<2x32xf32>
    %967 = vector.extract_strided_slice %954 {offsets = [0, 64], sizes = [2, 32], strides = [1, 1]} : vector<2x128xf32> to vector<2x32xf32>
    %968 = math.tanh %967 : vector<2x32xf32>
    %969 = vector.extract_strided_slice %954 {offsets = [0, 96], sizes = [2, 32], strides = [1, 1]} : vector<2x128xf32> to vector<2x32xf32>
    %970 = arith.negf %969 : vector<2x32xf32>
    %971 = math.exp %970 : vector<2x32xf32>
    %cst_187 = arith.constant 1.000000e+00 : f32
    %972 = vector.broadcast %cst_187 : f32 to vector<2x32xf32>
    %973 = arith.addf %972, %971 : vector<2x32xf32>
    %974 = arith.divf %972, %973 : vector<2x32xf32>
    %975 = arith.mulf %966, %917 : vector<2x32xf32>
    %976 = arith.mulf %960, %968 : vector<2x32xf32>
    %977 = arith.addf %975, %976 : vector<2x32xf32>
    %978 = math.tanh %977 : vector<2x32xf32>
    %979 = arith.mulf %974, %978 : vector<2x32xf32>
    %c14_188 = arith.constant 14 : index
    %c0_189 = arith.constant 0 : index
    %980 = vector.load %arg13[%c14_188, %c0_189] : memref<16x64xf32, #tpu.memory_space<vmem>>, vector<2x32xf32>
    tpu.vector_store %arg13[%c14_188, %c0_189], %952 {strides = array<i32>} : memref<16x64xf32, #tpu.memory_space<vmem>>, vector<2x32xf32>,
    %c0_190 = arith.constant 0 : index
    %c32_191 = arith.constant 32 : index
    %981 = vector.load %arg13[%c0_190, %c32_191] : memref<16x64xf32, #tpu.memory_space<vmem>>, vector<2x32xf32>
    tpu.vector_store %arg13[%c0_190, %c32_191], %979 {strides = array<i32>} : memref<16x64xf32, #tpu.memory_space<vmem>>, vector<2x32xf32>,
    %c14_192 = arith.constant 14 : index
    %c0_193 = arith.constant 0 : index
    %982 = vector.load %arg13[%c14_192, %c0_193] : memref<16x64xf32, #tpu.memory_space<vmem>>, vector<2x64xf32>
    %c0_194 = arith.constant 0 : index
    %c0_195 = arith.constant 0 : index
    %983 = vector.load %arg7[%c0_194, %c0_195] : memref<64x32xf32, #tpu.memory_space<vmem>>, vector<64x32xf32>
    %cst_196 = arith.constant dense<0.000000e+00> : vector<2x32xf32>
    %984 = tpu.matmul %982, %983, %cst_196 {dimension_numbers = #tpu.dot_dimension_numbers<[1], [0], [0], [1], [0, 0, 1, 1], [], []>} : vector<2x64xf32>, vector<64x32xf32>, vector<2x32xf32> -> vector<2x32xf32>
    %c0_197 = arith.constant 0 : index
    %c0_198 = arith.constant 0 : index
    %985 = vector.load %arg8[%c0_197, %c0_198] : memref<1x32xf32, #tpu.memory_space<vmem>>, vector<1x32xf32>
    %986 = vector.broadcast %985 : vector<1x32xf32> to vector<2x32xf32>
    %987 = arith.addf %984, %986 : vector<2x32xf32>
    %cst_199 = arith.constant 0.000000e+00 : f32
    %988 = vector.broadcast %cst_199 : f32 to vector<2x32xf32>
    %989 = arith.maximumf %987, %988 : vector<2x32xf32>
    %c0_200 = arith.constant 0 : index
    %c0_201 = arith.constant 0 : index
    %990 = vector.load %arg9[%c0_200, %c0_201] : memref<32x50xf32, #tpu.memory_space<vmem>>, vector<32x50xf32>
    %cst_202 = arith.constant dense<0.000000e+00> : vector<2x50xf32>
    %991 = tpu.matmul %989, %990, %cst_202 {dimension_numbers = #tpu.dot_dimension_numbers<[1], [0], [0], [1], [0, 0, 1, 1], [], []>} : vector<2x32xf32>, vector<32x50xf32>, vector<2x50xf32> -> vector<2x50xf32>
    %c0_203 = arith.constant 0 : index
    %c0_204 = arith.constant 0 : index
    %992 = vector.load %arg10[%c0_203, %c0_204] : memref<1x50xf32, #tpu.memory_space<vmem>>, vector<1x50xf32>
    %993 = vector.broadcast %992 : vector<1x50xf32> to vector<2x50xf32>
    %994 = arith.addf %991, %993 : vector<2x50xf32>
    %c0_205 = arith.constant 0 : index
    %c0_206 = arith.constant 0 : index
    %995 = vector.load %arg11[%c0_205, %c0_206] : memref<2x50xf32, #tpu.memory_space<vmem>>, vector<2x50xf32>
    tpu.vector_store %arg11[%c0_205, %c0_206], %994 {strides = array<i32>} : memref<2x50xf32, #tpu.memory_space<vmem>>, vector<2x50xf32>,
    return
  }
}

</mosaic_0001>

<llo_original>
// kernel: lstm_predictor_forward.1
$region0: #{lstm_predictor_forward.1}
  #allocation0 [shape = 'u32[]', space=smem, size = 0x4, offset = 0x4, fixed_abs, tag = 'smem constant byte address 0x4 - core index']
  #allocation1 [shape = 'u32[144,128]{1,0:T(1,128)}', space=vmem, size = 0x12000, scoped, tag = 'internal scratch']
  #allocation2 [shape = 'f32[16,64]{1,0:T(8,128)}', space=vmem, size = 0x2000, scoped, tag = 'scratch operand']
  #allocation3 [shape = 'f32[16,64]{1,0:T(8,128)}', space=vmem, size = 0x2000, scoped, tag = 'scratch operand']
  %s0 = inlined_call_operand.vmem [shape: f32[16,16], index: 0, kind: input, shape index: {}]
  %s1 = inlined_call_operand.vmem [shape: f32[16,256], index: 1, kind: input, shape index: {}]
  %s2 = inlined_call_operand.vmem [shape: f32[1,256], index: 2, kind: input, shape index: {}]
  %s3 = inlined_call_operand.vmem [shape: f32[64,256], index: 3, kind: input, shape index: {}]
  %s4 = inlined_call_operand.hbm [shape: f32[64,256], index: 4, kind: input, shape index: {}]
  %s5 = inlined_call_operand.vmem [shape: f32[1,256], index: 5, kind: input, shape index: {}]
  %s6 = inlined_call_operand.hbm [shape: f32[64,256], index: 6, kind: input, shape index: {}]
  %s7 = inlined_call_operand.vmem [shape: f32[64,32], index: 7, kind: input, shape index: {}]
  %s8 = inlined_call_operand.hbm [shape: f32[1,32], index: 8, kind: input, shape index: {}]
  %s9 = inlined_call_operand.hbm [shape: f32[32,50], index: 9, kind: input, shape index: {}]
  %s10 = inlined_call_operand.hbm [shape: f32[1,50], index: 10, kind: input, shape index: {}]
  %s11 = inlined_call_operand.hbm [shape: f32[2,50], index: 11, kind: output, shape index: {}]
  %s12 = sld [smem:[#allocation0]]
  $region74: #{lstm_predictor_forward.1} parent=0
    _
  %s14 = ssub.s32 1, %s12
  %s15 = scalar_select 0, %s14, %s12
  $region1: #{lstm_predictor_forward.1} parent=0
    #allocation4 [shape = 'u8[65536]{0}', space=vmem, size = 0x10000, scoped, tag = 'input window, operand 4, single buffered']
    #allocation5 [shape = 's32[1]{0}', space=sflag, size = 0x4, scoped, tag = 'scoped memory for lstm_predictor_forward.1']
    #allocation6 [shape = 's32[1]{0}', space=sflag, size = 0x4, scoped, tag = 'scoped memory for lstm_predictor_forward.1']
    #allocation7 [shape = 'u8[65536]{0}', space=vmem, size = 0x10000, scoped, tag = 'input window, operand 6, single buffered']
    #allocation8 [shape = 's32[1]{0}', space=sflag, size = 0x4, scoped, tag = 'scoped memory for lstm_predictor_forward.1']
    #allocation9 [shape = 'u8[512]{0}', space=vmem, size = 0x400, scoped, tag = 'input window, operand 8, single buffered']
    #allocation10 [shape = 'u8[16384]{0}', space=vmem, size = 0x4000, scoped, tag = 'input window, operand 9, single buffered']
    #allocation11 [shape = 's32[1]{0}', space=sflag, size = 0x4, scoped, tag = 'scoped memory for lstm_predictor_forward.1']
    #allocation12 [shape = 'u8[512]{0}', space=vmem, size = 0x400, scoped, tag = 'input window, operand 10, single buffered']
    #allocation13 [shape = 'u8[1024]{0}', space=vmem, size = 0x400, scoped, tag = 'output window, operand 0, single buffered']
    %16 = vsyncpa [#allocation5], 0
    %17 = vsyncpa [#allocation8], 0
    %18 = vsyncpa [#allocation11], 0
    %19 = vsyncpa [#allocation6], 0
    // Predicated region
    $region2: #{lstm_predictor_forward.1} parent=1 // pred_check
      _
    $region3: #{lstm_predictor_forward.1} parent=1 // pred_check_branch
      %21 = sbr.rel (0) target = $region5
    $region4: #{lstm_predictor_forward.1} parent=1 // pred_region
      _
    $region5: #{lstm_predictor_forward.1} parent=1 // pred_fallthru
      _
    // Predicated region
    $region6: #{lstm_predictor_forward.1} parent=1 // pred_check
      _
    $region7: #{lstm_predictor_forward.1} parent=1 // pred_check_branch
      %23 = sbr.rel (0) target = $region9
    $region8: #{lstm_predictor_forward.1} parent=1 // pred_region
      _
    $region9: #{lstm_predictor_forward.1} parent=1 // pred_fallthru
      _
    // Predicated region
    $region10: #{lstm_predictor_forward.1} parent=1 // pred_check
      _
    $region11: #{lstm_predictor_forward.1} parent=1 // pred_check_branch
      %25 = sbr.rel (0) target = $region13
    $region12: #{lstm_predictor_forward.1} parent=1 // pred_region
      _
    $region13: #{lstm_predictor_forward.1} parent=1 // pred_fallthru
      _
    // Predicated region
    $region14: #{lstm_predictor_forward.1} parent=1 // pred_check
      _
    $region15: #{lstm_predictor_forward.1} parent=1 // pred_check_branch
      %27 = sbr.rel (0) target = $region17
    $region16: #{lstm_predictor_forward.1} parent=1 // pred_region
      _
    $region17: #{lstm_predictor_forward.1} parent=1 // pred_fallthru
      _
    // Predicated region
    $region18: #{lstm_predictor_forward.1} parent=1 // pred_check
      _
    $region19: #{lstm_predictor_forward.1} parent=1 // pred_check_branch
      %29 = sbr.rel (0) target = $region21
    $region20: #{lstm_predictor_forward.1} parent=1 // pred_region
      %s31 = ssub.s32 2048, 2048
      %32 = vsyncadd [#allocation5], %s31
      %s33 = sshll.u32 [#allocation4], 4
      %s34 = int_to_ptr.vmem [resolvable:$true] %s33
      %39 = dma.hbm_to_vmem [thread:$0]  %s4, 2048, %s34, [#allocation5], 256, 256, 16
    $region21: #{lstm_predictor_forward.1} parent=1 // pred_fallthru
      _
    // Predicated region
    $region22: #{lstm_predictor_forward.1} parent=1 // pred_check
      _
    $region23: #{lstm_predictor_forward.1} parent=1 // pred_check_branch
      %41 = sbr.rel (0) target = $region25
    $region24: #{lstm_predictor_forward.1} parent=1 // pred_region
      _
    $region25: #{lstm_predictor_forward.1} parent=1 // pred_fallthru
      _
    // Predicated region
    $region26: #{lstm_predictor_forward.1} parent=1 // pred_check
      _
    $region27: #{lstm_predictor_forward.1} parent=1 // pred_check_branch
      %43 = sbr.rel (0) target = $region29
    $region28: #{lstm_predictor_forward.1} parent=1 // pred_region
      %s45 = ssub.s32 2048, 2048
      %46 = vsyncadd [#allocation8], %s45
      %s47 = sshll.u32 [#allocation7], 4
      %s48 = int_to_ptr.vmem [resolvable:$true] %s47
      %53 = dma.hbm_to_vmem [thread:$0]  %s6, 2048, %s48, [#allocation8], 256, 256, 16
    $region29: #{lstm_predictor_forward.1} parent=1 // pred_fallthru
      _
    // Predicated region
    $region30: #{lstm_predictor_forward.1} parent=1 // pred_check
      _
    $region31: #{lstm_predictor_forward.1} parent=1 // pred_check_branch
      %55 = sbr.rel (0) target = $region33
    $region32: #{lstm_predictor_forward.1} parent=1 // pred_region
      _
    $region33: #{lstm_predictor_forward.1} parent=1 // pred_fallthru
      _
    // Predicated region
    $region34: #{lstm_predictor_forward.1} parent=1 // pred_check
      _
    $region35: #{lstm_predictor_forward.1} parent=1 // pred_check_branch
      %57 = sbr.rel (0) target = $region37
    $region36: #{lstm_predictor_forward.1} parent=1 // pred_region
      %s59 = ssub.s32 16, 16
      %60 = vsyncadd [#allocation8], %s59
      %s62 = sshll.u32 [#allocation9], 4
      %s63 = int_to_ptr.vmem [resolvable:$true] %s62
      %65 = dma.hbm_to_vmem [thread:$0]  %s8, 16, %s63, [#allocation8]
    $region37: #{lstm_predictor_forward.1} parent=1 // pred_fallthru
      _
    // Predicated region
    $region38: #{lstm_predictor_forward.1} parent=1 // pred_check
      _
    $region39: #{lstm_predictor_forward.1} parent=1 // pred_check_branch
      %67 = sbr.rel (0) target = $region41
    $region40: #{lstm_predictor_forward.1} parent=1 // pred_region
      %s69 = ssub.s32 512, 512
      %70 = vsyncadd [#allocation11], %s69
      %s71 = sshll.u32 [#allocation10], 4
      %s72 = int_to_ptr.vmem [resolvable:$true] %s71
      %77 = dma.hbm_to_vmem [thread:$0]  %s9, 512, %s72, [#allocation11], 128, 128, 8
    $region41: #{lstm_predictor_forward.1} parent=1 // pred_fallthru
      _
    // Predicated region
    $region42: #{lstm_predictor_forward.1} parent=1 // pred_check
      _
    $region43: #{lstm_predictor_forward.1} parent=1 // pred_check_branch
      %79 = sbr.rel (0) target = $region45
    $region44: #{lstm_predictor_forward.1} parent=1 // pred_region
      %s81 = ssub.s32 16, 16
      %82 = vsyncadd [#allocation11], %s81
      %s84 = sshll.u32 [#allocation12], 4
      %s85 = int_to_ptr.vmem [resolvable:$true] %s84
      %87 = dma.hbm_to_vmem [thread:$0]  %s10, 16, %s85, [#allocation11]
    $region45: #{lstm_predictor_forward.1} parent=1 // pred_fallthru
      _
    // Predicated region
    $region46: #{lstm_predictor_forward.1} parent=1 // pred_check
      _
    $region47: #{lstm_predictor_forward.1} parent=1 // pred_check_branch
      %89 = sbr.rel (0) target = $region49
    $region48: #{lstm_predictor_forward.1} parent=1 // pred_region
      %90 = dma.done [#allocation5], 2048
    $region49: #{lstm_predictor_forward.1} parent=1 // pred_fallthru
      _
    // Predicated region
    $region50: #{lstm_predictor_forward.1} parent=1 // pred_check
      _
    $region51: #{lstm_predictor_forward.1} parent=1 // pred_check_branch
      %92 = sbr.rel (0) target = $region53
    $region52: #{lstm_predictor_forward.1} parent=1 // pred_region
      %93 = dma.done [#allocation8], 2048
    $region53: #{lstm_predictor_forward.1} parent=1 // pred_fallthru
      _
    // Predicated region
    $region54: #{lstm_predictor_forward.1} parent=1 // pred_check
      _
    $region55: #{lstm_predictor_forward.1} parent=1 // pred_check_branch
      %95 = sbr.rel (0) target = $region57
    $region56: #{lstm_predictor_forward.1} parent=1 // pred_region
      %96 = dma.done [#allocation8], 16
    $region57: #{lstm_predictor_forward.1} parent=1 // pred_fallthru
      _
    // Predicated region
    $region58: #{lstm_predictor_forward.1} parent=1 // pred_check
      _
    $region59: #{lstm_predictor_forward.1} parent=1 // pred_check_branch
      %98 = sbr.rel (0) target = $region61
    $region60: #{lstm_predictor_forward.1} parent=1 // pred_region
      %99 = dma.done [#allocation11], 512
    $region61: #{lstm_predictor_forward.1} parent=1 // pred_fallthru
      _
    // Predicated region
    $region62: #{lstm_predictor_forward.1} parent=1 // pred_check
      _
    $region63: #{lstm_predictor_forward.1} parent=1 // pred_check_branch
      %101 = sbr.rel (0) target = $region65
    $region64: #{lstm_predictor_forward.1} parent=1 // pred_region
      %102 = dma.done [#allocation11], 16
    $region65: #{lstm_predictor_forward.1} parent=1 // pred_fallthru
      _
    %v103 = vld [vmem:[%s0] sm:$0xff]
    %v104 = vld [vmem:[%s0 + $0x8] sm:$0xff]
    %v105 = vld [vmem:[%s1] sm:$0xff]
    %v106 = vld [vmem:[%s1 + $0x8] sm:$0xff]
    %v107 = vld [vmem:[%s1 + $0x10] sm:$0xff]
    %v108 = vld [vmem:[%s1 + $0x18] sm:$0xff]
    %v109 = vld [vmem:[%s2] sm:$0x3]
    %v111 = vlaneseq
    %v112 = vshrl.u32 %v111, 7
    %v113 = vsub.s32 0, %v112
    %v114 = vrot.slane %v109, %v113
    %v115 = vlaneseq
    %v116 = vshrl.u32 %v115, 7
    %v117 = vsub.s32 1, %v116
    %v118 = vrot.slane %v109, %v117
    %vm121 = vcmask 130048
    %v123 = vsel %vm121, %v103, 0
    %v126 = vsel %vm121, %v104, 0
    %128 = vmatprep.subr.mxu0 %v106
    %129 = vmatpush1.msra.mxu0 %v105
    %130 = vmatprep.subr.mxu0 %v108
    %131 = vmatpush1.msra.mxu0 %v107
    %132 = vmatprep.subr.mxu0 0.0
    %133 = vmatpush1.msra.mxu0 0.0
    %134 = vmatprep.subr.mxu0 0.0
    %135 = vmatpush1.msra.mxu0 0.0
    %136 = vmatprep.subr.mxu0 0.0
    %137 = vmatpush1.msra.mxu0 0.0
    %138 = vmatprep.subr.mxu0 0.0
    %139 = vmatpush1.msra.mxu0 0.0
    %140 = vmatprep.subr.mxu0 0.0
    %141 = vmatpush1.msra.mxu0 0.0
    %142 = vmatprep.subr.mxu0 0.0
    %143 = vmatpush1.msra.mxu0 0.0
    %144 = vmatprep.subr.mxu0 0.0
    %145 = vmatpush1.msra.mxu0 0.0
    %146 = vmatprep.subr.mxu0 0.0
    %147 = vmatpush1.msra.mxu0 0.0
    %148 = vmatprep.subr.mxu0 0.0
    %149 = vmatpush1.msra.mxu0 0.0
    %150 = vmatprep.subr.mxu0 0.0
    %151 = vmatpush1.msra.mxu0 0.0
    %152 = vmatprep.subr.mxu0 0.0
    %153 = vmatpush1.msra.mxu0 0.0
    %154 = vmatprep.subr.mxu0 0.0
    %155 = vmatpush1.msra.mxu0 0.0
    %156 = vmatprep.subr.mxu0 0.0
    %157 = vmatpush1.msra.mxu0 0.0
    %158 = vmatprep.subr.mxu0 0.0
    %159 = vmatpush1.msra.mxu0 0.0
    %160 = vmatprep.subr.mxu0 0.0
    %161 = vmatpush1.msra.mxu0 0.0
    %162 = vmatprep.subr.mxu0 0.0
    %163 = vmatpush1.msra.mxu0 0.0
    %164 = vmatprep.subr.mxu0 0.0
    %165 = vmatpush1.msra.mxu0 0.0
    %166 = vmatprep.subr.mxu0 0.0
    %167 = vmatpush1.msra.mxu0 0.0
    %168 = vmatprep.subr.mxu0 0.0
    %169 = vmatpush1.msra.mxu0 0.0
    %170 = vmatprep.subr.mxu0 0.0
    %171 = vmatpush1.msra.mxu0 0.0
    %172 = vmatprep.subr.mxu0 0.0
    %173 = vmatpush1.msra.mxu0 0.0
    %174 = vmatprep.subr.mxu0 0.0
    %175 = vmatpush1.msra.mxu0 0.0
    %176 = vmatprep.subr.mxu0 0.0
    %177 = vmatpush1.msra.mxu0 0.0
    %178 = vmatprep.subr.mxu0 0.0
    %179 = vmatpush1.msra.mxu0 0.0
    %180 = vmatprep.subr.mxu0 0.0
    %181 = vmatpush1.msra.mxu0 0.0
    %182 = vmatprep.subr.mxu0 0.0
    %183 = vmatpush1.msra.mxu0 0.0
    %184 = vmatprep.subr.mxu0 0.0
    %185 = vmatpush1.msra.mxu0 0.0
    %186 = vmatprep.subr.mxu0 0.0
    %187 = vmatpush1.msra.mxu0 0.0
    %188 = vmatprep.subr.mxu0 0.0
    %189 = vmatpush1.msra.mxu0 0.0
    %190 = vmatprep.subr.mxu0 0.0
    %191 = vmatpush1.msra.mxu0 0.0
    %192 = vmatprep.mubr.f32.mxu0 0.0
    %193 = vmatmul.mubr.f32.gmra.mrb[0].mxu0 %v123
    %v194 = vpop.f32.mrb[0].mxu0
    %v195 = vadd.f32 %v114, %v194
    %v196 = vpop.f32.mrb[0].mxu0
    %v197 = vadd.f32 %v118, %v196
    %198 = vmatprep.mubr.f32.mxu0 0.0
    %199 = vmatmul.mubr.f32.gmra.mrb[0].mxu0 %v126
    %v200 = vpop.f32.mrb[0].mxu0
    %v201 = vadd.f32 %v114, %v200
    %v202 = vpop.f32.mrb[0].mxu0
    %v203 = vadd.f32 %v118, %v202
    %204 = vdwg.mxu0
    %v205 = vld [vmem:[%s3] sm:$0xff]
    %v206 = vld [vmem:[%s3 + $0x8] sm:$0xff]
    %v207 = vld [vmem:[%s3 + $0x10] sm:$0xff]
    %v208 = vld [vmem:[%s3 + $0x18] sm:$0xff]
    %v209 = vld [vmem:[%s3 + $0x20] sm:$0xff]
    %v210 = vld [vmem:[%s3 + $0x28] sm:$0xff]
    %v211 = vld [vmem:[%s3 + $0x30] sm:$0xff]
    %v212 = vld [vmem:[%s3 + $0x38] sm:$0xff]
    %v213 = vld [vmem:[%s3 + $0x40] sm:$0xff]
    %v214 = vld [vmem:[%s3 + $0x48] sm:$0xff]
    %v215 = vld [vmem:[%s3 + $0x50] sm:$0xff]
    %v216 = vld [vmem:[%s3 + $0x58] sm:$0xff]
    %v217 = vld [vmem:[%s3 + $0x60] sm:$0xff]
    %v218 = vld [vmem:[%s3 + $0x68] sm:$0xff]
    %v219 = vld [vmem:[%s3 + $0x70] sm:$0xff]
    %v220 = vld [vmem:[%s3 + $0x78] sm:$0xff]
    %vm221 = vcmask 523264
    %v223 = vsel %vm221, 0.0, 0
    %225 = vmatprep.subr.mxu0 %v206
    %226 = vmatpush1.msra.mxu0 %v205
    %227 = vmatprep.subr.mxu0 %v208
    %228 = vmatpush1.msra.mxu0 %v207
    %229 = vmatprep.subr.mxu0 %v210
    %230 = vmatpush1.msra.mxu0 %v209
    %231 = vmatprep.subr.mxu0 %v212
    %232 = vmatpush1.msra.mxu0 %v211
    %233 = vmatprep.subr.mxu0 %v214
    %234 = vmatpush1.msra.mxu0 %v213
    %235 = vmatprep.subr.mxu0 %v216
    %236 = vmatpush1.msra.mxu0 %v215
    %237 = vmatprep.subr.mxu0 %v218
    %238 = vmatpush1.msra.mxu0 %v217
    %239 = vmatprep.subr.mxu0 %v220
    %240 = vmatpush1.msra.mxu0 %v219
    %241 = vmatprep.subr.mxu0 0.0
    %242 = vmatpush1.msra.mxu0 0.0
    %243 = vmatprep.subr.mxu0 0.0
    %244 = vmatpush1.msra.mxu0 0.0
    %245 = vmatprep.subr.mxu0 0.0
    %246 = vmatpush1.msra.mxu0 0.0
    %247 = vmatprep.subr.mxu0 0.0
    %248 = vmatpush1.msra.mxu0 0.0
    %249 = vmatprep.subr.mxu0 0.0
    %250 = vmatpush1.msra.mxu0 0.0
    %251 = vmatprep.subr.mxu0 0.0
    %252 = vmatpush1.msra.mxu0 0.0
    %253 = vmatprep.subr.mxu0 0.0
    %254 = vmatpush1.msra.mxu0 0.0
    %255 = vmatprep.subr.mxu0 0.0
    %256 = vmatpush1.msra.mxu0 0.0
    %257 = vmatprep.subr.mxu0 0.0
    %258 = vmatpush1.msra.mxu0 0.0
    %259 = vmatprep.subr.mxu0 0.0
    %260 = vmatpush1.msra.mxu0 0.0
    %261 = vmatprep.subr.mxu0 0.0
    %262 = vmatpush1.msra.mxu0 0.0
    %263 = vmatprep.subr.mxu0 0.0
    %264 = vmatpush1.msra.mxu0 0.0
    %265 = vmatprep.subr.mxu0 0.0
    %266 = vmatpush1.msra.mxu0 0.0
    %267 = vmatprep.subr.mxu0 0.0
    %268 = vmatpush1.msra.mxu0 0.0
    %269 = vmatprep.subr.mxu0 0.0
    %270 = vmatpush1.msra.mxu0 0.0
    %271 = vmatprep.subr.mxu0 0.0
    %272 = vmatpush1.msra.mxu0 0.0
    %273 = vmatprep.subr.mxu0 0.0
    %274 = vmatpush1.msra.mxu0 0.0
    %275 = vmatprep.subr.mxu0 0.0
    %276 = vmatpush1.msra.mxu0 0.0
    %277 = vmatprep.subr.mxu0 0.0
    %278 = vmatpush1.msra.mxu0 0.0
    %279 = vmatprep.subr.mxu0 0.0
    %280 = vmatpush1.msra.mxu0 0.0
    %281 = vmatprep.subr.mxu0 0.0
    %282 = vmatpush1.msra.mxu0 0.0
    %283 = vmatprep.subr.mxu0 0.0
    %284 = vmatpush1.msra.mxu0 0.0
    %285 = vmatprep.subr.mxu0 0.0
    %286 = vmatpush1.msra.mxu0 0.0
    %287 = vmatprep.subr.mxu0 0.0
    %288 = vmatpush1.msra.mxu0 0.0
    %289 = vmatprep.mubr.f32.mxu0 0.0
    %290 = vmatmul.mubr.f32.gmra.mrb[0].mxu0 %v223
    %v291 = vpop.f32.mrb[0].mxu0
    %v292 = vadd.f32 0.0, %v291
    %v293 = vpop.f32.mrb[0].mxu0
    %v294 = vadd.f32 0.0, %v293
    %295 = vdwg.mxu0
    %v296 = vadd.f32 %v195, %v292
    %v297 = vxor.u32 %v296, 2147483648
    %v298 = vmul.f32 %v297, 1.442695
    %v299 = vpow.pop %v298
    %v300 = vadd.f32 %v299, 1.0
    %v301 = vrcp.pop %v300
    %v302 = vmul.f32 1.0, %v301
    %v303 = vtanh.pop %v296
    %v304 = vmul.f32 %v302, 0.0
    %306 = vrot.lane.b32.xlu0 %v303, 64
    %v307 = vpop.permute.xlu0 %306
    %v309 = vmul.f32 %v302, %v307
    %311 = vrot.lane.b32.xlu0 %v309, 32
    %v312 = vpop.permute.xlu0 %311
    %v314 = vadd.f32 %v304, %v312
    %v315 = vtanh.pop %v314
    %317 = vrot.lane.b32.xlu0 %v315, 64
    %v318 = vpop.permute.xlu0 %317
    %v320 = vmul.f32 %v302, %v318
    %v322 = vrot.slane %v294, 2
    %v324 = vadd.f32 %v203, %v322
    %v325 = vxor.u32 %v324, 2147483648
    %v326 = vmul.f32 %v325, 1.442695
    %v327 = vpow.pop %v326
    %v328 = vadd.f32 %v327, 1.0
    %v329 = vrcp.pop %v328
    %v330 = vmul.f32 1.0, %v329
    %v331 = vtanh.pop %v324
    %v332 = vmul.f32 %v330, 0.0
    %334 = vrot.lane.b32.xlu0 %v331, 64
    %v335 = vpop.permute.xlu0 %334
    %v337 = vmul.f32 %v330, %v335
    %339 = vrot.lane.b32.xlu0 %v337, 32
    %v340 = vpop.permute.xlu0 %339
    %v342 = vadd.f32 %v332, %v340
    %v343 = vtanh.pop %v342
    %345 = vrot.lane.b32.xlu0 %v343, 64
    %v346 = vpop.permute.xlu0 %345
    %v348 = vmul.f32 %v330, %v346
    %350 = vrot.lane.b32.xlu0 %v320, 32
    %v351 = vpop.permute.xlu0 %350
    %vm353 = vcmask 254976
    %354 = vst.msk [vmem:[#allocation2] sm:$0x3] %vm353, %v351
    %356 = vrot.lane.b32.xlu0 %v348, 64
    %v357 = vpop.permute.xlu0 %356
    %vm359 = vcmask 523526
    %360 = vst.msk [vmem:[#allocation2 + $0x8] sm:$0xc0] %vm359, %v357
    %v361 = vrot.slane %v348, 6
    %362 = vrot.lane.b32.xlu0 %v361, 64
    %v363 = vpop.permute.xlu0 %362
    %vm365 = vcmask 261120
    %v366 = vsel %vm365, %v351, %v363
    %v368 = vsel %vm221, %v366, 0
    %370 = vmatprep.subr.mxu0 %v206
    %371 = vmatpush1.msra.mxu0 %v205
    %372 = vmatprep.subr.mxu0 %v208
    %373 = vmatpush1.msra.mxu0 %v207
    %374 = vmatprep.subr.mxu0 %v210
    %375 = vmatpush1.msra.mxu0 %v209
    %376 = vmatprep.subr.mxu0 %v212
    %377 = vmatpush1.msra.mxu0 %v211
    %378 = vmatprep.subr.mxu0 %v214
    %379 = vmatpush1.msra.mxu0 %v213
    %380 = vmatprep.subr.mxu0 %v216
    %381 = vmatpush1.msra.mxu0 %v215
    %382 = vmatprep.subr.mxu0 %v218
    %383 = vmatpush1.msra.mxu0 %v217
    %384 = vmatprep.subr.mxu0 %v220
    %385 = vmatpush1.msra.mxu0 %v219
    %386 = vmatprep.subr.mxu0 0.0
    %387 = vmatpush1.msra.mxu0 0.0
    %388 = vmatprep.subr.mxu0 0.0
    %389 = vmatpush1.msra.mxu0 0.0
    %390 = vmatprep.subr.mxu0 0.0
    %391 = vmatpush1.msra.mxu0 0.0
    %392 = vmatprep.subr.mxu0 0.0
    %393 = vmatpush1.msra.mxu0 0.0
    %394 = vmatprep.subr.mxu0 0.0
    %395 = vmatpush1.msra.mxu0 0.0
    %396 = vmatprep.subr.mxu0 0.0
    %397 = vmatpush1.msra.mxu0 0.0
    %398 = vmatprep.subr.mxu0 0.0
    %399 = vmatpush1.msra.mxu0 0.0
    %400 = vmatprep.subr.mxu0 0.0
    %401 = vmatpush1.msra.mxu0 0.0
    %402 = vmatprep.subr.mxu0 0.0
    %403 = vmatpush1.msra.mxu0 0.0
    %404 = vmatprep.subr.mxu0 0.0
    %405 = vmatpush1.msra.mxu0 0.0
    %406 = vmatprep.subr.mxu0 0.0
    %407 = vmatpush1.msra.mxu0 0.0
    %408 = vmatprep.subr.mxu0 0.0
    %409 = vmatpush1.msra.mxu0 0.0
    %410 = vmatprep.subr.mxu0 0.0
    %411 = vmatpush1.msra.mxu0 0.0
    %412 = vmatprep.subr.mxu0 0.0
    %413 = vmatpush1.msra.mxu0 0.0
    %414 = vmatprep.subr.mxu0 0.0
    %415 = vmatpush1.msra.mxu0 0.0
    %416 = vmatprep.subr.mxu0 0.0
    %417 = vmatpush1.msra.mxu0 0.0
    %418 = vmatprep.subr.mxu0 0.0
    %419 = vmatpush1.msra.mxu0 0.0
    %420 = vmatprep.subr.mxu0 0.0
    %421 = vmatpush1.msra.mxu0 0.0
    %422 = vmatprep.subr.mxu0 0.0
    %423 = vmatpush1.msra.mxu0 0.0
    %424 = vmatprep.subr.mxu0 0.0
    %425 = vmatpush1.msra.mxu0 0.0
    %426 = vmatprep.subr.mxu0 0.0
    %427 = vmatpush1.msra.mxu0 0.0
    %428 = vmatprep.subr.mxu0 0.0
    %429 = vmatpush1.msra.mxu0 0.0
    %430 = vmatprep.subr.mxu0 0.0
    %431 = vmatpush1.msra.mxu0 0.0
    %432 = vmatprep.subr.mxu0 0.0
    %433 = vmatpush1.msra.mxu0 0.0
    %434 = vmatprep.mubr.f32.mxu0 0.0
    %435 = vmatmul.mubr.f32.gmra.mrb[0].mxu0 %v368
    %v436 = vpop.f32.mrb[0].mxu0
    %v437 = vadd.f32 0.0, %v436
    %v438 = vpop.f32.mrb[0].mxu0
    %v439 = vadd.f32 0.0, %v438
    %440 = vdwg.mxu0
    %v442 = vrot.slane %v437, 6
    %v444 = vadd.f32 %v195, %v442
    %v445 = vxor.u32 %v444, 2147483648
    %v446 = vmul.f32 %v445, 1.442695
    %v447 = vpow.pop %v446
    %v448 = vadd.f32 %v447, 1.0
    %v449 = vrcp.pop %v448
    %v450 = vmul.f32 1.0, %v449
    %v451 = vtanh.pop %v444
    %v453 = vrot.slane %v314, 6
    %v455 = vmul.f32 %v450, %v453
    %457 = vrot.lane.b32.xlu0 %v451, 64
    %v458 = vpop.permute.xlu0 %457
    %v460 = vmul.f32 %v450, %v458
    %462 = vrot.lane.b32.xlu0 %v460, 32
    %v463 = vpop.permute.xlu0 %462
    %v465 = vadd.f32 %v455, %v463
    %v466 = vtanh.pop %v465
    %468 = vrot.lane.b32.xlu0 %v466, 64
    %v469 = vpop.permute.xlu0 %468
    %v471 = vmul.f32 %v450, %v469
    %v473 = vrot.slane %v439, 4
    %v475 = vadd.f32 %v203, %v473
    %v476 = vxor.u32 %v475, 2147483648
    %v477 = vmul.f32 %v476, 1.442695
    %v478 = vpow.pop %v477
    %v479 = vadd.f32 %v478, 1.0
    %v480 = vrcp.pop %v479
    %v481 = vmul.f32 1.0, %v480
    %v482 = vtanh.pop %v475
    %v484 = vrot.slane %v342, 2
    %v486 = vmul.f32 %v481, %v484
    %488 = vrot.lane.b32.xlu0 %v482, 64
    %v489 = vpop.permute.xlu0 %488
    %v491 = vmul.f32 %v481, %v489
    %493 = vrot.lane.b32.xlu0 %v491, 32
    %v494 = vpop.permute.xlu0 %493
    %v496 = vadd.f32 %v486, %v494
    %v497 = vtanh.pop %v496
    %499 = vrot.lane.b32.xlu0 %v497, 64
    %v500 = vpop.permute.xlu0 %499
    %v502 = vmul.f32 %v481, %v500
    %504 = vrot.lane.b32.xlu0 %v471, 32
    %v505 = vpop.permute.xlu0 %504
    %vm507 = vcmask 257026
    %508 = vst.msk [vmem:[#allocation2] sm:$0xc] %vm507, %v505
    %510 = vrot.lane.b32.xlu0 %v502, 64
    %v511 = vpop.permute.xlu0 %510
    %vm513 = vcmask 521476
    %514 = vst.msk [vmem:[#allocation2 + $0x8] sm:$0x30] %vm513, %v511
    %v515 = vrot.slane %v502, 2
    %516 = vrot.lane.b32.xlu0 %v515, 64
    %v517 = vpop.permute.xlu0 %516
    %v519 = vsel %vm365, %v505, %v517
    %v521 = vrot.slane %v519, 2
    %v522 = vsel %vm221, %v521, 0
    %524 = vmatprep.subr.mxu0 %v206
    %525 = vmatpush1.msra.mxu0 %v205
    %526 = vmatprep.subr.mxu0 %v208
    %527 = vmatpush1.msra.mxu0 %v207
    %528 = vmatprep.subr.mxu0 %v210
    %529 = vmatpush1.msra.mxu0 %v209
    %530 = vmatprep.subr.mxu0 %v212
    %531 = vmatpush1.msra.mxu0 %v211
    %532 = vmatprep.subr.mxu0 %v214
    %533 = vmatpush1.msra.mxu0 %v213
    %534 = vmatprep.subr.mxu0 %v216
    %535 = vmatpush1.msra.mxu0 %v215
    %536 = vmatprep.subr.mxu0 %v218
    %537 = vmatpush1.msra.mxu0 %v217
    %538 = vmatprep.subr.mxu0 %v220
    %539 = vmatpush1.msra.mxu0 %v219
    %540 = vmatprep.subr.mxu0 0.0
    %541 = vmatpush1.msra.mxu0 0.0
    %542 = vmatprep.subr.mxu0 0.0
    %543 = vmatpush1.msra.mxu0 0.0
    %544 = vmatprep.subr.mxu0 0.0
    %545 = vmatpush1.msra.mxu0 0.0
    %546 = vmatprep.subr.mxu0 0.0
    %547 = vmatpush1.msra.mxu0 0.0
    %548 = vmatprep.subr.mxu0 0.0
    %549 = vmatpush1.msra.mxu0 0.0
    %550 = vmatprep.subr.mxu0 0.0
    %551 = vmatpush1.msra.mxu0 0.0
    %552 = vmatprep.subr.mxu0 0.0
    %553 = vmatpush1.msra.mxu0 0.0
    %554 = vmatprep.subr.mxu0 0.0
    %555 = vmatpush1.msra.mxu0 0.0
    %556 = vmatprep.subr.mxu0 0.0
    %557 = vmatpush1.msra.mxu0 0.0
    %558 = vmatprep.subr.mxu0 0.0
    %559 = vmatpush1.msra.mxu0 0.0
    %560 = vmatprep.subr.mxu0 0.0
    %561 = vmatpush1.msra.mxu0 0.0
    %562 = vmatprep.subr.mxu0 0.0
    %563 = vmatpush1.msra.mxu0 0.0
    %564 = vmatprep.subr.mxu0 0.0
    %565 = vmatpush1.msra.mxu0 0.0
    %566 = vmatprep.subr.mxu0 0.0
    %567 = vmatpush1.msra.mxu0 0.0
    %568 = vmatprep.subr.mxu0 0.0
    %569 = vmatpush1.msra.mxu0 0.0
    %570 = vmatprep.subr.mxu0 0.0
    %571 = vmatpush1.msra.mxu0 0.0
    %572 = vmatprep.subr.mxu0 0.0
    %573 = vmatpush1.msra.mxu0 0.0
    %574 = vmatprep.subr.mxu0 0.0
    %575 = vmatpush1.msra.mxu0 0.0
    %576 = vmatprep.subr.mxu0 0.0
    %577 = vmatpush1.msra.mxu0 0.0
    %578 = vmatprep.subr.mxu0 0.0
    %579 = vmatpush1.msra.mxu0 0.0
    %580 = vmatprep.subr.mxu0 0.0
    %581 = vmatpush1.msra.mxu0 0.0
    %582 = vmatprep.subr.mxu0 0.0
    %583 = vmatpush1.msra.mxu0 0.0
    %584 = vmatprep.subr.mxu0 0.0
    %585 = vmatpush1.msra.mxu0 0.0
    %586 = vmatprep.subr.mxu0 0.0
    %587 = vmatpush1.msra.mxu0 0.0
    %588 = vmatprep.mubr.f32.mxu0 0.0
    %589 = vmatmul.mubr.f32.gmra.mrb[0].mxu0 %v522
    %v590 = vpop.f32.mrb[0].mxu0
    %v591 = vadd.f32 0.0, %v590
    %v592 = vpop.f32.mrb[0].mxu0
    %v593 = vadd.f32 0.0, %v592
    %594 = vdwg.mxu0
    %v596 = vrot.slane %v591, 4
    %v598 = vadd.f32 %v195, %v596
    %v599 = vxor.u32 %v598, 2147483648
    %v600 = vmul.f32 %v599, 1.442695
    %v601 = vpow.pop %v600
    %v602 = vadd.f32 %v601, 1.0
    %v603 = vrcp.pop %v602
    %v604 = vmul.f32 1.0, %v603
    %v605 = vtanh.pop %v598
    %v607 = vrot.slane %v465, 6
    %v609 = vmul.f32 %v604, %v607
    %611 = vrot.lane.b32.xlu0 %v605, 64
    %v612 = vpop.permute.xlu0 %611
    %v614 = vmul.f32 %v604, %v612
    %616 = vrot.lane.b32.xlu0 %v614, 32
    %v617 = vpop.permute.xlu0 %616
    %v619 = vadd.f32 %v609, %v617
    %v620 = vtanh.pop %v619
    %622 = vrot.lane.b32.xlu0 %v620, 64
    %v623 = vpop.permute.xlu0 %622
    %v625 = vmul.f32 %v604, %v623
    %v627 = vrot.slane %v593, 6
    %v629 = vadd.f32 %v203, %v627
    %v630 = vxor.u32 %v629, 2147483648
    %v631 = vmul.f32 %v630, 1.442695
    %v632 = vpow.pop %v631
    %v633 = vadd.f32 %v632, 1.0
    %v634 = vrcp.pop %v633
    %v635 = vmul.f32 1.0, %v634
    %v636 = vtanh.pop %v629
    %v638 = vrot.slane %v496, 2
    %v640 = vmul.f32 %v635, %v638
    %642 = vrot.lane.b32.xlu0 %v636, 64
    %v643 = vpop.permute.xlu0 %642
    %v645 = vmul.f32 %v635, %v643
    %647 = vrot.lane.b32.xlu0 %v645, 32
    %v648 = vpop.permute.xlu0 %647
    %v650 = vadd.f32 %v640, %v648
    %v651 = vtanh.pop %v650
    %653 = vrot.lane.b32.xlu0 %v651, 64
    %v654 = vpop.permute.xlu0 %653
    %v656 = vmul.f32 %v635, %v654
    %658 = vrot.lane.b32.xlu0 %v625, 32
    %v659 = vpop.permute.xlu0 %658
    %vm661 = vcmask 259076
    %662 = vst.msk [vmem:[#allocation2] sm:$0x30] %vm661, %v659
    %664 = vrot.lane.b32.xlu0 %v656, 64
    %v665 = vpop.permute.xlu0 %664
    %vm667 = vcmask 519426
    %668 = vst.msk [vmem:[#allocation2 + $0x8] sm:$0xc] %vm667, %v665
    %v669 = vrot.slane %v656, 6
    %670 = vrot.lane.b32.xlu0 %v669, 64
    %v671 = vpop.permute.xlu0 %670
    %v673 = vsel %vm365, %v659, %v671
    %v675 = vrot.slane %v673, 4
    %v676 = vsel %vm221, %v675, 0
    %678 = vmatprep.subr.mxu0 %v206
    %679 = vmatpush1.msra.mxu0 %v205
    %680 = vmatprep.subr.mxu0 %v208
    %681 = vmatpush1.msra.mxu0 %v207
    %682 = vmatprep.subr.mxu0 %v210
    %683 = vmatpush1.msra.mxu0 %v209
    %684 = vmatprep.subr.mxu0 %v212
    %685 = vmatpush1.msra.mxu0 %v211
    %686 = vmatprep.subr.mxu0 %v214
    %687 = vmatpush1.msra.mxu0 %v213
    %688 = vmatprep.subr.mxu0 %v216
    %689 = vmatpush1.msra.mxu0 %v215
    %690 = vmatprep.subr.mxu0 %v218
    %691 = vmatpush1.msra.mxu0 %v217
    %692 = vmatprep.subr.mxu0 %v220
    %693 = vmatpush1.msra.mxu0 %v219
    %694 = vmatprep.subr.mxu0 0.0
    %695 = vmatpush1.msra.mxu0 0.0
    %696 = vmatprep.subr.mxu0 0.0
    %697 = vmatpush1.msra.mxu0 0.0
    %698 = vmatprep.subr.mxu0 0.0
    %699 = vmatpush1.msra.mxu0 0.0
    %700 = vmatprep.subr.mxu0 0.0
    %701 = vmatpush1.msra.mxu0 0.0
    %702 = vmatprep.subr.mxu0 0.0
    %703 = vmatpush1.msra.mxu0 0.0
    %704 = vmatprep.subr.mxu0 0.0
    %705 = vmatpush1.msra.mxu0 0.0
    %706 = vmatprep.subr.mxu0 0.0
    %707 = vmatpush1.msra.mxu0 0.0
    %708 = vmatprep.subr.mxu0 0.0
    %709 = vmatpush1.msra.mxu0 0.0
    %710 = vmatprep.subr.mxu0 0.0
    %711 = vmatpush1.msra.mxu0 0.0
    %712 = vmatprep.subr.mxu0 0.0
    %713 = vmatpush1.msra.mxu0 0.0
    %714 = vmatprep.subr.mxu0 0.0
    %715 = vmatpush1.msra.mxu0 0.0
    %716 = vmatprep.subr.mxu0 0.0
    %717 = vmatpush1.msra.mxu0 0.0
    %718 = vmatprep.subr.mxu0 0.0
    %719 = vmatpush1.msra.mxu0 0.0
    %720 = vmatprep.subr.mxu0 0.0
    %721 = vmatpush1.msra.mxu0 0.0
    %722 = vmatprep.subr.mxu0 0.0
    %723 = vmatpush1.msra.mxu0 0.0
    %724 = vmatprep.subr.mxu0 0.0
    %725 = vmatpush1.msra.mxu0 0.0
    %726 = vmatprep.subr.mxu0 0.0
    %727 = vmatpush1.msra.mxu0 0.0
    %728 = vmatprep.subr.mxu0 0.0
    %729 = vmatpush1.msra.mxu0 0.0
    %730 = vmatprep.subr.mxu0 0.0
    %731 = vmatpush1.msra.mxu0 0.0
    %732 = vmatprep.subr.mxu0 0.0
    %733 = vmatpush1.msra.mxu0 0.0
    %734 = vmatprep.subr.mxu0 0.0
    %735 = vmatpush1.msra.mxu0 0.0
    %736 = vmatprep.subr.mxu0 0.0
    %737 = vmatpush1.msra.mxu0 0.0
    %738 = vmatprep.subr.mxu0 0.0
    %739 = vmatpush1.msra.mxu0 0.0
    %740 = vmatprep.subr.mxu0 0.0
    %741 = vmatpush1.msra.mxu0 0.0
    %742 = vmatprep.mubr.f32.mxu0 0.0
    %743 = vmatmul.mubr.f32.gmra.mrb[0].mxu0 %v676
    %v744 = vpop.f32.mrb[0].mxu0
    %v745 = vadd.f32 0.0, %v744
    %v746 = vpop.f32.mrb[0].mxu0
    %v747 = vadd.f32 0.0, %v746
    %748 = vdwg.mxu0
    %v750 = vrot.slane %v745, 2
    %v752 = vadd.f32 %v195, %v750
    %v753 = vxor.u32 %v752, 2147483648
    %v754 = vmul.f32 %v753, 1.442695
    %v755 = vpow.pop %v754
    %v756 = vadd.f32 %v755, 1.0
    %v757 = vrcp.pop %v756
    %v758 = vmul.f32 1.0, %v757
    %v759 = vtanh.pop %v752
    %v761 = vrot.slane %v619, 6
    %v763 = vmul.f32 %v758, %v761
    %765 = vrot.lane.b32.xlu0 %v759, 64
    %v766 = vpop.permute.xlu0 %765
    %v768 = vmul.f32 %v758, %v766
    %770 = vrot.lane.b32.xlu0 %v768, 32
    %v771 = vpop.permute.xlu0 %770
    %v773 = vadd.f32 %v763, %v771
    %v774 = vtanh.pop %v773
    %776 = vrot.lane.b32.xlu0 %v774, 64
    %v777 = vpop.permute.xlu0 %776
    %v779 = vmul.f32 %v758, %v777
    %v780 = vadd.f32 %v203, %v747
    %v781 = vxor.u32 %v780, 2147483648
    %v782 = vmul.f32 %v781, 1.442695
    %v783 = vpow.pop %v782
    %v784 = vadd.f32 %v783, 1.0
    %v785 = vrcp.pop %v784
    %v786 = vmul.f32 1.0, %v785
    %v787 = vtanh.pop %v780
    %v789 = vrot.slane %v650, 2
    %v791 = vmul.f32 %v786, %v789
    %793 = vrot.lane.b32.xlu0 %v787, 64
    %v794 = vpop.permute.xlu0 %793
    %v796 = vmul.f32 %v786, %v794
    %798 = vrot.lane.b32.xlu0 %v796, 32
    %v799 = vpop.permute.xlu0 %798
    %v801 = vadd.f32 %v791, %v799
    %v802 = vtanh.pop %v801
    %804 = vrot.lane.b32.xlu0 %v802, 64
    %v805 = vpop.permute.xlu0 %804
    %v807 = vmul.f32 %v786, %v805
    %809 = vrot.lane.b32.xlu0 %v779, 32
    %v810 = vpop.permute.xlu0 %809
    %vm812 = vcmask 261126
    %813 = vst.msk [vmem:[#allocation2] sm:$0xc0] %vm812, %v810
    %815 = vrot.lane.b32.xlu0 %v807, 64
    %v816 = vpop.permute.xlu0 %815
    %vm818 = vcmask 517376
    %819 = vst.msk [vmem:[#allocation2 + $0x8] sm:$0x3] %vm818, %v816
    %v820 = vrot.slane %v807, 2
    %821 = vrot.lane.b32.xlu0 %v820, 64
    %v822 = vpop.permute.xlu0 %821
    %v824 = vsel %vm365, %v810, %v822
    %v826 = vrot.slane %v824, 6
    %v827 = vsel %vm221, %v826, 0
    %829 = vmatprep.subr.mxu0 %v206
    %830 = vmatpush1.msra.mxu0 %v205
    %831 = vmatprep.subr.mxu0 %v208
    %832 = vmatpush1.msra.mxu0 %v207
    %833 = vmatprep.subr.mxu0 %v210
    %834 = vmatpush1.msra.mxu0 %v209
    %835 = vmatprep.subr.mxu0 %v212
    %836 = vmatpush1.msra.mxu0 %v211
    %837 = vmatprep.subr.mxu0 %v214
    %838 = vmatpush1.msra.mxu0 %v213
    %839 = vmatprep.subr.mxu0 %v216
    %840 = vmatpush1.msra.mxu0 %v215
    %841 = vmatprep.subr.mxu0 %v218
    %842 = vmatpush1.msra.mxu0 %v217
    %843 = vmatprep.subr.mxu0 %v220
    %844 = vmatpush1.msra.mxu0 %v219
    %845 = vmatprep.subr.mxu0 0.0
    %846 = vmatpush1.msra.mxu0 0.0
    %847 = vmatprep.subr.mxu0 0.0
    %848 = vmatpush1.msra.mxu0 0.0
    %849 = vmatprep.subr.mxu0 0.0
    %850 = vmatpush1.msra.mxu0 0.0
    %851 = vmatprep.subr.mxu0 0.0
    %852 = vmatpush1.msra.mxu0 0.0
    %853 = vmatprep.subr.mxu0 0.0
    %854 = vmatpush1.msra.mxu0 0.0
    %855 = vmatprep.subr.mxu0 0.0
    %856 = vmatpush1.msra.mxu0 0.0
    %857 = vmatprep.subr.mxu0 0.0
    %858 = vmatpush1.msra.mxu0 0.0
    %859 = vmatprep.subr.mxu0 0.0
    %860 = vmatpush1.msra.mxu0 0.0
    %861 = vmatprep.subr.mxu0 0.0
    %862 = vmatpush1.msra.mxu0 0.0
    %863 = vmatprep.subr.mxu0 0.0
    %864 = vmatpush1.msra.mxu0 0.0
    %865 = vmatprep.subr.mxu0 0.0
    %866 = vmatpush1.msra.mxu0 0.0
    %867 = vmatprep.subr.mxu0 0.0
    %868 = vmatpush1.msra.mxu0 0.0
    %869 = vmatprep.subr.mxu0 0.0
    %870 = vmatpush1.msra.mxu0 0.0
    %871 = vmatprep.subr.mxu0 0.0
    %872 = vmatpush1.msra.mxu0 0.0
    %873 = vmatprep.subr.mxu0 0.0
    %874 = vmatpush1.msra.mxu0 0.0
    %875 = vmatprep.subr.mxu0 0.0
    %876 = vmatpush1.msra.mxu0 0.0
    %877 = vmatprep.subr.mxu0 0.0
    %878 = vmatpush1.msra.mxu0 0.0
    %879 = vmatprep.subr.mxu0 0.0
    %880 = vmatpush1.msra.mxu0 0.0
    %881 = vmatprep.subr.mxu0 0.0
    %882 = vmatpush1.msra.mxu0 0.0
    %883 = vmatprep.subr.mxu0 0.0
    %884 = vmatpush1.msra.mxu0 0.0
    %885 = vmatprep.subr.mxu0 0.0
    %886 = vmatpush1.msra.mxu0 0.0
    %887 = vmatprep.subr.mxu0 0.0
    %888 = vmatpush1.msra.mxu0 0.0
    %889 = vmatprep.subr.mxu0 0.0
    %890 = vmatpush1.msra.mxu0 0.0
    %891 = vmatprep.subr.mxu0 0.0
    %892 = vmatpush1.msra.mxu0 0.0
    %893 = vmatprep.mubr.f32.mxu0 0.0
    %894 = vmatmul.mubr.f32.gmra.mrb[0].mxu0 %v827
    %v895 = vpop.f32.mrb[0].mxu0
    %v896 = vadd.f32 0.0, %v895
    %v897 = vpop.f32.mrb[0].mxu0
    %v898 = vadd.f32 0.0, %v897
    %899 = vdwg.mxu0
    %v900 = vadd.f32 %v201, %v896
    %v901 = vxor.u32 %v900, 2147483648
    %v902 = vmul.f32 %v901, 1.442695
    %v903 = vpow.pop %v902
    %v904 = vadd.f32 %v903, 1.0
    %v905 = vrcp.pop %v904
    %v906 = vmul.f32 1.0, %v905
    %v907 = vtanh.pop %v900
    %v909 = vrot.slane %v773, 6
    %v911 = vmul.f32 %v906, %v909
    %913 = vrot.lane.b32.xlu0 %v907, 64
    %v914 = vpop.permute.xlu0 %913
    %v916 = vmul.f32 %v906, %v914
    %918 = vrot.lane.b32.xlu0 %v916, 32
    %v919 = vpop.permute.xlu0 %918
    %v921 = vadd.f32 %v911, %v919
    %v922 = vtanh.pop %v921
    %924 = vrot.lane.b32.xlu0 %v922, 64
    %v925 = vpop.permute.xlu0 %924
    %v927 = vmul.f32 %v906, %v925
    %v929 = vrot.slane %v898, 2
    %v931 = vadd.f32 %v197, %v929
    %v932 = vxor.u32 %v931, 2147483648
    %v933 = vmul.f32 %v932, 1.442695
    %v934 = vpow.pop %v933
    %v935 = vadd.f32 %v934, 1.0
    %v936 = vrcp.pop %v935
    %v937 = vmul.f32 1.0, %v936
    %v938 = vtanh.pop %v931
    %v940 = vrot.slane %v801, 2
    %v942 = vmul.f32 %v937, %v940
    %944 = vrot.lane.b32.xlu0 %v938, 64
    %v945 = vpop.permute.xlu0 %944
    %v947 = vmul.f32 %v937, %v945
    %949 = vrot.lane.b32.xlu0 %v947, 32
    %v950 = vpop.permute.xlu0 %949
    %v952 = vadd.f32 %v942, %v950
    %v953 = vtanh.pop %v952
    %955 = vrot.lane.b32.xlu0 %v953, 64
    %v956 = vpop.permute.xlu0 %955
    %v958 = vmul.f32 %v937, %v956
    %960 = vrot.lane.b32.xlu0 %v927, 32
    %v961 = vpop.permute.xlu0 %960
    %963 = vst.msk [vmem:[#allocation2 + $0x8] sm:$0x3] %vm353, %v961
    %965 = vrot.lane.b32.xlu0 %v958, 64
    %v966 = vpop.permute.xlu0 %965
    %968 = vst.msk [vmem:[#allocation2] sm:$0xc0] %vm359, %v966
    %v969 = vrot.slane %v958, 6
    %970 = vrot.lane.b32.xlu0 %v969, 64
    %v971 = vpop.permute.xlu0 %970
    %v973 = vsel %vm365, %v961, %v971
    %v975 = vsel %vm221, %v973, 0
    %977 = vmatprep.subr.mxu0 %v206
    %978 = vmatpush1.msra.mxu0 %v205
    %979 = vmatprep.subr.mxu0 %v208
    %980 = vmatpush1.msra.mxu0 %v207
    %981 = vmatprep.subr.mxu0 %v210
    %982 = vmatpush1.msra.mxu0 %v209
    %983 = vmatprep.subr.mxu0 %v212
    %984 = vmatpush1.msra.mxu0 %v211
    %985 = vmatprep.subr.mxu0 %v214
    %986 = vmatpush1.msra.mxu0 %v213
    %987 = vmatprep.subr.mxu0 %v216
    %988 = vmatpush1.msra.mxu0 %v215
    %989 = vmatprep.subr.mxu0 %v218
    %990 = vmatpush1.msra.mxu0 %v217
    %991 = vmatprep.subr.mxu0 %v220
    %992 = vmatpush1.msra.mxu0 %v219
    %993 = vmatprep.subr.mxu0 0.0
    %994 = vmatpush1.msra.mxu0 0.0
    %995 = vmatprep.subr.mxu0 0.0
    %996 = vmatpush1.msra.mxu0 0.0
    %997 = vmatprep.subr.mxu0 0.0
    %998 = vmatpush1.msra.mxu0 0.0
    %999 = vmatprep.subr.mxu0 0.0
    %1000 = vmatpush1.msra.mxu0 0.0
    %1001 = vmatprep.subr.mxu0 0.0
    %1002 = vmatpush1.msra.mxu0 0.0
    %1003 = vmatprep.subr.mxu0 0.0
    %1004 = vmatpush1.msra.mxu0 0.0
    %1005 = vmatprep.subr.mxu0 0.0
    %1006 = vmatpush1.msra.mxu0 0.0
    %1007 = vmatprep.subr.mxu0 0.0
    %1008 = vmatpush1.msra.mxu0 0.0
    %1009 = vmatprep.subr.mxu0 0.0
    %1010 = vmatpush1.msra.mxu0 0.0
    %1011 = vmatprep.subr.mxu0 0.0
    %1012 = vmatpush1.msra.mxu0 0.0
    %1013 = vmatprep.subr.mxu0 0.0
    %1014 = vmatpush1.msra.mxu0 0.0
    %1015 = vmatprep.subr.mxu0 0.0
    %1016 = vmatpush1.msra.mxu0 0.0
    %1017 = vmatprep.subr.mxu0 0.0
    %1018 = vmatpush1.msra.mxu0 0.0
    %1019 = vmatprep.subr.mxu0 0.0
    %1020 = vmatpush1.msra.mxu0 0.0
    %1021 = vmatprep.subr.mxu0 0.0
    %1022 = vmatpush1.msra.mxu0 0.0
    %1023 = vmatprep.subr.mxu0 0.0
    %1024 = vmatpush1.msra.mxu0 0.0
    %1025 = vmatprep.subr.mxu0 0.0
    %1026 = vmatpush1.msra.mxu0 0.0
    %1027 = vmatprep.subr.mxu0 0.0
    %1028 = vmatpush1.msra.mxu0 0.0
    %1029 = vmatprep.subr.mxu0 0.0
    %1030 = vmatpush1.msra.mxu0 0.0
    %1031 = vmatprep.subr.mxu0 0.0
    %1032 = vmatpush1.msra.mxu0 0.0
    %1033 = vmatprep.subr.mxu0 0.0
    %1034 = vmatpush1.msra.mxu0 0.0
    %1035 = vmatprep.subr.mxu0 0.0
    %1036 = vmatpush1.msra.mxu0 0.0
    %1037 = vmatprep.subr.mxu0 0.0
    %1038 = vmatpush1.msra.mxu0 0.0
    %1039 = vmatprep.subr.mxu0 0.0
    %1040 = vmatpush1.msra.mxu0 0.0
    %1041 = vmatprep.mubr.f32.mxu0 0.0
    %1042 = vmatmul.mubr.f32.gmra.mrb[0].mxu0 %v975
    %v1043 = vpop.f32.mrb[0].mxu0
    %v1044 = vadd.f32 0.0, %v1043
    %v1045 = vpop.f32.mrb[0].mxu0
    %v1046 = vadd.f32 0.0, %v1045
    %1047 = vdwg.mxu0
    %v1049 = vrot.slane %v1044, 6
    %v1051 = vadd.f32 %v201, %v1049
    %v1052 = vxor.u32 %v1051, 2147483648
    %v1053 = vmul.f32 %v1052, 1.442695
    %v1054 = vpow.pop %v1053
    %v1055 = vadd.f32 %v1054, 1.0
    %v1056 = vrcp.pop %v1055
    %v1057 = vmul.f32 1.0, %v1056
    %v1058 = vtanh.pop %v1051
    %v1060 = vrot.slane %v921, 6
    %v1062 = vmul.f32 %v1057, %v1060
    %1064 = vrot.lane.b32.xlu0 %v1058, 64
    %v1065 = vpop.permute.xlu0 %1064
    %v1067 = vmul.f32 %v1057, %v1065
    %1069 = vrot.lane.b32.xlu0 %v1067, 32
    %v1070 = vpop.permute.xlu0 %1069
    %v1072 = vadd.f32 %v1062, %v1070
    %v1073 = vtanh.pop %v1072
    %1075 = vrot.lane.b32.xlu0 %v1073, 64
    %v1076 = vpop.permute.xlu0 %1075
    %v1078 = vmul.f32 %v1057, %v1076
    %v1080 = vrot.slane %v1046, 4
    %v1082 = vadd.f32 %v197, %v1080
    %v1083 = vxor.u32 %v1082, 2147483648
    %v1084 = vmul.f32 %v1083, 1.442695
    %v1085 = vpow.pop %v1084
    %v1086 = vadd.f32 %v1085, 1.0
    %v1087 = vrcp.pop %v1086
    %v1088 = vmul.f32 1.0, %v1087
    %v1089 = vtanh.pop %v1082
    %v1091 = vrot.slane %v952, 2
    %v1093 = vmul.f32 %v1088, %v1091
    %1095 = vrot.lane.b32.xlu0 %v1089, 64
    %v1096 = vpop.permute.xlu0 %1095
    %v1098 = vmul.f32 %v1088, %v1096
    %1100 = vrot.lane.b32.xlu0 %v1098, 32
    %v1101 = vpop.permute.xlu0 %1100
    %v1103 = vadd.f32 %v1093, %v1101
    %v1104 = vtanh.pop %v1103
    %1106 = vrot.lane.b32.xlu0 %v1104, 64
    %v1107 = vpop.permute.xlu0 %1106
    %v1109 = vmul.f32 %v1088, %v1107
    %1111 = vrot.lane.b32.xlu0 %v1078, 32
    %v1112 = vpop.permute.xlu0 %1111
    %1114 = vst.msk [vmem:[#allocation2 + $0x8] sm:$0xc] %vm507, %v1112
    %1116 = vrot.lane.b32.xlu0 %v1109, 64
    %v1117 = vpop.permute.xlu0 %1116
    %1119 = vst.msk [vmem:[#allocation2] sm:$0x30] %vm513, %v1117
    %v1120 = vrot.slane %v1109, 2
    %1121 = vrot.lane.b32.xlu0 %v1120, 64
    %v1122 = vpop.permute.xlu0 %1121
    %v1124 = vsel %vm365, %v1112, %v1122
    %v1126 = vrot.slane %v1124, 2
    %v1127 = vsel %vm221, %v1126, 0
    %1129 = vmatprep.subr.mxu0 %v206
    %1130 = vmatpush1.msra.mxu0 %v205
    %1131 = vmatprep.subr.mxu0 %v208
    %1132 = vmatpush1.msra.mxu0 %v207
    %1133 = vmatprep.subr.mxu0 %v210
    %1134 = vmatpush1.msra.mxu0 %v209
    %1135 = vmatprep.subr.mxu0 %v212
    %1136 = vmatpush1.msra.mxu0 %v211
    %1137 = vmatprep.subr.mxu0 %v214
    %1138 = vmatpush1.msra.mxu0 %v213
    %1139 = vmatprep.subr.mxu0 %v216
    %1140 = vmatpush1.msra.mxu0 %v215
    %1141 = vmatprep.subr.mxu0 %v218
    %1142 = vmatpush1.msra.mxu0 %v217
    %1143 = vmatprep.subr.mxu0 %v220
    %1144 = vmatpush1.msra.mxu0 %v219
    %1145 = vmatprep.subr.mxu0 0.0
    %1146 = vmatpush1.msra.mxu0 0.0
    %1147 = vmatprep.subr.mxu0 0.0
    %1148 = vmatpush1.msra.mxu0 0.0
    %1149 = vmatprep.subr.mxu0 0.0
    %1150 = vmatpush1.msra.mxu0 0.0
    %1151 = vmatprep.subr.mxu0 0.0
    %1152 = vmatpush1.msra.mxu0 0.0
    %1153 = vmatprep.subr.mxu0 0.0
    %1154 = vmatpush1.msra.mxu0 0.0
    %1155 = vmatprep.subr.mxu0 0.0
    %1156 = vmatpush1.msra.mxu0 0.0
    %1157 = vmatprep.subr.mxu0 0.0
    %1158 = vmatpush1.msra.mxu0 0.0
    %1159 = vmatprep.subr.mxu0 0.0
    %1160 = vmatpush1.msra.mxu0 0.0
    %1161 = vmatprep.subr.mxu0 0.0
    %1162 = vmatpush1.msra.mxu0 0.0
    %1163 = vmatprep.subr.mxu0 0.0
    %1164 = vmatpush1.msra.mxu0 0.0
    %1165 = vmatprep.subr.mxu0 0.0
    %1166 = vmatpush1.msra.mxu0 0.0
    %1167 = vmatprep.subr.mxu0 0.0
    %1168 = vmatpush1.msra.mxu0 0.0
    %1169 = vmatprep.subr.mxu0 0.0
    %1170 = vmatpush1.msra.mxu0 0.0
    %1171 = vmatprep.subr.mxu0 0.0
    %1172 = vmatpush1.msra.mxu0 0.0
    %1173 = vmatprep.subr.mxu0 0.0
    %1174 = vmatpush1.msra.mxu0 0.0
    %1175 = vmatprep.subr.mxu0 0.0
    %1176 = vmatpush1.msra.mxu0 0.0
    %1177 = vmatprep.subr.mxu0 0.0
    %1178 = vmatpush1.msra.mxu0 0.0
    %1179 = vmatprep.subr.mxu0 0.0
    %1180 = vmatpush1.msra.mxu0 0.0
    %1181 = vmatprep.subr.mxu0 0.0
    %1182 = vmatpush1.msra.mxu0 0.0
    %1183 = vmatprep.subr.mxu0 0.0
    %1184 = vmatpush1.msra.mxu0 0.0
    %1185 = vmatprep.subr.mxu0 0.0
    %1186 = vmatpush1.msra.mxu0 0.0
    %1187 = vmatprep.subr.mxu0 0.0
    %1188 = vmatpush1.msra.mxu0 0.0
    %1189 = vmatprep.subr.mxu0 0.0
    %1190 = vmatpush1.msra.mxu0 0.0
    %1191 = vmatprep.subr.mxu0 0.0
    %1192 = vmatpush1.msra.mxu0 0.0
    %1193 = vmatprep.mubr.f32.mxu0 0.0
    %1194 = vmatmul.mubr.f32.gmra.mrb[0].mxu0 %v1127
    %v1195 = vpop.f32.mrb[0].mxu0
    %v1196 = vadd.f32 0.0, %v1195
    %v1197 = vpop.f32.mrb[0].mxu0
    %v1198 = vadd.f32 0.0, %v1197
    %1199 = vdwg.mxu0
    %v1201 = vrot.slane %v1196, 4
    %v1203 = vadd.f32 %v201, %v1201
    %v1204 = vxor.u32 %v1203, 2147483648
    %v1205 = vmul.f32 %v1204, 1.442695
    %v1206 = vpow.pop %v1205
    %v1207 = vadd.f32 %v1206, 1.0
    %v1208 = vrcp.pop %v1207
    %v1209 = vmul.f32 1.0, %v1208
    %v1210 = vtanh.pop %v1203
    %v1212 = vrot.slane %v1072, 6
    %v1214 = vmul.f32 %v1209, %v1212
    %1216 = vrot.lane.b32.xlu0 %v1210, 64
    %v1217 = vpop.permute.xlu0 %1216
    %v1219 = vmul.f32 %v1209, %v1217
    %1221 = vrot.lane.b32.xlu0 %v1219, 32
    %v1222 = vpop.permute.xlu0 %1221
    %v1224 = vadd.f32 %v1214, %v1222
    %v1225 = vtanh.pop %v1224
    %1227 = vrot.lane.b32.xlu0 %v1225, 64
    %v1228 = vpop.permute.xlu0 %1227
    %v1230 = vmul.f32 %v1209, %v1228
    %v1232 = vrot.slane %v1198, 6
    %v1234 = vadd.f32 %v197, %v1232
    %v1235 = vxor.u32 %v1234, 2147483648
    %v1236 = vmul.f32 %v1235, 1.442695
    %v1237 = vpow.pop %v1236
    %v1238 = vadd.f32 %v1237, 1.0
    %v1239 = vrcp.pop %v1238
    %v1240 = vmul.f32 1.0, %v1239
    %v1241 = vtanh.pop %v1234
    %v1243 = vrot.slane %v1103, 2
    %v1245 = vmul.f32 %v1240, %v1243
    %1247 = vrot.lane.b32.xlu0 %v1241, 64
    %v1248 = vpop.permute.xlu0 %1247
    %v1250 = vmul.f32 %v1240, %v1248
    %1252 = vrot.lane.b32.xlu0 %v1250, 32
    %v1253 = vpop.permute.xlu0 %1252
    %v1255 = vadd.f32 %v1245, %v1253
    %v1256 = vtanh.pop %v1255
    %1258 = vrot.lane.b32.xlu0 %v1256, 64
    %v1259 = vpop.permute.xlu0 %1258
    %v1261 = vmul.f32 %v1240, %v1259
    %1263 = vrot.lane.b32.xlu0 %v1230, 32
    %v1264 = vpop.permute.xlu0 %1263
    %1266 = vst.msk [vmem:[#allocation2 + $0x8] sm:$0x30] %vm661, %v1264
    %1268 = vrot.lane.b32.xlu0 %v1261, 64
    %v1269 = vpop.permute.xlu0 %1268
    %1271 = vst.msk [vmem:[#allocation2] sm:$0xc] %vm667, %v1269
    %v1272 = vrot.slane %v1261, 6
    %1273 = vrot.lane.b32.xlu0 %v1272, 64
    %v1274 = vpop.permute.xlu0 %1273
    %v1276 = vsel %vm365, %v1264, %v1274
    %v1278 = vrot.slane %v1276, 4
    %v1279 = vsel %vm221, %v1278, 0
    %1281 = vmatprep.subr.mxu0 %v206
    %1282 = vmatpush1.msra.mxu0 %v205
    %1283 = vmatprep.subr.mxu0 %v208
    %1284 = vmatpush1.msra.mxu0 %v207
    %1285 = vmatprep.subr.mxu0 %v210
    %1286 = vmatpush1.msra.mxu0 %v209
    %1287 = vmatprep.subr.mxu0 %v212
    %1288 = vmatpush1.msra.mxu0 %v211
    %1289 = vmatprep.subr.mxu0 %v214
    %1290 = vmatpush1.msra.mxu0 %v213
    %1291 = vmatprep.subr.mxu0 %v216
    %1292 = vmatpush1.msra.mxu0 %v215
    %1293 = vmatprep.subr.mxu0 %v218
    %1294 = vmatpush1.msra.mxu0 %v217
    %1295 = vmatprep.subr.mxu0 %v220
    %1296 = vmatpush1.msra.mxu0 %v219
    %1297 = vmatprep.subr.mxu0 0.0
    %1298 = vmatpush1.msra.mxu0 0.0
    %1299 = vmatprep.subr.mxu0 0.0
    %1300 = vmatpush1.msra.mxu0 0.0
    %1301 = vmatprep.subr.mxu0 0.0
    %1302 = vmatpush1.msra.mxu0 0.0
    %1303 = vmatprep.subr.mxu0 0.0
    %1304 = vmatpush1.msra.mxu0 0.0
    %1305 = vmatprep.subr.mxu0 0.0
    %1306 = vmatpush1.msra.mxu0 0.0
    %1307 = vmatprep.subr.mxu0 0.0
    %1308 = vmatpush1.msra.mxu0 0.0
    %1309 = vmatprep.subr.mxu0 0.0
    %1310 = vmatpush1.msra.mxu0 0.0
    %1311 = vmatprep.subr.mxu0 0.0
    %1312 = vmatpush1.msra.mxu0 0.0
    %1313 = vmatprep.subr.mxu0 0.0
    %1314 = vmatpush1.msra.mxu0 0.0
    %1315 = vmatprep.subr.mxu0 0.0
    %1316 = vmatpush1.msra.mxu0 0.0
    %1317 = vmatprep.subr.mxu0 0.0
    %1318 = vmatpush1.msra.mxu0 0.0
    %1319 = vmatprep.subr.mxu0 0.0
    %1320 = vmatpush1.msra.mxu0 0.0
    %1321 = vmatprep.subr.mxu0 0.0
    %1322 = vmatpush1.msra.mxu0 0.0
    %1323 = vmatprep.subr.mxu0 0.0
    %1324 = vmatpush1.msra.mxu0 0.0
    %1325 = vmatprep.subr.mxu0 0.0
    %1326 = vmatpush1.msra.mxu0 0.0
    %1327 = vmatprep.subr.mxu0 0.0
    %1328 = vmatpush1.msra.mxu0 0.0
    %1329 = vmatprep.subr.mxu0 0.0
    %1330 = vmatpush1.msra.mxu0 0.0
    %1331 = vmatprep.subr.mxu0 0.0
    %1332 = vmatpush1.msra.mxu0 0.0
    %1333 = vmatprep.subr.mxu0 0.0
    %1334 = vmatpush1.msra.mxu0 0.0
    %1335 = vmatprep.subr.mxu0 0.0
    %1336 = vmatpush1.msra.mxu0 0.0
    %1337 = vmatprep.subr.mxu0 0.0
    %1338 = vmatpush1.msra.mxu0 0.0
    %1339 = vmatprep.subr.mxu0 0.0
    %1340 = vmatpush1.msra.mxu0 0.0
    %1341 = vmatprep.subr.mxu0 0.0
    %1342 = vmatpush1.msra.mxu0 0.0
    %1343 = vmatprep.subr.mxu0 0.0
    %1344 = vmatpush1.msra.mxu0 0.0
    %1345 = vmatprep.mubr.f32.mxu0 0.0
    %1346 = vmatmul.mubr.f32.gmra.mrb[0].mxu0 %v1279
    %v1347 = vpop.f32.mrb[0].mxu0
    %v1348 = vadd.f32 0.0, %v1347
    %v1349 = vpop.f32.mrb[0].mxu0
    %v1350 = vadd.f32 0.0, %v1349
    %1351 = vdwg.mxu0
    %v1353 = vrot.slane %v1348, 2
    %v1355 = vadd.f32 %v201, %v1353
    %v1356 = vxor.u32 %v1355, 2147483648
    %v1357 = vmul.f32 %v1356, 1.442695
    %v1358 = vpow.pop %v1357
    %v1359 = vadd.f32 %v1358, 1.0
    %v1360 = vrcp.pop %v1359
    %v1361 = vmul.f32 1.0, %v1360
    %v1362 = vtanh.pop %v1355
    %v1364 = vrot.slane %v1224, 6
    %v1366 = vmul.f32 %v1361, %v1364
    %1368 = vrot.lane.b32.xlu0 %v1362, 64
    %v1369 = vpop.permute.xlu0 %1368
    %v1371 = vmul.f32 %v1361, %v1369
    %1373 = vrot.lane.b32.xlu0 %v1371, 32
    %v1374 = vpop.permute.xlu0 %1373
    %v1376 = vadd.f32 %v1366, %v1374
    %v1377 = vtanh.pop %v1376
    %1379 = vrot.lane.b32.xlu0 %v1377, 64
    %v1380 = vpop.permute.xlu0 %1379
    %v1382 = vmul.f32 %v1361, %v1380
    %v1383 = vadd.f32 %v197, %v1350
    %v1384 = vxor.u32 %v1383, 2147483648
    %v1385 = vmul.f32 %v1384, 1.442695
    %v1386 = vpow.pop %v1385
    %v1387 = vadd.f32 %v1386, 1.0
    %v1388 = vrcp.pop %v1387
    %v1389 = vmul.f32 1.0, %v1388
    %v1390 = vtanh.pop %v1383
    %v1392 = vrot.slane %v1255, 2
    %v1394 = vmul.f32 %v1389, %v1392
    %1396 = vrot.lane.b32.xlu0 %v1390, 64
    %v1397 = vpop.permute.xlu0 %1396
    %v1399 = vmul.f32 %v1389, %v1397
    %1401 = vrot.lane.b32.xlu0 %v1399, 32
    %v1402 = vpop.permute.xlu0 %1401
    %v1404 = vadd.f32 %v1394, %v1402
    %v1405 = vtanh.pop %v1404
    %1407 = vrot.lane.b32.xlu0 %v1405, 64
    %v1408 = vpop.permute.xlu0 %1407
    %v1410 = vmul.f32 %v1389, %v1408
    %1412 = vrot.lane.b32.xlu0 %v1382, 32
    %v1413 = vpop.permute.xlu0 %1412
    %1415 = vst.msk [vmem:[#allocation2 + $0x8] sm:$0xc0] %vm812, %v1413
    %1417 = vrot.lane.b32.xlu0 %v1410, 64
    %v1418 = vpop.permute.xlu0 %1417
    %1420 = vst.msk [vmem:[#allocation2] sm:$0x3] %vm818, %v1418
    %v1421 = vld [vmem:[#allocation2] sm:$0xff]
    %v1422 = vld [vmem:[#allocation2 + $0x8] sm:$0xff]
    %v1423 = vld [vmem:[#allocation4] sm:$0xff]
    %v1424 = vld [vmem:[#allocation4 + $0x8] sm:$0xff]
    %v1425 = vld [vmem:[#allocation4 + $0x10] sm:$0xff]
    %v1426 = vld [vmem:[#allocation4 + $0x18] sm:$0xff]
    %v1427 = vld [vmem:[#allocation4 + $0x20] sm:$0xff]
    %v1428 = vld [vmem:[#allocation4 + $0x28] sm:$0xff]
    %v1429 = vld [vmem:[#allocation4 + $0x30] sm:$0xff]
    %v1430 = vld [vmem:[#allocation4 + $0x38] sm:$0xff]
    %v1431 = vld [vmem:[#allocation4 + $0x40] sm:$0xff]
    %v1432 = vld [vmem:[#allocation4 + $0x48] sm:$0xff]
    %v1433 = vld [vmem:[#allocation4 + $0x50] sm:$0xff]
    %v1434 = vld [vmem:[#allocation4 + $0x58] sm:$0xff]
    %v1435 = vld [vmem:[#allocation4 + $0x60] sm:$0xff]
    %v1436 = vld [vmem:[#allocation4 + $0x68] sm:$0xff]
    %v1437 = vld [vmem:[#allocation4 + $0x70] sm:$0xff]
    %v1438 = vld [vmem:[#allocation4 + $0x78] sm:$0xff]
    %v1439 = vld [vmem:[%s5] sm:$0x3]
    %v1441 = vlaneseq
    %v1442 = vshrl.u32 %v1441, 7
    %v1443 = vsub.s32 0, %v1442
    %v1444 = vrot.slane %v1439, %v1443
    %v1445 = vlaneseq
    %v1446 = vshrl.u32 %v1445, 7
    %v1447 = vsub.s32 1, %v1446
    %v1448 = vrot.slane %v1439, %v1447
    %v1452 = vsel %vm221, %v1421, 0
    %v1455 = vsel %vm221, %v1422, 0
    %1457 = vmatprep.subr.mxu0 %v1424
    %1458 = vmatpush1.msra.mxu0 %v1423
    %1459 = vmatprep.subr.mxu0 %v1426
    %1460 = vmatpush1.msra.mxu0 %v1425
    %1461 = vmatprep.subr.mxu0 %v1428
    %1462 = vmatpush1.msra.mxu0 %v1427
    %1463 = vmatprep.subr.mxu0 %v1430
    %1464 = vmatpush1.msra.mxu0 %v1429
    %1465 = vmatprep.subr.mxu0 %v1432
    %1466 = vmatpush1.msra.mxu0 %v1431
    %1467 = vmatprep.subr.mxu0 %v1434
    %1468 = vmatpush1.msra.mxu0 %v1433
    %1469 = vmatprep.subr.mxu0 %v1436
    %1470 = vmatpush1.msra.mxu0 %v1435
    %1471 = vmatprep.subr.mxu0 %v1438
    %1472 = vmatpush1.msra.mxu0 %v1437
    %1473 = vmatprep.subr.mxu0 0.0
    %1474 = vmatpush1.msra.mxu0 0.0
    %1475 = vmatprep.subr.mxu0 0.0
    %1476 = vmatpush1.msra.mxu0 0.0
    %1477 = vmatprep.subr.mxu0 0.0
    %1478 = vmatpush1.msra.mxu0 0.0
    %1479 = vmatprep.subr.mxu0 0.0
    %1480 = vmatpush1.msra.mxu0 0.0
    %1481 = vmatprep.subr.mxu0 0.0
    %1482 = vmatpush1.msra.mxu0 0.0
    %1483 = vmatprep.subr.mxu0 0.0
    %1484 = vmatpush1.msra.mxu0 0.0
    %1485 = vmatprep.subr.mxu0 0.0
    %1486 = vmatpush1.msra.mxu0 0.0
    %1487 = vmatprep.subr.mxu0 0.0
    %1488 = vmatpush1.msra.mxu0 0.0
    %1489 = vmatprep.subr.mxu0 0.0
    %1490 = vmatpush1.msra.mxu0 0.0
    %1491 = vmatprep.subr.mxu0 0.0
    %1492 = vmatpush1.msra.mxu0 0.0
    %1493 = vmatprep.subr.mxu0 0.0
    %1494 = vmatpush1.msra.mxu0 0.0
    %1495 = vmatprep.subr.mxu0 0.0
    %1496 = vmatpush1.msra.mxu0 0.0
    %1497 = vmatprep.subr.mxu0 0.0
    %1498 = vmatpush1.msra.mxu0 0.0
    %1499 = vmatprep.subr.mxu0 0.0
    %1500 = vmatpush1.msra.mxu0 0.0
    %1501 = vmatprep.subr.mxu0 0.0
    %1502 = vmatpush1.msra.mxu0 0.0
    %1503 = vmatprep.subr.mxu0 0.0
    %1504 = vmatpush1.msra.mxu0 0.0
    %1505 = vmatprep.subr.mxu0 0.0
    %1506 = vmatpush1.msra.mxu0 0.0
    %1507 = vmatprep.subr.mxu0 0.0
    %1508 = vmatpush1.msra.mxu0 0.0
    %1509 = vmatprep.subr.mxu0 0.0
    %1510 = vmatpush1.msra.mxu0 0.0
    %1511 = vmatprep.subr.mxu0 0.0
    %1512 = vmatpush1.msra.mxu0 0.0
    %1513 = vmatprep.subr.mxu0 0.0
    %1514 = vmatpush1.msra.mxu0 0.0
    %1515 = vmatprep.subr.mxu0 0.0
    %1516 = vmatpush1.msra.mxu0 0.0
    %1517 = vmatprep.subr.mxu0 0.0
    %1518 = vmatpush1.msra.mxu0 0.0
    %1519 = vmatprep.subr.mxu0 0.0
    %1520 = vmatpush1.msra.mxu0 0.0
    %1521 = vmatprep.mubr.f32.mxu0 0.0
    %1522 = vmatmul.mubr.f32.gmra.mrb[0].mxu0 %v1452
    %v1523 = vpop.f32.mrb[0].mxu0
    %v1524 = vadd.f32 %v1444, %v1523
    %v1525 = vpop.f32.mrb[0].mxu0
    %v1526 = vadd.f32 %v1448, %v1525
    %1527 = vmatprep.mubr.f32.mxu0 0.0
    %1528 = vmatmul.mubr.f32.gmra.mrb[0].mxu0 %v1455
    %v1529 = vpop.f32.mrb[0].mxu0
    %v1530 = vadd.f32 %v1444, %v1529
    %v1531 = vpop.f32.mrb[0].mxu0
    %v1532 = vadd.f32 %v1448, %v1531
    %1533 = vdwg.mxu0
    %v1534 = vld [vmem:[#allocation7] sm:$0xff]
    %v1535 = vld [vmem:[#allocation7 + $0x8] sm:$0xff]
    %v1536 = vld [vmem:[#allocation7 + $0x10] sm:$0xff]
    %v1537 = vld [vmem:[#allocation7 + $0x18] sm:$0xff]
    %v1538 = vld [vmem:[#allocation7 + $0x20] sm:$0xff]
    %v1539 = vld [vmem:[#allocation7 + $0x28] sm:$0xff]
    %v1540 = vld [vmem:[#allocation7 + $0x30] sm:$0xff]
    %v1541 = vld [vmem:[#allocation7 + $0x38] sm:$0xff]
    %v1542 = vld [vmem:[#allocation7 + $0x40] sm:$0xff]
    %v1543 = vld [vmem:[#allocation7 + $0x48] sm:$0xff]
    %v1544 = vld [vmem:[#allocation7 + $0x50] sm:$0xff]
    %v1545 = vld [vmem:[#allocation7 + $0x58] sm:$0xff]
    %v1546 = vld [vmem:[#allocation7 + $0x60] sm:$0xff]
    %v1547 = vld [vmem:[#allocation7 + $0x68] sm:$0xff]
    %v1548 = vld [vmem:[#allocation7 + $0x70] sm:$0xff]
    %v1549 = vld [vmem:[#allocation7 + $0x78] sm:$0xff]
    %1550 = vmatprep.subr.mxu0 %v1535
    %1551 = vmatpush1.msra.mxu0 %v1534
    %1552 = vmatprep.subr.mxu0 %v1537
    %1553 = vmatpush1.msra.mxu0 %v1536
    %1554 = vmatprep.subr.mxu0 %v1539
    %1555 = vmatpush1.msra.mxu0 %v1538
    %1556 = vmatprep.subr.mxu0 %v1541
    %1557 = vmatpush1.msra.mxu0 %v1540
    %1558 = vmatprep.subr.mxu0 %v1543
    %1559 = vmatpush1.msra.mxu0 %v1542
    %1560 = vmatprep.subr.mxu0 %v1545
    %1561 = vmatpush1.msra.mxu0 %v1544
    %1562 = vmatprep.subr.mxu0 %v1547
    %1563 = vmatpush1.msra.mxu0 %v1546
    %1564 = vmatprep.subr.mxu0 %v1549
    %1565 = vmatpush1.msra.mxu0 %v1548
    %1566 = vmatprep.subr.mxu0 0.0
    %1567 = vmatpush1.msra.mxu0 0.0
    %1568 = vmatprep.subr.mxu0 0.0
    %1569 = vmatpush1.msra.mxu0 0.0
    %1570 = vmatprep.subr.mxu0 0.0
    %1571 = vmatpush1.msra.mxu0 0.0
    %1572 = vmatprep.subr.mxu0 0.0
    %1573 = vmatpush1.msra.mxu0 0.0
    %1574 = vmatprep.subr.mxu0 0.0
    %1575 = vmatpush1.msra.mxu0 0.0
    %1576 = vmatprep.subr.mxu0 0.0
    %1577 = vmatpush1.msra.mxu0 0.0
    %1578 = vmatprep.subr.mxu0 0.0
    %1579 = vmatpush1.msra.mxu0 0.0
    %1580 = vmatprep.subr.mxu0 0.0
    %1581 = vmatpush1.msra.mxu0 0.0
    %1582 = vmatprep.subr.mxu0 0.0
    %1583 = vmatpush1.msra.mxu0 0.0
    %1584 = vmatprep.subr.mxu0 0.0
    %1585 = vmatpush1.msra.mxu0 0.0
    %1586 = vmatprep.subr.mxu0 0.0
    %1587 = vmatpush1.msra.mxu0 0.0
    %1588 = vmatprep.subr.mxu0 0.0
    %1589 = vmatpush1.msra.mxu0 0.0
    %1590 = vmatprep.subr.mxu0 0.0
    %1591 = vmatpush1.msra.mxu0 0.0
    %1592 = vmatprep.subr.mxu0 0.0
    %1593 = vmatpush1.msra.mxu0 0.0
    %1594 = vmatprep.subr.mxu0 0.0
    %1595 = vmatpush1.msra.mxu0 0.0
    %1596 = vmatprep.subr.mxu0 0.0
    %1597 = vmatpush1.msra.mxu0 0.0
    %1598 = vmatprep.subr.mxu0 0.0
    %1599 = vmatpush1.msra.mxu0 0.0
    %1600 = vmatprep.subr.mxu0 0.0
    %1601 = vmatpush1.msra.mxu0 0.0
    %1602 = vmatprep.subr.mxu0 0.0
    %1603 = vmatpush1.msra.mxu0 0.0
    %1604 = vmatprep.subr.mxu0 0.0
    %1605 = vmatpush1.msra.mxu0 0.0
    %1606 = vmatprep.subr.mxu0 0.0
    %1607 = vmatpush1.msra.mxu0 0.0
    %1608 = vmatprep.subr.mxu0 0.0
    %1609 = vmatpush1.msra.mxu0 0.0
    %1610 = vmatprep.subr.mxu0 0.0
    %1611 = vmatpush1.msra.mxu0 0.0
    %1612 = vmatprep.subr.mxu0 0.0
    %1613 = vmatpush1.msra.mxu0 0.0
    %1614 = vmatprep.mubr.f32.mxu0 0.0
    %1615 = vmatmul.mubr.f32.gmra.mrb[0].mxu0 %v223
    %v1616 = vpop.f32.mrb[0].mxu0
    %v1617 = vadd.f32 0.0, %v1616
    %v1618 = vpop.f32.mrb[0].mxu0
    %v1619 = vadd.f32 0.0, %v1618
    %1620 = vdwg.mxu0
    %v1621 = vadd.f32 %v1524, %v1617
    %v1622 = vxor.u32 %v1621, 2147483648
    %v1623 = vmul.f32 %v1622, 1.442695
    %v1624 = vpow.pop %v1623
    %v1625 = vadd.f32 %v1624, 1.0
    %v1626 = vrcp.pop %v1625
    %v1627 = vmul.f32 1.0, %v1626
    %v1628 = vtanh.pop %v1621
    %v1629 = vmul.f32 %v1627, 0.0
    %1631 = vrot.lane.b32.xlu0 %v1628, 64
    %v1632 = vpop.permute.xlu0 %1631
    %v1634 = vmul.f32 %v1627, %v1632
    %1636 = vrot.lane.b32.xlu0 %v1634, 32
    %v1637 = vpop.permute.xlu0 %1636
    %v1639 = vadd.f32 %v1629, %v1637
    %v1640 = vtanh.pop %v1639
    %1642 = vrot.lane.b32.xlu0 %v1640, 64
    %v1643 = vpop.permute.xlu0 %1642
    %v1645 = vmul.f32 %v1627, %v1643
    %v1647 = vrot.slane %v1619, 2
    %v1649 = vadd.f32 %v1532, %v1647
    %v1650 = vxor.u32 %v1649, 2147483648
    %v1651 = vmul.f32 %v1650, 1.442695
    %v1652 = vpow.pop %v1651
    %v1653 = vadd.f32 %v1652, 1.0
    %v1654 = vrcp.pop %v1653
    %v1655 = vmul.f32 1.0, %v1654
    %v1656 = vtanh.pop %v1649
    %v1657 = vmul.f32 %v1655, 0.0
    %1659 = vrot.lane.b32.xlu0 %v1656, 64
    %v1660 = vpop.permute.xlu0 %1659
    %v1662 = vmul.f32 %v1655, %v1660
    %1664 = vrot.lane.b32.xlu0 %v1662, 32
    %v1665 = vpop.permute.xlu0 %1664
    %v1667 = vadd.f32 %v1657, %v1665
    %v1668 = vtanh.pop %v1667
    %1670 = vrot.lane.b32.xlu0 %v1668, 64
    %v1671 = vpop.permute.xlu0 %1670
    %v1673 = vmul.f32 %v1655, %v1671
    %1675 = vrot.lane.b32.xlu0 %v1645, 32
    %v1676 = vpop.permute.xlu0 %1675
    %1678 = vst.msk [vmem:[#allocation3] sm:$0x3] %vm353, %v1676
    %1680 = vrot.lane.b32.xlu0 %v1673, 64
    %v1681 = vpop.permute.xlu0 %1680
    %1683 = vst.msk [vmem:[#allocation3 + $0x8] sm:$0xc0] %vm359, %v1681
    %v1684 = vrot.slane %v1673, 6
    %1685 = vrot.lane.b32.xlu0 %v1684, 64
    %v1686 = vpop.permute.xlu0 %1685
    %v1688 = vsel %vm365, %v1676, %v1686
    %v1690 = vsel %vm221, %v1688, 0
    %1692 = vmatprep.subr.mxu0 %v1535
    %1693 = vmatpush1.msra.mxu0 %v1534
    %1694 = vmatprep.subr.mxu0 %v1537
    %1695 = vmatpush1.msra.mxu0 %v1536
    %1696 = vmatprep.subr.mxu0 %v1539
    %1697 = vmatpush1.msra.mxu0 %v1538
    %1698 = vmatprep.subr.mxu0 %v1541
    %1699 = vmatpush1.msra.mxu0 %v1540
    %1700 = vmatprep.subr.mxu0 %v1543
    %1701 = vmatpush1.msra.mxu0 %v1542
    %1702 = vmatprep.subr.mxu0 %v1545
    %1703 = vmatpush1.msra.mxu0 %v1544
    %1704 = vmatprep.subr.mxu0 %v1547
    %1705 = vmatpush1.msra.mxu0 %v1546
    %1706 = vmatprep.subr.mxu0 %v1549
    %1707 = vmatpush1.msra.mxu0 %v1548
    %1708 = vmatprep.subr.mxu0 0.0
    %1709 = vmatpush1.msra.mxu0 0.0
    %1710 = vmatprep.subr.mxu0 0.0
    %1711 = vmatpush1.msra.mxu0 0.0
    %1712 = vmatprep.subr.mxu0 0.0
    %1713 = vmatpush1.msra.mxu0 0.0
    %1714 = vmatprep.subr.mxu0 0.0
    %1715 = vmatpush1.msra.mxu0 0.0
    %1716 = vmatprep.subr.mxu0 0.0
    %1717 = vmatpush1.msra.mxu0 0.0
    %1718 = vmatprep.subr.mxu0 0.0
    %1719 = vmatpush1.msra.mxu0 0.0
    %1720 = vmatprep.subr.mxu0 0.0
    %1721 = vmatpush1.msra.mxu0 0.0
    %1722 = vmatprep.subr.mxu0 0.0
    %1723 = vmatpush1.msra.mxu0 0.0
    %1724 = vmatprep.subr.mxu0 0.0
    %1725 = vmatpush1.msra.mxu0 0.0
    %1726 = vmatprep.subr.mxu0 0.0
    %1727 = vmatpush1.msra.mxu0 0.0
    %1728 = vmatprep.subr.mxu0 0.0
    %1729 = vmatpush1.msra.mxu0 0.0
    %1730 = vmatprep.subr.mxu0 0.0
    %1731 = vmatpush1.msra.mxu0 0.0
    %1732 = vmatprep.subr.mxu0 0.0
    %1733 = vmatpush1.msra.mxu0 0.0
    %1734 = vmatprep.subr.mxu0 0.0
    %1735 = vmatpush1.msra.mxu0 0.0
    %1736 = vmatprep.subr.mxu0 0.0
    %1737 = vmatpush1.msra.mxu0 0.0
    %1738 = vmatprep.subr.mxu0 0.0
    %1739 = vmatpush1.msra.mxu0 0.0
    %1740 = vmatprep.subr.mxu0 0.0
    %1741 = vmatpush1.msra.mxu0 0.0
    %1742 = vmatprep.subr.mxu0 0.0
    %1743 = vmatpush1.msra.mxu0 0.0
    %1744 = vmatprep.subr.mxu0 0.0
    %1745 = vmatpush1.msra.mxu0 0.0
    %1746 = vmatprep.subr.mxu0 0.0
    %1747 = vmatpush1.msra.mxu0 0.0
    %1748 = vmatprep.subr.mxu0 0.0
    %1749 = vmatpush1.msra.mxu0 0.0
    %1750 = vmatprep.subr.mxu0 0.0
    %1751 = vmatpush1.msra.mxu0 0.0
    %1752 = vmatprep.subr.mxu0 0.0
    %1753 = vmatpush1.msra.mxu0 0.0
    %1754 = vmatprep.subr.mxu0 0.0
    %1755 = vmatpush1.msra.mxu0 0.0
    %1756 = vmatprep.mubr.f32.mxu0 0.0
    %1757 = vmatmul.mubr.f32.gmra.mrb[0].mxu0 %v1690
    %v1758 = vpop.f32.mrb[0].mxu0
    %v1759 = vadd.f32 0.0, %v1758
    %v1760 = vpop.f32.mrb[0].mxu0
    %v1761 = vadd.f32 0.0, %v1760
    %1762 = vdwg.mxu0
    %v1764 = vrot.slane %v1759, 6
    %v1766 = vadd.f32 %v1524, %v1764
    %v1767 = vxor.u32 %v1766, 2147483648
    %v1768 = vmul.f32 %v1767, 1.442695
    %v1769 = vpow.pop %v1768
    %v1770 = vadd.f32 %v1769, 1.0
    %v1771 = vrcp.pop %v1770
    %v1772 = vmul.f32 1.0, %v1771
    %v1773 = vtanh.pop %v1766
    %v1775 = vrot.slane %v1639, 6
    %v1777 = vmul.f32 %v1772, %v1775
    %1779 = vrot.lane.b32.xlu0 %v1773, 64
    %v1780 = vpop.permute.xlu0 %1779
    %v1782 = vmul.f32 %v1772, %v1780
    %1784 = vrot.lane.b32.xlu0 %v1782, 32
    %v1785 = vpop.permute.xlu0 %1784
    %v1787 = vadd.f32 %v1777, %v1785
    %v1788 = vtanh.pop %v1787
    %1790 = vrot.lane.b32.xlu0 %v1788, 64
    %v1791 = vpop.permute.xlu0 %1790
    %v1793 = vmul.f32 %v1772, %v1791
    %v1795 = vrot.slane %v1761, 4
    %v1797 = vadd.f32 %v1532, %v1795
    %v1798 = vxor.u32 %v1797, 2147483648
    %v1799 = vmul.f32 %v1798, 1.442695
    %v1800 = vpow.pop %v1799
    %v1801 = vadd.f32 %v1800, 1.0
    %v1802 = vrcp.pop %v1801
    %v1803 = vmul.f32 1.0, %v1802
    %v1804 = vtanh.pop %v1797
    %v1806 = vrot.slane %v1667, 2
    %v1808 = vmul.f32 %v1803, %v1806
    %1810 = vrot.lane.b32.xlu0 %v1804, 64
    %v1811 = vpop.permute.xlu0 %1810
    %v1813 = vmul.f32 %v1803, %v1811
    %1815 = vrot.lane.b32.xlu0 %v1813, 32
    %v1816 = vpop.permute.xlu0 %1815
    %v1818 = vadd.f32 %v1808, %v1816
    %v1819 = vtanh.pop %v1818
    %1821 = vrot.lane.b32.xlu0 %v1819, 64
    %v1822 = vpop.permute.xlu0 %1821
    %v1824 = vmul.f32 %v1803, %v1822
    %1826 = vrot.lane.b32.xlu0 %v1793, 32
    %v1827 = vpop.permute.xlu0 %1826
    %1829 = vst.msk [vmem:[#allocation3] sm:$0xc] %vm507, %v1827
    %1831 = vrot.lane.b32.xlu0 %v1824, 64
    %v1832 = vpop.permute.xlu0 %1831
    %1834 = vst.msk [vmem:[#allocation3 + $0x8] sm:$0x30] %vm513, %v1832
    %v1835 = vrot.slane %v1824, 2
    %1836 = vrot.lane.b32.xlu0 %v1835, 64
    %v1837 = vpop.permute.xlu0 %1836
    %v1839 = vsel %vm365, %v1827, %v1837
    %v1841 = vrot.slane %v1839, 2
    %v1842 = vsel %vm221, %v1841, 0
    %1844 = vmatprep.subr.mxu0 %v1535
    %1845 = vmatpush1.msra.mxu0 %v1534
    %1846 = vmatprep.subr.mxu0 %v1537
    %1847 = vmatpush1.msra.mxu0 %v1536
    %1848 = vmatprep.subr.mxu0 %v1539
    %1849 = vmatpush1.msra.mxu0 %v1538
    %1850 = vmatprep.subr.mxu0 %v1541
    %1851 = vmatpush1.msra.mxu0 %v1540
    %1852 = vmatprep.subr.mxu0 %v1543
    %1853 = vmatpush1.msra.mxu0 %v1542
    %1854 = vmatprep.subr.mxu0 %v1545
    %1855 = vmatpush1.msra.mxu0 %v1544
    %1856 = vmatprep.subr.mxu0 %v1547
    %1857 = vmatpush1.msra.mxu0 %v1546
    %1858 = vmatprep.subr.mxu0 %v1549
    %1859 = vmatpush1.msra.mxu0 %v1548
    %1860 = vmatprep.subr.mxu0 0.0
    %1861 = vmatpush1.msra.mxu0 0.0
    %1862 = vmatprep.subr.mxu0 0.0
    %1863 = vmatpush1.msra.mxu0 0.0
    %1864 = vmatprep.subr.mxu0 0.0
    %1865 = vmatpush1.msra.mxu0 0.0
    %1866 = vmatprep.subr.mxu0 0.0
    %1867 = vmatpush1.msra.mxu0 0.0
    %1868 = vmatprep.subr.mxu0 0.0
    %1869 = vmatpush1.msra.mxu0 0.0
    %1870 = vmatprep.subr.mxu0 0.0
    %1871 = vmatpush1.msra.mxu0 0.0
    %1872 = vmatprep.subr.mxu0 0.0
    %1873 = vmatpush1.msra.mxu0 0.0
    %1874 = vmatprep.subr.mxu0 0.0
    %1875 = vmatpush1.msra.mxu0 0.0
    %1876 = vmatprep.subr.mxu0 0.0
    %1877 = vmatpush1.msra.mxu0 0.0
    %1878 = vmatprep.subr.mxu0 0.0
    %1879 = vmatpush1.msra.mxu0 0.0
    %1880 = vmatprep.subr.mxu0 0.0
    %1881 = vmatpush1.msra.mxu0 0.0
    %1882 = vmatprep.subr.mxu0 0.0
    %1883 = vmatpush1.msra.mxu0 0.0
    %1884 = vmatprep.subr.mxu0 0.0
    %1885 = vmatpush1.msra.mxu0 0.0
    %1886 = vmatprep.subr.mxu0 0.0
    %1887 = vmatpush1.msra.mxu0 0.0
    %1888 = vmatprep.subr.mxu0 0.0
    %1889 = vmatpush1.msra.mxu0 0.0
    %1890 = vmatprep.subr.mxu0 0.0
    %1891 = vmatpush1.msra.mxu0 0.0
    %1892 = vmatprep.subr.mxu0 0.0
    %1893 = vmatpush1.msra.mxu0 0.0
    %1894 = vmatprep.subr.mxu0 0.0
    %1895 = vmatpush1.msra.mxu0 0.0
    %1896 = vmatprep.subr.mxu0 0.0
    %1897 = vmatpush1.msra.mxu0 0.0
    %1898 = vmatprep.subr.mxu0 0.0
    %1899 = vmatpush1.msra.mxu0 0.0
    %1900 = vmatprep.subr.mxu0 0.0
    %1901 = vmatpush1.msra.mxu0 0.0
    %1902 = vmatprep.subr.mxu0 0.0
    %1903 = vmatpush1.msra.mxu0 0.0
    %1904 = vmatprep.subr.mxu0 0.0
    %1905 = vmatpush1.msra.mxu0 0.0
    %1906 = vmatprep.subr.mxu0 0.0
    %1907 = vmatpush1.msra.mxu0 0.0
    %1908 = vmatprep.mubr.f32.mxu0 0.0
    %1909 = vmatmul.mubr.f32.gmra.mrb[0].mxu0 %v1842
    %v1910 = vpop.f32.mrb[0].mxu0
    %v1911 = vadd.f32 0.0, %v1910
    %v1912 = vpop.f32.mrb[0].mxu0
    %v1913 = vadd.f32 0.0, %v1912
    %1914 = vdwg.mxu0
    %v1916 = vrot.slane %v1911, 4
    %v1918 = vadd.f32 %v1524, %v1916
    %v1919 = vxor.u32 %v1918, 2147483648
    %v1920 = vmul.f32 %v1919, 1.442695
    %v1921 = vpow.pop %v1920
    %v1922 = vadd.f32 %v1921, 1.0
    %v1923 = vrcp.pop %v1922
    %v1924 = vmul.f32 1.0, %v1923
    %v1925 = vtanh.pop %v1918
    %v1927 = vrot.slane %v1787, 6
    %v1929 = vmul.f32 %v1924, %v1927
    %1931 = vrot.lane.b32.xlu0 %v1925, 64
    %v1932 = vpop.permute.xlu0 %1931
    %v1934 = vmul.f32 %v1924, %v1932
    %1936 = vrot.lane.b32.xlu0 %v1934, 32
    %v1937 = vpop.permute.xlu0 %1936
    %v1939 = vadd.f32 %v1929, %v1937
    %v1940 = vtanh.pop %v1939
    %1942 = vrot.lane.b32.xlu0 %v1940, 64
    %v1943 = vpop.permute.xlu0 %1942
    %v1945 = vmul.f32 %v1924, %v1943
    %v1947 = vrot.slane %v1913, 6
    %v1949 = vadd.f32 %v1532, %v1947
    %v1950 = vxor.u32 %v1949, 2147483648
    %v1951 = vmul.f32 %v1950, 1.442695
    %v1952 = vpow.pop %v1951
    %v1953 = vadd.f32 %v1952, 1.0
    %v1954 = vrcp.pop %v1953
    %v1955 = vmul.f32 1.0, %v1954
    %v1956 = vtanh.pop %v1949
    %v1958 = vrot.slane %v1818, 2
    %v1960 = vmul.f32 %v1955, %v1958
    %1962 = vrot.lane.b32.xlu0 %v1956, 64
    %v1963 = vpop.permute.xlu0 %1962
    %v1965 = vmul.f32 %v1955, %v1963
    %1967 = vrot.lane.b32.xlu0 %v1965, 32
    %v1968 = vpop.permute.xlu0 %1967
    %v1970 = vadd.f32 %v1960, %v1968
    %v1971 = vtanh.pop %v1970
    %1973 = vrot.lane.b32.xlu0 %v1971, 64
    %v1974 = vpop.permute.xlu0 %1973
    %v1976 = vmul.f32 %v1955, %v1974
    %1978 = vrot.lane.b32.xlu0 %v1945, 32
    %v1979 = vpop.permute.xlu0 %1978
    %1981 = vst.msk [vmem:[#allocation3] sm:$0x30] %vm661, %v1979
    %1983 = vrot.lane.b32.xlu0 %v1976, 64
    %v1984 = vpop.permute.xlu0 %1983
    %1986 = vst.msk [vmem:[#allocation3 + $0x8] sm:$0xc] %vm667, %v1984
    %v1987 = vrot.slane %v1976, 6
    %1988 = vrot.lane.b32.xlu0 %v1987, 64
    %v1989 = vpop.permute.xlu0 %1988
    %v1991 = vsel %vm365, %v1979, %v1989
    %v1993 = vrot.slane %v1991, 4
    %v1994 = vsel %vm221, %v1993, 0
    %1996 = vmatprep.subr.mxu0 %v1535
    %1997 = vmatpush1.msra.mxu0 %v1534
    %1998 = vmatprep.subr.mxu0 %v1537
    %1999 = vmatpush1.msra.mxu0 %v1536
    %2000 = vmatprep.subr.mxu0 %v1539
    %2001 = vmatpush1.msra.mxu0 %v1538
    %2002 = vmatprep.subr.mxu0 %v1541
    %2003 = vmatpush1.msra.mxu0 %v1540
    %2004 = vmatprep.subr.mxu0 %v1543
    %2005 = vmatpush1.msra.mxu0 %v1542
    %2006 = vmatprep.subr.mxu0 %v1545
    %2007 = vmatpush1.msra.mxu0 %v1544
    %2008 = vmatprep.subr.mxu0 %v1547
    %2009 = vmatpush1.msra.mxu0 %v1546
    %2010 = vmatprep.subr.mxu0 %v1549
    %2011 = vmatpush1.msra.mxu0 %v1548
    %2012 = vmatprep.subr.mxu0 0.0
    %2013 = vmatpush1.msra.mxu0 0.0
    %2014 = vmatprep.subr.mxu0 0.0
    %2015 = vmatpush1.msra.mxu0 0.0
    %2016 = vmatprep.subr.mxu0 0.0
    %2017 = vmatpush1.msra.mxu0 0.0
    %2018 = vmatprep.subr.mxu0 0.0
    %2019 = vmatpush1.msra.mxu0 0.0
    %2020 = vmatprep.subr.mxu0 0.0
    %2021 = vmatpush1.msra.mxu0 0.0
    %2022 = vmatprep.subr.mxu0 0.0
    %2023 = vmatpush1.msra.mxu0 0.0
    %2024 = vmatprep.subr.mxu0 0.0
    %2025 = vmatpush1.msra.mxu0 0.0
    %2026 = vmatprep.subr.mxu0 0.0
    %2027 = vmatpush1.msra.mxu0 0.0
    %2028 = vmatprep.subr.mxu0 0.0
    %2029 = vmatpush1.msra.mxu0 0.0
    %2030 = vmatprep.subr.mxu0 0.0
    %2031 = vmatpush1.msra.mxu0 0.0
    %2032 = vmatprep.subr.mxu0 0.0
    %2033 = vmatpush1.msra.mxu0 0.0
    %2034 = vmatprep.subr.mxu0 0.0
    %2035 = vmatpush1.msra.mxu0 0.0
    %2036 = vmatprep.subr.mxu0 0.0
    %2037 = vmatpush1.msra.mxu0 0.0
    %2038 = vmatprep.subr.mxu0 0.0
    %2039 = vmatpush1.msra.mxu0 0.0
    %2040 = vmatprep.subr.mxu0 0.0
    %2041 = vmatpush1.msra.mxu0 0.0
    %2042 = vmatprep.subr.mxu0 0.0
    %2043 = vmatpush1.msra.mxu0 0.0
    %2044 = vmatprep.subr.mxu0 0.0
    %2045 = vmatpush1.msra.mxu0 0.0
    %2046 = vmatprep.subr.mxu0 0.0
    %2047 = vmatpush1.msra.mxu0 0.0
    %2048 = vmatprep.subr.mxu0 0.0
    %2049 = vmatpush1.msra.mxu0 0.0
    %2050 = vmatprep.subr.mxu0 0.0
    %2051 = vmatpush1.msra.mxu0 0.0
    %2052 = vmatprep.subr.mxu0 0.0
    %2053 = vmatpush1.msra.mxu0 0.0
    %2054 = vmatprep.subr.mxu0 0.0
    %2055 = vmatpush1.msra.mxu0 0.0
    %2056 = vmatprep.subr.mxu0 0.0
    %2057 = vmatpush1.msra.mxu0 0.0
    %2058 = vmatprep.subr.mxu0 0.0
    %2059 = vmatpush1.msra.mxu0 0.0
    %2060 = vmatprep.mubr.f32.mxu0 0.0
    %2061 = vmatmul.mubr.f32.gmra.mrb[0].mxu0 %v1994
    %v2062 = vpop.f32.mrb[0].mxu0
    %v2063 = vadd.f32 0.0, %v2062
    %v2064 = vpop.f32.mrb[0].mxu0
    %v2065 = vadd.f32 0.0, %v2064
    %2066 = vdwg.mxu0
    %v2068 = vrot.slane %v2063, 2
    %v2070 = vadd.f32 %v1524, %v2068
    %v2071 = vxor.u32 %v2070, 2147483648
    %v2072 = vmul.f32 %v2071, 1.442695
    %v2073 = vpow.pop %v2072
    %v2074 = vadd.f32 %v2073, 1.0
    %v2075 = vrcp.pop %v2074
    %v2076 = vmul.f32 1.0, %v2075
    %v2077 = vtanh.pop %v2070
    %v2079 = vrot.slane %v1939, 6
    %v2081 = vmul.f32 %v2076, %v2079
    %2083 = vrot.lane.b32.xlu0 %v2077, 64
    %v2084 = vpop.permute.xlu0 %2083
    %v2086 = vmul.f32 %v2076, %v2084
    %2088 = vrot.lane.b32.xlu0 %v2086, 32
    %v2089 = vpop.permute.xlu0 %2088
    %v2091 = vadd.f32 %v2081, %v2089
    %v2092 = vtanh.pop %v2091
    %2094 = vrot.lane.b32.xlu0 %v2092, 64
    %v2095 = vpop.permute.xlu0 %2094
    %v2097 = vmul.f32 %v2076, %v2095
    %v2098 = vadd.f32 %v1532, %v2065
    %v2099 = vxor.u32 %v2098, 2147483648
    %v2100 = vmul.f32 %v2099, 1.442695
    %v2101 = vpow.pop %v2100
    %v2102 = vadd.f32 %v2101, 1.0
    %v2103 = vrcp.pop %v2102
    %v2104 = vmul.f32 1.0, %v2103
    %v2105 = vtanh.pop %v2098
    %v2107 = vrot.slane %v1970, 2
    %v2109 = vmul.f32 %v2104, %v2107
    %2111 = vrot.lane.b32.xlu0 %v2105, 64
    %v2112 = vpop.permute.xlu0 %2111
    %v2114 = vmul.f32 %v2104, %v2112
    %2116 = vrot.lane.b32.xlu0 %v2114, 32
    %v2117 = vpop.permute.xlu0 %2116
    %v2119 = vadd.f32 %v2109, %v2117
    %v2120 = vtanh.pop %v2119
    %2122 = vrot.lane.b32.xlu0 %v2120, 64
    %v2123 = vpop.permute.xlu0 %2122
    %v2125 = vmul.f32 %v2104, %v2123
    %2127 = vrot.lane.b32.xlu0 %v2097, 32
    %v2128 = vpop.permute.xlu0 %2127
    %2130 = vst.msk [vmem:[#allocation3] sm:$0xc0] %vm812, %v2128
    %2132 = vrot.lane.b32.xlu0 %v2125, 64
    %v2133 = vpop.permute.xlu0 %2132
    %2135 = vst.msk [vmem:[#allocation3 + $0x8] sm:$0x3] %vm818, %v2133
    %v2136 = vrot.slane %v2125, 2
    %2137 = vrot.lane.b32.xlu0 %v2136, 64
    %v2138 = vpop.permute.xlu0 %2137
    %v2140 = vsel %vm365, %v2128, %v2138
    %v2142 = vrot.slane %v2140, 6
    %v2143 = vsel %vm221, %v2142, 0
    %2145 = vmatprep.subr.mxu0 %v1535
    %2146 = vmatpush1.msra.mxu0 %v1534
    %2147 = vmatprep.subr.mxu0 %v1537
    %2148 = vmatpush1.msra.mxu0 %v1536
    %2149 = vmatprep.subr.mxu0 %v1539
    %2150 = vmatpush1.msra.mxu0 %v1538
    %2151 = vmatprep.subr.mxu0 %v1541
    %2152 = vmatpush1.msra.mxu0 %v1540
    %2153 = vmatprep.subr.mxu0 %v1543
    %2154 = vmatpush1.msra.mxu0 %v1542
    %2155 = vmatprep.subr.mxu0 %v1545
    %2156 = vmatpush1.msra.mxu0 %v1544
    %2157 = vmatprep.subr.mxu0 %v1547
    %2158 = vmatpush1.msra.mxu0 %v1546
    %2159 = vmatprep.subr.mxu0 %v1549
    %2160 = vmatpush1.msra.mxu0 %v1548
    %2161 = vmatprep.subr.mxu0 0.0
    %2162 = vmatpush1.msra.mxu0 0.0
    %2163 = vmatprep.subr.mxu0 0.0
    %2164 = vmatpush1.msra.mxu0 0.0
    %2165 = vmatprep.subr.mxu0 0.0
    %2166 = vmatpush1.msra.mxu0 0.0
    %2167 = vmatprep.subr.mxu0 0.0
    %2168 = vmatpush1.msra.mxu0 0.0
    %2169 = vmatprep.subr.mxu0 0.0
    %2170 = vmatpush1.msra.mxu0 0.0
    %2171 = vmatprep.subr.mxu0 0.0
    %2172 = vmatpush1.msra.mxu0 0.0
    %2173 = vmatprep.subr.mxu0 0.0
    %2174 = vmatpush1.msra.mxu0 0.0
    %2175 = vmatprep.subr.mxu0 0.0
    %2176 = vmatpush1.msra.mxu0 0.0
    %2177 = vmatprep.subr.mxu0 0.0
    %2178 = vmatpush1.msra.mxu0 0.0
    %2179 = vmatprep.subr.mxu0 0.0
    %2180 = vmatpush1.msra.mxu0 0.0
    %2181 = vmatprep.subr.mxu0 0.0
    %2182 = vmatpush1.msra.mxu0 0.0
    %2183 = vmatprep.subr.mxu0 0.0
    %2184 = vmatpush1.msra.mxu0 0.0
    %2185 = vmatprep.subr.mxu0 0.0
    %2186 = vmatpush1.msra.mxu0 0.0
    %2187 = vmatprep.subr.mxu0 0.0
    %2188 = vmatpush1.msra.mxu0 0.0
    %2189 = vmatprep.subr.mxu0 0.0
    %2190 = vmatpush1.msra.mxu0 0.0
    %2191 = vmatprep.subr.mxu0 0.0
    %2192 = vmatpush1.msra.mxu0 0.0
    %2193 = vmatprep.subr.mxu0 0.0
    %2194 = vmatpush1.msra.mxu0 0.0
    %2195 = vmatprep.subr.mxu0 0.0
    %2196 = vmatpush1.msra.mxu0 0.0
    %2197 = vmatprep.subr.mxu0 0.0
    %2198 = vmatpush1.msra.mxu0 0.0
    %2199 = vmatprep.subr.mxu0 0.0
    %2200 = vmatpush1.msra.mxu0 0.0
    %2201 = vmatprep.subr.mxu0 0.0
    %2202 = vmatpush1.msra.mxu0 0.0
    %2203 = vmatprep.subr.mxu0 0.0
    %2204 = vmatpush1.msra.mxu0 0.0
    %2205 = vmatprep.subr.mxu0 0.0
    %2206 = vmatpush1.msra.mxu0 0.0
    %2207 = vmatprep.subr.mxu0 0.0
    %2208 = vmatpush1.msra.mxu0 0.0
    %2209 = vmatprep.mubr.f32.mxu0 0.0
    %2210 = vmatmul.mubr.f32.gmra.mrb[0].mxu0 %v2143
    %v2211 = vpop.f32.mrb[0].mxu0
    %v2212 = vadd.f32 0.0, %v2211
    %v2213 = vpop.f32.mrb[0].mxu0
    %v2214 = vadd.f32 0.0, %v2213
    %2215 = vdwg.mxu0
    %v2216 = vadd.f32 %v1530, %v2212
    %v2217 = vxor.u32 %v2216, 2147483648
    %v2218 = vmul.f32 %v2217, 1.442695
    %v2219 = vpow.pop %v2218
    %v2220 = vadd.f32 %v2219, 1.0
    %v2221 = vrcp.pop %v2220
    %v2222 = vmul.f32 1.0, %v2221
    %v2223 = vtanh.pop %v2216
    %v2225 = vrot.slane %v2091, 6
    %v2227 = vmul.f32 %v2222, %v2225
    %2229 = vrot.lane.b32.xlu0 %v2223, 64
    %v2230 = vpop.permute.xlu0 %2229
    %v2232 = vmul.f32 %v2222, %v2230
    %2234 = vrot.lane.b32.xlu0 %v2232, 32
    %v2235 = vpop.permute.xlu0 %2234
    %v2237 = vadd.f32 %v2227, %v2235
    %v2238 = vtanh.pop %v2237
    %2240 = vrot.lane.b32.xlu0 %v2238, 64
    %v2241 = vpop.permute.xlu0 %2240
    %v2243 = vmul.f32 %v2222, %v2241
    %v2245 = vrot.slane %v2214, 2
    %v2247 = vadd.f32 %v1526, %v2245
    %v2248 = vxor.u32 %v2247, 2147483648
    %v2249 = vmul.f32 %v2248, 1.442695
    %v2250 = vpow.pop %v2249
    %v2251 = vadd.f32 %v2250, 1.0
    %v2252 = vrcp.pop %v2251
    %v2253 = vmul.f32 1.0, %v2252
    %v2254 = vtanh.pop %v2247
    %v2256 = vrot.slane %v2119, 2
    %v2258 = vmul.f32 %v2253, %v2256
    %2260 = vrot.lane.b32.xlu0 %v2254, 64
    %v2261 = vpop.permute.xlu0 %2260
    %v2263 = vmul.f32 %v2253, %v2261
    %2265 = vrot.lane.b32.xlu0 %v2263, 32
    %v2266 = vpop.permute.xlu0 %2265
    %v2268 = vadd.f32 %v2258, %v2266
    %v2269 = vtanh.pop %v2268
    %2271 = vrot.lane.b32.xlu0 %v2269, 64
    %v2272 = vpop.permute.xlu0 %2271
    %v2274 = vmul.f32 %v2253, %v2272
    %2276 = vrot.lane.b32.xlu0 %v2243, 32
    %v2277 = vpop.permute.xlu0 %2276
    %2279 = vst.msk [vmem:[#allocation3 + $0x8] sm:$0x3] %vm353, %v2277
    %2281 = vrot.lane.b32.xlu0 %v2274, 64
    %v2282 = vpop.permute.xlu0 %2281
    %2284 = vst.msk [vmem:[#allocation3] sm:$0xc0] %vm359, %v2282
    %v2285 = vrot.slane %v2274, 6
    %2286 = vrot.lane.b32.xlu0 %v2285, 64
    %v2287 = vpop.permute.xlu0 %2286
    %v2289 = vsel %vm365, %v2277, %v2287
    %v2291 = vsel %vm221, %v2289, 0
    %2293 = vmatprep.subr.mxu0 %v1535
    %2294 = vmatpush1.msra.mxu0 %v1534
    %2295 = vmatprep.subr.mxu0 %v1537
    %2296 = vmatpush1.msra.mxu0 %v1536
    %2297 = vmatprep.subr.mxu0 %v1539
    %2298 = vmatpush1.msra.mxu0 %v1538
    %2299 = vmatprep.subr.mxu0 %v1541
    %2300 = vmatpush1.msra.mxu0 %v1540
    %2301 = vmatprep.subr.mxu0 %v1543
    %2302 = vmatpush1.msra.mxu0 %v1542
    %2303 = vmatprep.subr.mxu0 %v1545
    %2304 = vmatpush1.msra.mxu0 %v1544
    %2305 = vmatprep.subr.mxu0 %v1547
    %2306 = vmatpush1.msra.mxu0 %v1546
    %2307 = vmatprep.subr.mxu0 %v1549
    %2308 = vmatpush1.msra.mxu0 %v1548
    %2309 = vmatprep.subr.mxu0 0.0
    %2310 = vmatpush1.msra.mxu0 0.0
    %2311 = vmatprep.subr.mxu0 0.0
    %2312 = vmatpush1.msra.mxu0 0.0
    %2313 = vmatprep.subr.mxu0 0.0
    %2314 = vmatpush1.msra.mxu0 0.0
    %2315 = vmatprep.subr.mxu0 0.0
    %2316 = vmatpush1.msra.mxu0 0.0
    %2317 = vmatprep.subr.mxu0 0.0
    %2318 = vmatpush1.msra.mxu0 0.0
    %2319 = vmatprep.subr.mxu0 0.0
    %2320 = vmatpush1.msra.mxu0 0.0
    %2321 = vmatprep.subr.mxu0 0.0
    %2322 = vmatpush1.msra.mxu0 0.0
    %2323 = vmatprep.subr.mxu0 0.0
    %2324 = vmatpush1.msra.mxu0 0.0
    %2325 = vmatprep.subr.mxu0 0.0
    %2326 = vmatpush1.msra.mxu0 0.0
    %2327 = vmatprep.subr.mxu0 0.0
    %2328 = vmatpush1.msra.mxu0 0.0
    %2329 = vmatprep.subr.mxu0 0.0
    %2330 = vmatpush1.msra.mxu0 0.0
    %2331 = vmatprep.subr.mxu0 0.0
    %2332 = vmatpush1.msra.mxu0 0.0
    %2333 = vmatprep.subr.mxu0 0.0
    %2334 = vmatpush1.msra.mxu0 0.0
    %2335 = vmatprep.subr.mxu0 0.0
    %2336 = vmatpush1.msra.mxu0 0.0
    %2337 = vmatprep.subr.mxu0 0.0
    %2338 = vmatpush1.msra.mxu0 0.0
    %2339 = vmatprep.subr.mxu0 0.0
    %2340 = vmatpush1.msra.mxu0 0.0
    %2341 = vmatprep.subr.mxu0 0.0
    %2342 = vmatpush1.msra.mxu0 0.0
    %2343 = vmatprep.subr.mxu0 0.0
    %2344 = vmatpush1.msra.mxu0 0.0
    %2345 = vmatprep.subr.mxu0 0.0
    %2346 = vmatpush1.msra.mxu0 0.0
    %2347 = vmatprep.subr.mxu0 0.0
    %2348 = vmatpush1.msra.mxu0 0.0
    %2349 = vmatprep.subr.mxu0 0.0
    %2350 = vmatpush1.msra.mxu0 0.0
    %2351 = vmatprep.subr.mxu0 0.0
    %2352 = vmatpush1.msra.mxu0 0.0
    %2353 = vmatprep.subr.mxu0 0.0
    %2354 = vmatpush1.msra.mxu0 0.0
    %2355 = vmatprep.subr.mxu0 0.0
    %2356 = vmatpush1.msra.mxu0 0.0
    %2357 = vmatprep.mubr.f32.mxu0 0.0
    %2358 = vmatmul.mubr.f32.gmra.mrb[0].mxu0 %v2291
    %v2359 = vpop.f32.mrb[0].mxu0
    %v2360 = vadd.f32 0.0, %v2359
    %v2361 = vpop.f32.mrb[0].mxu0
    %v2362 = vadd.f32 0.0, %v2361
    %2363 = vdwg.mxu0
    %v2365 = vrot.slane %v2360, 6
    %v2367 = vadd.f32 %v1530, %v2365
    %v2368 = vxor.u32 %v2367, 2147483648
    %v2369 = vmul.f32 %v2368, 1.442695
    %v2370 = vpow.pop %v2369
    %v2371 = vadd.f32 %v2370, 1.0
    %v2372 = vrcp.pop %v2371
    %v2373 = vmul.f32 1.0, %v2372
    %v2374 = vtanh.pop %v2367
    %v2376 = vrot.slane %v2237, 6
    %v2378 = vmul.f32 %v2373, %v2376
    %2380 = vrot.lane.b32.xlu0 %v2374, 64
    %v2381 = vpop.permute.xlu0 %2380
    %v2383 = vmul.f32 %v2373, %v2381
    %2385 = vrot.lane.b32.xlu0 %v2383, 32
    %v2386 = vpop.permute.xlu0 %2385
    %v2388 = vadd.f32 %v2378, %v2386
    %v2389 = vtanh.pop %v2388
    %2391 = vrot.lane.b32.xlu0 %v2389, 64
    %v2392 = vpop.permute.xlu0 %2391
    %v2394 = vmul.f32 %v2373, %v2392
    %v2396 = vrot.slane %v2362, 4
    %v2398 = vadd.f32 %v1526, %v2396
    %v2399 = vxor.u32 %v2398, 2147483648
    %v2400 = vmul.f32 %v2399, 1.442695
    %v2401 = vpow.pop %v2400
    %v2402 = vadd.f32 %v2401, 1.0
    %v2403 = vrcp.pop %v2402
    %v2404 = vmul.f32 1.0, %v2403
    %v2405 = vtanh.pop %v2398
    %v2407 = vrot.slane %v2268, 2
    %v2409 = vmul.f32 %v2404, %v2407
    %2411 = vrot.lane.b32.xlu0 %v2405, 64
    %v2412 = vpop.permute.xlu0 %2411
    %v2414 = vmul.f32 %v2404, %v2412
    %2416 = vrot.lane.b32.xlu0 %v2414, 32
    %v2417 = vpop.permute.xlu0 %2416
    %v2419 = vadd.f32 %v2409, %v2417
    %v2420 = vtanh.pop %v2419
    %2422 = vrot.lane.b32.xlu0 %v2420, 64
    %v2423 = vpop.permute.xlu0 %2422
    %v2425 = vmul.f32 %v2404, %v2423
    %2427 = vrot.lane.b32.xlu0 %v2394, 32
    %v2428 = vpop.permute.xlu0 %2427
    %2430 = vst.msk [vmem:[#allocation3 + $0x8] sm:$0xc] %vm507, %v2428
    %2432 = vrot.lane.b32.xlu0 %v2425, 64
    %v2433 = vpop.permute.xlu0 %2432
    %2435 = vst.msk [vmem:[#allocation3] sm:$0x30] %vm513, %v2433
    %v2436 = vrot.slane %v2425, 2
    %2437 = vrot.lane.b32.xlu0 %v2436, 64
    %v2438 = vpop.permute.xlu0 %2437
    %v2440 = vsel %vm365, %v2428, %v2438
    %v2442 = vrot.slane %v2440, 2
    %v2443 = vsel %vm221, %v2442, 0
    %2445 = vmatprep.subr.mxu0 %v1535
    %2446 = vmatpush1.msra.mxu0 %v1534
    %2447 = vmatprep.subr.mxu0 %v1537
    %2448 = vmatpush1.msra.mxu0 %v1536
    %2449 = vmatprep.subr.mxu0 %v1539
    %2450 = vmatpush1.msra.mxu0 %v1538
    %2451 = vmatprep.subr.mxu0 %v1541
    %2452 = vmatpush1.msra.mxu0 %v1540
    %2453 = vmatprep.subr.mxu0 %v1543
    %2454 = vmatpush1.msra.mxu0 %v1542
    %2455 = vmatprep.subr.mxu0 %v1545
    %2456 = vmatpush1.msra.mxu0 %v1544
    %2457 = vmatprep.subr.mxu0 %v1547
    %2458 = vmatpush1.msra.mxu0 %v1546
    %2459 = vmatprep.subr.mxu0 %v1549
    %2460 = vmatpush1.msra.mxu0 %v1548
    %2461 = vmatprep.subr.mxu0 0.0
    %2462 = vmatpush1.msra.mxu0 0.0
    %2463 = vmatprep.subr.mxu0 0.0
    %2464 = vmatpush1.msra.mxu0 0.0
    %2465 = vmatprep.subr.mxu0 0.0
    %2466 = vmatpush1.msra.mxu0 0.0
    %2467 = vmatprep.subr.mxu0 0.0
    %2468 = vmatpush1.msra.mxu0 0.0
    %2469 = vmatprep.subr.mxu0 0.0
    %2470 = vmatpush1.msra.mxu0 0.0
    %2471 = vmatprep.subr.mxu0 0.0
    %2472 = vmatpush1.msra.mxu0 0.0
    %2473 = vmatprep.subr.mxu0 0.0
    %2474 = vmatpush1.msra.mxu0 0.0
    %2475 = vmatprep.subr.mxu0 0.0
    %2476 = vmatpush1.msra.mxu0 0.0
    %2477 = vmatprep.subr.mxu0 0.0
    %2478 = vmatpush1.msra.mxu0 0.0
    %2479 = vmatprep.subr.mxu0 0.0
    %2480 = vmatpush1.msra.mxu0 0.0
    %2481 = vmatprep.subr.mxu0 0.0
    %2482 = vmatpush1.msra.mxu0 0.0
    %2483 = vmatprep.subr.mxu0 0.0
    %2484 = vmatpush1.msra.mxu0 0.0
    %2485 = vmatprep.subr.mxu0 0.0
    %2486 = vmatpush1.msra.mxu0 0.0
    %2487 = vmatprep.subr.mxu0 0.0
    %2488 = vmatpush1.msra.mxu0 0.0
    %2489 = vmatprep.subr.mxu0 0.0
    %2490 = vmatpush1.msra.mxu0 0.0
    %2491 = vmatprep.subr.mxu0 0.0
    %2492 = vmatpush1.msra.mxu0 0.0
    %2493 = vmatprep.subr.mxu0 0.0
    %2494 = vmatpush1.msra.mxu0 0.0
    %2495 = vmatprep.subr.mxu0 0.0
    %2496 = vmatpush1.msra.mxu0 0.0
    %2497 = vmatprep.subr.mxu0 0.0
    %2498 = vmatpush1.msra.mxu0 0.0
    %2499 = vmatprep.subr.mxu0 0.0
    %2500 = vmatpush1.msra.mxu0 0.0
    %2501 = vmatprep.subr.mxu0 0.0
    %2502 = vmatpush1.msra.mxu0 0.0
    %2503 = vmatprep.subr.mxu0 0.0
    %2504 = vmatpush1.msra.mxu0 0.0
    %2505 = vmatprep.subr.mxu0 0.0
    %2506 = vmatpush1.msra.mxu0 0.0
    %2507 = vmatprep.subr.mxu0 0.0
    %2508 = vmatpush1.msra.mxu0 0.0
    %2509 = vmatprep.mubr.f32.mxu0 0.0
    %2510 = vmatmul.mubr.f32.gmra.mrb[0].mxu0 %v2443
    %v2511 = vpop.f32.mrb[0].mxu0
    %v2512 = vadd.f32 0.0, %v2511
    %v2513 = vpop.f32.mrb[0].mxu0
    %v2514 = vadd.f32 0.0, %v2513
    %2515 = vdwg.mxu0
    %v2517 = vrot.slane %v2512, 4
    %v2519 = vadd.f32 %v1530, %v2517
    %v2520 = vxor.u32 %v2519, 2147483648
    %v2521 = vmul.f32 %v2520, 1.442695
    %v2522 = vpow.pop %v2521
    %v2523 = vadd.f32 %v2522, 1.0
    %v2524 = vrcp.pop %v2523
    %v2525 = vmul.f32 1.0, %v2524
    %v2526 = vtanh.pop %v2519
    %v2528 = vrot.slane %v2388, 6
    %v2530 = vmul.f32 %v2525, %v2528
    %2532 = vrot.lane.b32.xlu0 %v2526, 64
    %v2533 = vpop.permute.xlu0 %2532
    %v2535 = vmul.f32 %v2525, %v2533
    %2537 = vrot.lane.b32.xlu0 %v2535, 32
    %v2538 = vpop.permute.xlu0 %2537
    %v2540 = vadd.f32 %v2530, %v2538
    %v2541 = vtanh.pop %v2540
    %2543 = vrot.lane.b32.xlu0 %v2541, 64
    %v2544 = vpop.permute.xlu0 %2543
    %v2546 = vmul.f32 %v2525, %v2544
    %v2548 = vrot.slane %v2514, 6
    %v2550 = vadd.f32 %v1526, %v2548
    %v2551 = vxor.u32 %v2550, 2147483648
    %v2552 = vmul.f32 %v2551, 1.442695
    %v2553 = vpow.pop %v2552
    %v2554 = vadd.f32 %v2553, 1.0
    %v2555 = vrcp.pop %v2554
    %v2556 = vmul.f32 1.0, %v2555
    %v2557 = vtanh.pop %v2550
    %v2559 = vrot.slane %v2419, 2
    %v2561 = vmul.f32 %v2556, %v2559
    %2563 = vrot.lane.b32.xlu0 %v2557, 64
    %v2564 = vpop.permute.xlu0 %2563
    %v2566 = vmul.f32 %v2556, %v2564
    %2568 = vrot.lane.b32.xlu0 %v2566, 32
    %v2569 = vpop.permute.xlu0 %2568
    %v2571 = vadd.f32 %v2561, %v2569
    %v2572 = vtanh.pop %v2571
    %2574 = vrot.lane.b32.xlu0 %v2572, 64
    %v2575 = vpop.permute.xlu0 %2574
    %v2577 = vmul.f32 %v2556, %v2575
    %2579 = vrot.lane.b32.xlu0 %v2546, 32
    %v2580 = vpop.permute.xlu0 %2579
    %2582 = vst.msk [vmem:[#allocation3 + $0x8] sm:$0x30] %vm661, %v2580
    %2584 = vrot.lane.b32.xlu0 %v2577, 64
    %v2585 = vpop.permute.xlu0 %2584
    %2587 = vst.msk [vmem:[#allocation3] sm:$0xc] %vm667, %v2585
    %v2588 = vrot.slane %v2577, 6
    %2589 = vrot.lane.b32.xlu0 %v2588, 64
    %v2590 = vpop.permute.xlu0 %2589
    %v2592 = vsel %vm365, %v2580, %v2590
    %v2594 = vrot.slane %v2592, 4
    %v2595 = vsel %vm221, %v2594, 0
    %2597 = vmatprep.subr.mxu0 %v1535
    %2598 = vmatpush1.msra.mxu0 %v1534
    %2599 = vmatprep.subr.mxu0 %v1537
    %2600 = vmatpush1.msra.mxu0 %v1536
    %2601 = vmatprep.subr.mxu0 %v1539
    %2602 = vmatpush1.msra.mxu0 %v1538
    %2603 = vmatprep.subr.mxu0 %v1541
    %2604 = vmatpush1.msra.mxu0 %v1540
    %2605 = vmatprep.subr.mxu0 %v1543
    %2606 = vmatpush1.msra.mxu0 %v1542
    %2607 = vmatprep.subr.mxu0 %v1545
    %2608 = vmatpush1.msra.mxu0 %v1544
    %2609 = vmatprep.subr.mxu0 %v1547
    %2610 = vmatpush1.msra.mxu0 %v1546
    %2611 = vmatprep.subr.mxu0 %v1549
    %2612 = vmatpush1.msra.mxu0 %v1548
    %2613 = vmatprep.subr.mxu0 0.0
    %2614 = vmatpush1.msra.mxu0 0.0
    %2615 = vmatprep.subr.mxu0 0.0
    %2616 = vmatpush1.msra.mxu0 0.0
    %2617 = vmatprep.subr.mxu0 0.0
    %2618 = vmatpush1.msra.mxu0 0.0
    %2619 = vmatprep.subr.mxu0 0.0
    %2620 = vmatpush1.msra.mxu0 0.0
    %2621 = vmatprep.subr.mxu0 0.0
    %2622 = vmatpush1.msra.mxu0 0.0
    %2623 = vmatprep.subr.mxu0 0.0
    %2624 = vmatpush1.msra.mxu0 0.0
    %2625 = vmatprep.subr.mxu0 0.0
    %2626 = vmatpush1.msra.mxu0 0.0
    %2627 = vmatprep.subr.mxu0 0.0
    %2628 = vmatpush1.msra.mxu0 0.0
    %2629 = vmatprep.subr.mxu0 0.0
    %2630 = vmatpush1.msra.mxu0 0.0
    %2631 = vmatprep.subr.mxu0 0.0
    %2632 = vmatpush1.msra.mxu0 0.0
    %2633 = vmatprep.subr.mxu0 0.0
    %2634 = vmatpush1.msra.mxu0 0.0
    %2635 = vmatprep.subr.mxu0 0.0
    %2636 = vmatpush1.msra.mxu0 0.0
    %2637 = vmatprep.subr.mxu0 0.0
    %2638 = vmatpush1.msra.mxu0 0.0
    %2639 = vmatprep.subr.mxu0 0.0
    %2640 = vmatpush1.msra.mxu0 0.0
    %2641 = vmatprep.subr.mxu0 0.0
    %2642 = vmatpush1.msra.mxu0 0.0
    %2643 = vmatprep.subr.mxu0 0.0
    %2644 = vmatpush1.msra.mxu0 0.0
    %2645 = vmatprep.subr.mxu0 0.0
    %2646 = vmatpush1.msra.mxu0 0.0
    %2647 = vmatprep.subr.mxu0 0.0
    %2648 = vmatpush1.msra.mxu0 0.0
    %2649 = vmatprep.subr.mxu0 0.0
    %2650 = vmatpush1.msra.mxu0 0.0
    %2651 = vmatprep.subr.mxu0 0.0
    %2652 = vmatpush1.msra.mxu0 0.0
    %2653 = vmatprep.subr.mxu0 0.0
    %2654 = vmatpush1.msra.mxu0 0.0
    %2655 = vmatprep.subr.mxu0 0.0
    %2656 = vmatpush1.msra.mxu0 0.0
    %2657 = vmatprep.subr.mxu0 0.0
    %2658 = vmatpush1.msra.mxu0 0.0
    %2659 = vmatprep.subr.mxu0 0.0
    %2660 = vmatpush1.msra.mxu0 0.0
    %2661 = vmatprep.mubr.f32.mxu0 0.0
    %2662 = vmatmul.mubr.f32.gmra.mrb[0].mxu0 %v2595
    %v2663 = vpop.f32.mrb[0].mxu0
    %v2664 = vadd.f32 0.0, %v2663
    %v2665 = vpop.f32.mrb[0].mxu0
    %v2666 = vadd.f32 0.0, %v2665
    %2667 = vdwg.mxu0
    %v2669 = vrot.slane %v2664, 2
    %v2671 = vadd.f32 %v1530, %v2669
    %v2672 = vxor.u32 %v2671, 2147483648
    %v2673 = vmul.f32 %v2672, 1.442695
    %v2674 = vpow.pop %v2673
    %v2675 = vadd.f32 %v2674, 1.0
    %v2676 = vrcp.pop %v2675
    %v2677 = vmul.f32 1.0, %v2676
    %v2678 = vtanh.pop %v2671
    %v2680 = vrot.slane %v2540, 6
    %v2682 = vmul.f32 %v2677, %v2680
    %2684 = vrot.lane.b32.xlu0 %v2678, 64
    %v2685 = vpop.permute.xlu0 %2684
    %v2687 = vmul.f32 %v2677, %v2685
    %2689 = vrot.lane.b32.xlu0 %v2687, 32
    %v2690 = vpop.permute.xlu0 %2689
    %v2692 = vadd.f32 %v2682, %v2690
    %v2693 = vtanh.pop %v2692
    %2695 = vrot.lane.b32.xlu0 %v2693, 64
    %v2696 = vpop.permute.xlu0 %2695
    %v2698 = vmul.f32 %v2677, %v2696
    %v2699 = vadd.f32 %v1526, %v2666
    %v2700 = vxor.u32 %v2699, 2147483648
    %v2701 = vmul.f32 %v2700, 1.442695
    %v2702 = vpow.pop %v2701
    %v2703 = vadd.f32 %v2702, 1.0
    %v2704 = vrcp.pop %v2703
    %v2705 = vmul.f32 1.0, %v2704
    %v2706 = vtanh.pop %v2699
    %v2708 = vrot.slane %v2571, 2
    %v2710 = vmul.f32 %v2705, %v2708
    %2712 = vrot.lane.b32.xlu0 %v2706, 64
    %v2713 = vpop.permute.xlu0 %2712
    %v2715 = vmul.f32 %v2705, %v2713
    %2717 = vrot.lane.b32.xlu0 %v2715, 32
    %v2718 = vpop.permute.xlu0 %2717
    %v2720 = vadd.f32 %v2710, %v2718
    %v2721 = vtanh.pop %v2720
    %2723 = vrot.lane.b32.xlu0 %v2721, 64
    %v2724 = vpop.permute.xlu0 %2723
    %v2726 = vmul.f32 %v2705, %v2724
    %2728 = vrot.lane.b32.xlu0 %v2698, 32
    %v2729 = vpop.permute.xlu0 %2728
    %2731 = vst.msk [vmem:[#allocation3 + $0x8] sm:$0xc0] %vm812, %v2729
    %2733 = vrot.lane.b32.xlu0 %v2726, 64
    %v2734 = vpop.permute.xlu0 %2733
    %2736 = vst.msk [vmem:[#allocation3] sm:$0x3] %vm818, %v2734
    %v2737 = vld [vmem:[#allocation3 + $0xe] sm:$0x3]
    %v2738 = vld [vmem:[%s7] sm:$0xff]
    %v2739 = vld [vmem:[%s7 + $0x8] sm:$0xff]
    %v2740 = vld [vmem:[%s7 + $0x10] sm:$0xff]
    %v2741 = vld [vmem:[%s7 + $0x18] sm:$0xff]
    %v2742 = vld [vmem:[%s7 + $0x20] sm:$0xff]
    %v2743 = vld [vmem:[%s7 + $0x28] sm:$0xff]
    %v2744 = vld [vmem:[%s7 + $0x30] sm:$0xff]
    %v2745 = vld [vmem:[%s7 + $0x38] sm:$0xff]
    %v2746 = vld [vmem:[#allocation9] sm:$0x1]
    %v2748 = vlaneseq
    %v2749 = vshrl.u32 %v2748, 7
    %v2750 = vsub.s32 0, %v2749
    %v2751 = vrot.slane %v2746, %v2750
    %v2754 = vsel %vm221, %v2737, 0
    %2756 = vmatprep.subr.mxu0 0.0
    %2757 = vmatpush1.msra.mxu0 %v2738
    %2758 = vmatprep.subr.mxu0 0.0
    %2759 = vmatpush1.msra.mxu0 %v2739
    %2760 = vmatprep.subr.mxu0 0.0
    %2761 = vmatpush1.msra.mxu0 %v2740
    %2762 = vmatprep.subr.mxu0 0.0
    %2763 = vmatpush1.msra.mxu0 %v2741
    %2764 = vmatprep.subr.mxu0 0.0
    %2765 = vmatpush1.msra.mxu0 %v2742
    %2766 = vmatprep.subr.mxu0 0.0
    %2767 = vmatpush1.msra.mxu0 %v2743
    %2768 = vmatprep.subr.mxu0 0.0
    %2769 = vmatpush1.msra.mxu0 %v2744
    %2770 = vmatprep.subr.mxu0 0.0
    %2771 = vmatpush1.msra.mxu0 %v2745
    %2772 = vmatprep.subr.mxu0 0.0
    %2773 = vmatpush1.msra.mxu0 0.0
    %2774 = vmatprep.subr.mxu0 0.0
    %2775 = vmatpush1.msra.mxu0 0.0
    %2776 = vmatprep.subr.mxu0 0.0
    %2777 = vmatpush1.msra.mxu0 0.0
    %2778 = vmatprep.subr.mxu0 0.0
    %2779 = vmatpush1.msra.mxu0 0.0
    %2780 = vmatprep.subr.mxu0 0.0
    %2781 = vmatpush1.msra.mxu0 0.0
    %2782 = vmatprep.subr.mxu0 0.0
    %2783 = vmatpush1.msra.mxu0 0.0
    %2784 = vmatprep.subr.mxu0 0.0
    %2785 = vmatpush1.msra.mxu0 0.0
    %2786 = vmatprep.subr.mxu0 0.0
    %2787 = vmatpush1.msra.mxu0 0.0
    %2788 = vmatprep.subr.mxu0 0.0
    %2789 = vmatpush1.msra.mxu0 0.0
    %2790 = vmatprep.subr.mxu0 0.0
    %2791 = vmatpush1.msra.mxu0 0.0
    %2792 = vmatprep.subr.mxu0 0.0
    %2793 = vmatpush1.msra.mxu0 0.0
    %2794 = vmatprep.subr.mxu0 0.0
    %2795 = vmatpush1.msra.mxu0 0.0
    %2796 = vmatprep.subr.mxu0 0.0
    %2797 = vmatpush1.msra.mxu0 0.0
    %2798 = vmatprep.subr.mxu0 0.0
    %2799 = vmatpush1.msra.mxu0 0.0
    %2800 = vmatprep.subr.mxu0 0.0
    %2801 = vmatpush1.msra.mxu0 0.0
    %2802 = vmatprep.subr.mxu0 0.0
    %2803 = vmatpush1.msra.mxu0 0.0
    %2804 = vmatprep.subr.mxu0 0.0
    %2805 = vmatpush1.msra.mxu0 0.0
    %2806 = vmatprep.subr.mxu0 0.0
    %2807 = vmatpush1.msra.mxu0 0.0
    %2808 = vmatprep.subr.mxu0 0.0
    %2809 = vmatpush1.msra.mxu0 0.0
    %2810 = vmatprep.subr.mxu0 0.0
    %2811 = vmatpush1.msra.mxu0 0.0
    %2812 = vmatprep.subr.mxu0 0.0
    %2813 = vmatpush1.msra.mxu0 0.0
    %2814 = vmatprep.subr.mxu0 0.0
    %2815 = vmatpush1.msra.mxu0 0.0
    %2816 = vmatprep.subr.mxu0 0.0
    %2817 = vmatpush1.msra.mxu0 0.0
    %2818 = vmatprep.subr.mxu0 0.0
    %2819 = vmatpush1.msra.mxu0 0.0
    %2820 = vmatprep.mubr.f32.mxu0 0.0
    %2821 = vmatmul.mubr.f32.gmra.mrb[0].mxu0 %v2754
    %v2822 = vpop.f32.mrb[0].mxu0
    %v2823 = vadd.f32 %v2751, %v2822
    %v2824 = vpop.f32.mrb[0].mxu0
    %2825 = vdwg.mxu0
    %v2826 = vmax.f32 %v2823, 0.0
    %v2827 = vld [vmem:[#allocation10] sm:$0xff]
    %v2828 = vld [vmem:[#allocation10 + $0x8] sm:$0xff]
    %v2829 = vld [vmem:[#allocation10 + $0x10] sm:$0xff]
    %v2830 = vld [vmem:[#allocation10 + $0x18] sm:$0xff]
    %v2831 = vld [vmem:[#allocation12] sm:$0x1]
    %v2833 = vlaneseq
    %v2834 = vshrl.u32 %v2833, 7
    %v2835 = vsub.s32 0, %v2834
    %v2836 = vrot.slane %v2831, %v2835
    %v2839 = vsel %vm365, %v2826, 0
    %2841 = vmatprep.subr.mxu0 0.0
    %2842 = vmatpush1.msra.mxu0 %v2827
    %2843 = vmatprep.subr.mxu0 0.0
    %2844 = vmatpush1.msra.mxu0 %v2828
    %2845 = vmatprep.subr.mxu0 0.0
    %2846 = vmatpush1.msra.mxu0 %v2829
    %2847 = vmatprep.subr.mxu0 0.0
    %2848 = vmatpush1.msra.mxu0 %v2830
    %2849 = vmatprep.subr.mxu0 0.0
    %2850 = vmatpush1.msra.mxu0 0.0
    %2851 = vmatprep.subr.mxu0 0.0
    %2852 = vmatpush1.msra.mxu0 0.0
    %2853 = vmatprep.subr.mxu0 0.0
    %2854 = vmatpush1.msra.mxu0 0.0
    %2855 = vmatprep.subr.mxu0 0.0
    %2856 = vmatpush1.msra.mxu0 0.0
    %2857 = vmatprep.subr.mxu0 0.0
    %2858 = vmatpush1.msra.mxu0 0.0
    %2859 = vmatprep.subr.mxu0 0.0
    %2860 = vmatpush1.msra.mxu0 0.0
    %2861 = vmatprep.subr.mxu0 0.0
    %2862 = vmatpush1.msra.mxu0 0.0
    %2863 = vmatprep.subr.mxu0 0.0
    %2864 = vmatpush1.msra.mxu0 0.0
    %2865 = vmatprep.subr.mxu0 0.0
    %2866 = vmatpush1.msra.mxu0 0.0
    %2867 = vmatprep.subr.mxu0 0.0
    %2868 = vmatpush1.msra.mxu0 0.0
    %2869 = vmatprep.subr.mxu0 0.0
    %2870 = vmatpush1.msra.mxu0 0.0
    %2871 = vmatprep.subr.mxu0 0.0
    %2872 = vmatpush1.msra.mxu0 0.0
    %2873 = vmatprep.subr.mxu0 0.0
    %2874 = vmatpush1.msra.mxu0 0.0
    %2875 = vmatprep.subr.mxu0 0.0
    %2876 = vmatpush1.msra.mxu0 0.0
    %2877 = vmatprep.subr.mxu0 0.0
    %2878 = vmatpush1.msra.mxu0 0.0
    %2879 = vmatprep.subr.mxu0 0.0
    %2880 = vmatpush1.msra.mxu0 0.0
    %2881 = vmatprep.subr.mxu0 0.0
    %2882 = vmatpush1.msra.mxu0 0.0
    %2883 = vmatprep.subr.mxu0 0.0
    %2884 = vmatpush1.msra.mxu0 0.0
    %2885 = vmatprep.subr.mxu0 0.0
    %2886 = vmatpush1.msra.mxu0 0.0
    %2887 = vmatprep.subr.mxu0 0.0
    %2888 = vmatpush1.msra.mxu0 0.0
    %2889 = vmatprep.subr.mxu0 0.0
    %2890 = vmatpush1.msra.mxu0 0.0
    %2891 = vmatprep.subr.mxu0 0.0
    %2892 = vmatpush1.msra.mxu0 0.0
    %2893 = vmatprep.subr.mxu0 0.0
    %2894 = vmatpush1.msra.mxu0 0.0
    %2895 = vmatprep.subr.mxu0 0.0
    %2896 = vmatpush1.msra.mxu0 0.0
    %2897 = vmatprep.subr.mxu0 0.0
    %2898 = vmatpush1.msra.mxu0 0.0
    %2899 = vmatprep.subr.mxu0 0.0
    %2900 = vmatpush1.msra.mxu0 0.0
    %2901 = vmatprep.subr.mxu0 0.0
    %2902 = vmatpush1.msra.mxu0 0.0
    %2903 = vmatprep.subr.mxu0 0.0
    %2904 = vmatpush1.msra.mxu0 0.0
    %2905 = vmatprep.mubr.f32.mxu0 0.0
    %2906 = vmatmul.mubr.f32.gmra.mrb[0].mxu0 %v2839
    %v2907 = vpop.f32.mrb[0].mxu0
    %v2908 = vadd.f32 %v2836, %v2907
    %v2909 = vpop.f32.mrb[0].mxu0
    %2910 = vdwg.mxu0
    %vm2911 = vcmask 402432
    %2912 = vst.msk [vmem:[#allocation13] sm:$0x3] %vm2911, %v2908
    // Predicated region
    $region66: #{lstm_predictor_forward.1} parent=1 // pred_check
      _
    $region67: #{lstm_predictor_forward.1} parent=1 // pred_check_branch
      %2914 = sbr.rel (0) target = $region69
    $region68: #{lstm_predictor_forward.1} parent=1 // pred_region
      %s2916 = ssub.s32 32, 32
      %2917 = vsyncadd [#allocation6], %s2916
      %s2919 = sshll.u32 [#allocation13], 4
      %s2920 = int_to_ptr.vmem [resolvable:$true] %s2919
      %2922 = dma.vmem_to_hbm [thread:$0]  %s2920, 32, %s11, [#allocation6]
    $region69: #{lstm_predictor_forward.1} parent=1 // pred_fallthru
      _
    // Predicated region
    $region70: #{lstm_predictor_forward.1} parent=1 // pred_check
      _
    $region71: #{lstm_predictor_forward.1} parent=1 // pred_check_branch
      %2924 = sbr.rel (0) target = $region73
    $region72: #{lstm_predictor_forward.1} parent=1 // pred_region
      %2925 = dma.done [#allocation6], 32
    $region73: #{lstm_predictor_forward.1} parent=1 // pred_fallthru
      _
    %2926 = vsyncpa [#allocation5], 1
    %2927 = vsyncpa [#allocation8], 1
    %2928 = vsyncpa [#allocation11], 1
    %2929 = vsyncpa [#allocation6], 1

</llo_original>
